<compile_context>
chip_gen: v7x
topology: tpu7x:2x2x1
jax: 0.10.0
libtpu: 0.0.40
codegen_flags: <defaults>
</compile_context>

<pallas_src>
import math

import jax
import jax.numpy as jnp
from jax import lax
from jax.experimental import pallas as pl
from jax.experimental.pallas import tpu as pltpu


def _round_up(x, m):
    return ((x + m - 1) // m) * m


# ----------------------------------------------------------------------------
# Fused multi-layer LSTM (+ FC epilogue) kernel
# ----------------------------------------------------------------------------
def fused_lstm_fc_kernel(x_ref, w_ih_ref, w_hh_ref, b_ref,
                         fc_w_ref, fc_b_ref,
                         out_ref,
                         act_scr, gates_scr, h_scr, c_scr):
    """Grid axis 0 = LSTM layer (sequential; state lives in VMEM scratch).

    x_ref     : (seq, Bp, Dp)   padded time-major input (consumed at layer 0)
    w_ih_ref  : (1, Dp, 4Hp)    this layer's input->gate weights (pre-transposed)
    w_hh_ref  : (1, Hp, 4Hp)    this layer's hidden->gate weights
    b_ref     : (1, 1, 4Hp)     b_ih + b_hh (per-gate padded)
    fc_w_ref  : (Hp, Op)        final Linear weight (padded, pre-transposed)
    fc_b_ref  : (1, Op)         final Linear bias (padded)
    out_ref   : (1, Bp, Op)     fc(h_n) for this layer
    act_scr   : (seq, Bp, Dp)   persistent inter-layer activations
    gates_scr : (seq, Bp, 4Hp)  hoisted input-projection gates
    h_scr/c_scr: (Bp, Hp)       recurrent state
    """
    layer = pl.program_id(0)
    seq, batch_p, d_p = act_scr.shape
    h_p = h_scr.shape[1]
    g_p = gates_scr.shape[2]

    # Layer 0: seed the activation scratch with the (padded) model input.
    @pl.when(layer == 0)
    def _():
        act_scr[...] = x_ref[...]

    # ---- hoisted input projection + bias: one big MXU matmul per layer ----
    a_flat = act_scr[...].reshape(seq * batch_p, d_p)          # (S*Bp, Dp)
    gates_x = jnp.dot(a_flat, w_ih_ref[0],
                      preferred_element_type=jnp.float32) + b_ref[0]
    gates_scr[...] = gates_x.reshape(seq, batch_p, g_p)

    # Reset recurrent state for this layer.
    h_scr[...] = jnp.zeros_like(h_scr)
    c_scr[...] = jnp.zeros_like(c_scr)

    w_hh = w_hh_ref[0]                     # hoist weight load out of the loop

    def step(t, carry):
        # Only the hidden->gate matmul remains on the serial critical path.
        gates = gates_scr[t] + jnp.dot(h_scr[...], w_hh,
                                       preferred_element_type=jnp.float32)
        # PyTorch gate order: [i, f, g, o]; slices are lane-aligned (Hp%128==0).
        i_g = jax.nn.sigmoid(gates[:, 0 * h_p:1 * h_p])
        f_g = jax.nn.sigmoid(gates[:, 1 * h_p:2 * h_p])
        g_g = jnp.tanh(gates[:, 2 * h_p:3 * h_p])
        o_g = jax.nn.sigmoid(gates[:, 3 * h_p:4 * h_p])

        c_new = f_g * c_scr[...] + i_g * g_g
        h_new = o_g * jnp.tanh(c_new)

        c_scr[...] = c_new
        h_scr[...] = h_new
        # Write h_t back as next layer's input (whole-row, unmasked store).
        if h_p == d_p:
            act_scr[t] = h_new
        else:
            act_scr[t] = jnp.pad(h_new, ((0, 0), (0, d_p - h_p)))
        return carry

    lax.fori_loop(0, seq, step, 0, unroll=True)

    # ---- fused FC epilogue: out_l = fc(h_n of this layer) ----
    out_ref[0] = (jnp.dot(h_scr[...], fc_w_ref[...],
                          preferred_element_type=jnp.float32)
                  + fc_b_ref[...])


# ----------------------------------------------------------------------------
# Weight packing helpers (PyTorch layout -> padded, gate-blocked, transposed)
# ----------------------------------------------------------------------------
def _pad_gate_weight(w, h, h_p, in_p):
    """(4H, in_dim) -> (in_p, 4*h_p); each gate's columns padded to h_p."""
    in_dim = w.shape[1]
    w4 = w.reshape(4, h, in_dim)
    w4 = jnp.pad(w4, ((0, 0), (0, h_p - h), (0, in_p - in_dim)))
    return jnp.transpose(w4, (2, 0, 1)).reshape(in_p, 4 * h_p)


def _pad_gate_bias(b, h, h_p):
    b4 = b.reshape(4, h)
    b4 = jnp.pad(b4, ((0, 0), (0, h_p - h)))
    return b4.reshape(1, 4 * h_p)


# ----------------------------------------------------------------------------
# Forward wrapper
# ----------------------------------------------------------------------------
def lstm_model_forward(x, lstm_params, fc_w, fc_b):
    """x: (batch, seq, input_size) -> out: (num_layers, batch, output_size)."""
    batch, seq, input_size = x.shape
    num_layers = len(lstm_params)
    hidden = lstm_params[0][1].shape[1]            # W_hh: (4H, H)
    output = fc_w.shape[0]

    h_p = _round_up(hidden, 128)
    d_p = _round_up(max(input_size, hidden), 128)
    o_p = _round_up(output, 128)
    b_p = _round_up(batch, 8)
    g_p = 4 * h_p

    # Time-major, padded input.
    x_tm = jnp.transpose(x, (1, 0, 2)).astype(jnp.float32)
    x_pad = jnp.pad(x_tm, ((0, 0), (0, b_p - batch), (0, d_p - input_size)))

    w_ih_all = jnp.stack([
        _pad_gate_weight(w_ih.astype(jnp.float32), hidden, h_p, d_p)
        for (w_ih, _, _, _) in lstm_params])
    w_hh_all = jnp.stack([
        _pad_gate_weight(w_hh.astype(jnp.float32), hidden, h_p, h_p)
        for (_, w_hh, _, _) in lstm_params])
    b_all = jnp.stack([
        _pad_gate_bias((b_ih + b_hh).astype(jnp.float32), hidden, h_p)
        for (_, _, b_ih, b_hh) in lstm_params])

    fc_w_pad = jnp.pad(fc_w.T.astype(jnp.float32),
                       ((0, h_p - hidden), (0, o_p - output)))
    fc_b_pad = jnp.pad(fc_b.astype(jnp.float32), (0, o_p - output))[None, :]

    # Rough VMEM footprint (f32, double-buffered per-layer weights) + headroom;
    # kept well under v7x's 64 MiB physical and v5e's 16 MiB scoped default.
    vmem_bytes = 4 * (
        2 * seq * b_p * d_p                        # x block
        + 2 * (d_p * g_p + h_p * g_p + g_p)        # per-layer weights (x2 buf)
        + (h_p * o_p + o_p)                        # fc weights
        + 2 * b_p * o_p                            # out block (x2 buf)
        + seq * b_p * (d_p + g_p)                  # act + gates scratch
        + 2 * b_p * h_p)                           # h, c scratch
    vmem_limit = int(min(max(2 * vmem_bytes, 4 << 20), 48 << 20))

    out_pad = pl.pallas_call(
        fused_lstm_fc_kernel,
        out_shape=jax.ShapeDtypeStruct((num_layers, b_p, o_p), jnp.float32),
        grid_spec=pltpu.PrefetchScalarGridSpec(
            num_scalar_prefetch=0,
            grid=(num_layers,),
            in_specs=[
                pl.BlockSpec((seq, b_p, d_p), lambda l: (0, 0, 0)),   # x
                pl.BlockSpec((1, d_p, g_p), lambda l: (l, 0, 0)),     # W_ih[l]
                pl.BlockSpec((1, h_p, g_p), lambda l: (l, 0, 0)),     # W_hh[l]
                pl.BlockSpec((1, 1, g_p), lambda l: (l, 0, 0)),       # b[l]
                pl.BlockSpec((h_p, o_p), lambda l: (0, 0)),           # fc_w
                pl.BlockSpec((1, o_p), lambda l: (0, 0)),             # fc_b
            ],
            out_specs=pl.BlockSpec((1, b_p, o_p), lambda l: (l, 0, 0)),
            scratch_shapes=[
                pltpu.VMEM((seq, b_p, d_p), jnp.float32),   # activations
                pltpu.VMEM((seq, b_p, g_p), jnp.float32),   # hoisted gates_x
                pltpu.VMEM((b_p, h_p), jnp.float32),        # h
                pltpu.VMEM((b_p, h_p), jnp.float32),        # c
            ],
        ),
        compiler_params=pltpu.CompilerParams(
            dimension_semantics=("arbitrary",),
            vmem_limit_bytes=vmem_limit),
    )(x_pad, w_ih_all, w_hh_all, b_all, fc_w_pad, fc_b_pad)

    return out_pad[:, :batch, :output]


# ----------------------------------------------------------------------------
# Parameter init (matches nn.LSTM / nn.Linear shapes) + pure-JAX reference
# ----------------------------------------------------------------------------
def init_params(key, input_size, hidden_size, output_size, num_layers):
    k = 1.0 / math.sqrt(hidden_size)
    keys = jax.random.split(key, num_layers * 4 + 2)
    lstm_params = []
    for l in range(num_layers):
        in_dim = input_size if l == 0 else hidden_size
        w_ih = jax.random.uniform(keys[4 * l + 0], (4 * hidden_size, in_dim),
                                  jnp.float32, -k, k)
        w_hh = jax.random.uniform(keys[4 * l + 1],
                                  (4 * hidden_size, hidden_size),
                                  jnp.float32, -k, k)
        b_ih = jax.random.uniform(keys[4 * l + 2], (4 * hidden_size,),
                                  jnp.float32, -k, k)
        b_hh = jax.random.uniform(keys[4 * l + 3], (4 * hidden_size,),
                                  jnp.float32, -k, k)
        lstm_params.append((w_ih, w_hh, b_ih, b_hh))
    fc_w = jax.random.uniform(keys[-2], (output_size, hidden_size),
                              jnp.float32, -k, k)
    fc_b = jax.random.uniform(keys[-1], (output_size,), jnp.float32, -k, k)
    return lstm_params, fc_w, fc_b


def lstm_model_ref(x, lstm_params, fc_w, fc_b):
    """Pure-JAX reference mirroring PyTorch nn.LSTM semantics (no dropout)."""
    B, S, _ = x.shape
    inp = x.astype(jnp.float32)
    hs = []
    for (w_ih, w_hh, b_ih, b_hh) in lstm_params:
        H = w_hh.shape[1]
        h = jnp.zeros((B, H), jnp.float32)
        c = jnp.zeros((B, H), jnp.float32)
        outs = []
        for t in range(S):
            gates = inp[:, t, :] @ w_ih.T + h @ w_hh.T + b_ih + b_hh
            i = jax.nn.sigmoid(gates[:, 0 * H:1 * H])
            f = jax.nn.sigmoid(gates[:, 1 * H:2 * H])
            g = jnp.tanh(gates[:, 2 * H:3 * H])
            o = jax.nn.sigmoid(gates[:, 3 * H:4 * H])
            c = f * c + i * g
            h = o * jnp.tanh(c)
            outs.append(h)
        inp = jnp.stack(outs, axis=1)
        hs.append(h)
    hidden = jnp.stack(hs, axis=0)
    return hidden @ fc_w.T + fc_b


if __name__ == "__main__":
    input_size, hidden_size, output_size = 16, 32, 8
    num_layers, dropout = 2, 0.0
    batch, seq = 2, 8

    key = jax.random.PRNGKey(0)
    k_x, k_p = jax.random.split(key)
    x = jax.random.normal(k_x, (batch, seq, input_size), jnp.float32)
    lstm_params, fc_w, fc_b = init_params(
        k_p, input_size, hidden_size, output_size, num_layers)

    out = lstm_model_forward(x, lstm_params, fc_w, fc_b)
    out = jax.block_until_ready(out)

    ref = lstm_model_ref(x, lstm_params, fc_w, fc_b)
    assert out.shape == (num_layers, batch, output_size), out.shape
    err = float(jnp.max(jnp.abs(out - ref)))
    assert jnp.allclose(out, ref, rtol=1e-4, atol=1e-4), err

    print("KERNEL_OK")
</pallas_src>

<mosaic_0001>
module attributes {stable_mosaic.version = 11 : i64} {
  func.func @fused_lstm_fc_kernel(%arg0: i32, %arg1: memref<8x8x128xf32, #tpu.memory_space<vmem>>, %arg2: memref<1x128x512xf32, #tpu.memory_space<vmem>>, %arg3: memref<1x128x512xf32, #tpu.memory_space<vmem>>, %arg4: memref<1x1x512xf32, #tpu.memory_space<vmem>>, %arg5: memref<128x128xf32, #tpu.memory_space<vmem>>, %arg6: memref<1x128xf32, #tpu.memory_space<vmem>>, %arg7: memref<1x8x128xf32, #tpu.memory_space<vmem>>, %arg8: memref<8x8x128xf32, #tpu.memory_space<vmem>>, %arg9: memref<8x8x512xf32, #tpu.memory_space<vmem>>, %arg10: memref<8x128xf32, #tpu.memory_space<vmem>>, %arg11: memref<8x128xf32, #tpu.memory_space<vmem>>) attributes {dimension_semantics = [#tpu.dimension_semantics<arbitrary>], iteration_bounds = array<i64: 2>, scalar_prefetch = 0 : i64, scratch_operands = 4 : i64, tpu.core_type = #tpu.core_type<tc>, window_params = [{pipeline_mode = #tpu.pipeline_mode<synchronous>, transform_indices = @transform_0, window_bounds = array<i64: 8, 8, 128>}, {transform_indices = @transform_1, window_bounds = array<i64: 1, 128, 512>}, {transform_indices = @transform_2, window_bounds = array<i64: 1, 128, 512>}, {transform_indices = @transform_3, window_bounds = array<i64: 1, 1, 512>}, {pipeline_mode = #tpu.pipeline_mode<synchronous>, transform_indices = @transform_4, window_bounds = array<i64: 128, 128>}, {pipeline_mode = #tpu.pipeline_mode<synchronous>, transform_indices = @transform_5, window_bounds = array<i64: 1, 128>}, {transform_indices = @transform_6, window_bounds = array<i64: 1, 8, 128>}]} {
    %c0_i32 = arith.constant 0 : i32
    %0 = arith.cmpi eq, %arg0, %c0_i32 : i32
    %1 = arith.extui %0 : i1 to i32
    %c0_i32_0 = arith.constant 0 : i32
    %2 = arith.cmpi ne, %1, %c0_i32_0 : i32
    scf.if %2 {
      %c0_160 = arith.constant 0 : index
      %c0_161 = arith.constant 0 : index
      %c0_162 = arith.constant 0 : index
      %333 = vector.load %arg1[%c0_160, %c0_161, %c0_162] : memref<8x8x128xf32, #tpu.memory_space<vmem>>, vector<8x8x128xf32>
      %c0_163 = arith.constant 0 : index
      %c0_164 = arith.constant 0 : index
      %c0_165 = arith.constant 0 : index
      %334 = vector.load %arg8[%c0_163, %c0_164, %c0_165] : memref<8x8x128xf32, #tpu.memory_space<vmem>>, vector<8x8x128xf32>
      tpu.vector_store %arg8[%c0_163, %c0_164, %c0_165], %333 {strides = array<i32>} : memref<8x8x128xf32, #tpu.memory_space<vmem>>, vector<8x8x128xf32>,
    } else {
    }
    %c0 = arith.constant 0 : index
    %c0_1 = arith.constant 0 : index
    %c0_2 = arith.constant 0 : index
    %3 = vector.load %arg8[%c0, %c0_1, %c0_2] : memref<8x8x128xf32, #tpu.memory_space<vmem>>, vector<8x8x128xf32>
    %4 = vector.shape_cast %3 : vector<8x8x128xf32> to vector<64x128xf32>
    %c0_3 = arith.constant 0 : index
    %c0_4 = arith.constant 0 : index
    %c0_5 = arith.constant 0 : index
    %5 = vector.load %arg2[%c0_3, %c0_4, %c0_5] : memref<1x128x512xf32, #tpu.memory_space<vmem>>, vector<1x128x512xf32>
    %6 = vector.shape_cast %5 : vector<1x128x512xf32> to vector<128x512xf32>
    %cst = arith.constant dense<0.000000e+00> : vector<64x512xf32>
    %7 = tpu.matmul %4, %6, %cst {dimension_numbers = #tpu.dot_dimension_numbers<[1], [0], [0], [1], [0, 0, 1, 1], [], []>} : vector<64x128xf32>, vector<128x512xf32>, vector<64x512xf32> -> vector<64x512xf32>
    %c0_6 = arith.constant 0 : index
    %c0_7 = arith.constant 0 : index
    %c0_8 = arith.constant 0 : index
    %8 = vector.load %arg4[%c0_6, %c0_7, %c0_8] : memref<1x1x512xf32, #tpu.memory_space<vmem>>, vector<1x1x512xf32>
    %9 = vector.shape_cast %8 : vector<1x1x512xf32> to vector<1x512xf32>
    %10 = vector.broadcast %9 : vector<1x512xf32> to vector<64x512xf32>
    %11 = arith.addf %7, %10 : vector<64x512xf32>
    %12 = vector.shape_cast %11 : vector<64x512xf32> to vector<8x8x512xf32>
    %c0_9 = arith.constant 0 : index
    %c0_10 = arith.constant 0 : index
    %c0_11 = arith.constant 0 : index
    %13 = vector.load %arg9[%c0_9, %c0_10, %c0_11] : memref<8x8x512xf32, #tpu.memory_space<vmem>>, vector<8x8x512xf32>
    tpu.vector_store %arg9[%c0_9, %c0_10, %c0_11], %12 {strides = array<i32>} : memref<8x8x512xf32, #tpu.memory_space<vmem>>, vector<8x8x512xf32>,
    %cst_12 = arith.constant 0.000000e+00 : f32
    %14 = vector.broadcast %cst_12 : f32 to vector<8x128xf32>
    %c0_13 = arith.constant 0 : index
    %c0_14 = arith.constant 0 : index
    %15 = vector.load %arg10[%c0_13, %c0_14] : memref<8x128xf32, #tpu.memory_space<vmem>>, vector<8x128xf32>
    tpu.vector_store %arg10[%c0_13, %c0_14], %14 {strides = array<i32>} : memref<8x128xf32, #tpu.memory_space<vmem>>, vector<8x128xf32>,
    %cst_15 = arith.constant 0.000000e+00 : f32
    %16 = vector.broadcast %cst_15 : f32 to vector<8x128xf32>
    %c0_16 = arith.constant 0 : index
    %c0_17 = arith.constant 0 : index
    %17 = vector.load %arg11[%c0_16, %c0_17] : memref<8x128xf32, #tpu.memory_space<vmem>>, vector<8x128xf32>
    tpu.vector_store %arg11[%c0_16, %c0_17], %16 {strides = array<i32>} : memref<8x128xf32, #tpu.memory_space<vmem>>, vector<8x128xf32>,
    %c0_18 = arith.constant 0 : index
    %c0_19 = arith.constant 0 : index
    %c0_20 = arith.constant 0 : index
    %18 = vector.load %arg3[%c0_18, %c0_19, %c0_20] : memref<1x128x512xf32, #tpu.memory_space<vmem>>, vector<1x128x512xf32>
    %19 = vector.shape_cast %18 : vector<1x128x512xf32> to vector<128x512xf32>
    %c0_i32_21 = arith.constant 0 : i32
    %20 = arith.index_cast %c0_i32_21 : i32 to index
    %c0_22 = arith.constant 0 : index
    %c0_23 = arith.constant 0 : index
    %21 = vector.load %arg9[%20, %c0_22, %c0_23] : memref<8x8x512xf32, #tpu.memory_space<vmem>>, vector<1x8x512xf32>
    %22 = vector.shape_cast %21 : vector<1x8x512xf32> to vector<8x512xf32>
    %c0_24 = arith.constant 0 : index
    %c0_25 = arith.constant 0 : index
    %23 = vector.load %arg10[%c0_24, %c0_25] : memref<8x128xf32, #tpu.memory_space<vmem>>, vector<8x128xf32>
    %cst_26 = arith.constant dense<0.000000e+00> : vector<8x512xf32>
    %24 = tpu.matmul %23, %19, %cst_26 {dimension_numbers = #tpu.dot_dimension_numbers<[1], [0], [0], [1], [0, 0, 1, 1], [], []>} : vector<8x128xf32>, vector<128x512xf32>, vector<8x512xf32> -> vector<8x512xf32>
    %25 = arith.addf %22, %24 : vector<8x512xf32>
    %26 = vector.extract_strided_slice %25 {offsets = [0, 0], sizes = [8, 128], strides = [1, 1]} : vector<8x512xf32> to vector<8x128xf32>
    %27 = arith.negf %26 : vector<8x128xf32>
    %28 = math.exp %27 : vector<8x128xf32>
    %cst_27 = arith.constant 1.000000e+00 : f32
    %29 = vector.broadcast %cst_27 : f32 to vector<8x128xf32>
    %30 = arith.addf %29, %28 : vector<8x128xf32>
    %31 = arith.divf %29, %30 : vector<8x128xf32>
    %32 = vector.extract_strided_slice %25 {offsets = [0, 128], sizes = [8, 128], strides = [1, 1]} : vector<8x512xf32> to vector<8x128xf32>
    %33 = arith.negf %32 : vector<8x128xf32>
    %34 = math.exp %33 : vector<8x128xf32>
    %cst_28 = arith.constant 1.000000e+00 : f32
    %35 = vector.broadcast %cst_28 : f32 to vector<8x128xf32>
    %36 = arith.addf %35, %34 : vector<8x128xf32>
    %37 = arith.divf %35, %36 : vector<8x128xf32>
    %38 = vector.extract_strided_slice %25 {offsets = [0, 256], sizes = [8, 128], strides = [1, 1]} : vector<8x512xf32> to vector<8x128xf32>
    %39 = math.tanh %38 : vector<8x128xf32>
    %40 = vector.extract_strided_slice %25 {offsets = [0, 384], sizes = [8, 128], strides = [1, 1]} : vector<8x512xf32> to vector<8x128xf32>
    %41 = arith.negf %40 : vector<8x128xf32>
    %42 = math.exp %41 : vector<8x128xf32>
    %cst_29 = arith.constant 1.000000e+00 : f32
    %43 = vector.broadcast %cst_29 : f32 to vector<8x128xf32>
    %44 = arith.addf %43, %42 : vector<8x128xf32>
    %45 = arith.divf %43, %44 : vector<8x128xf32>
    %c0_30 = arith.constant 0 : index
    %c0_31 = arith.constant 0 : index
    %46 = vector.load %arg11[%c0_30, %c0_31] : memref<8x128xf32, #tpu.memory_space<vmem>>, vector<8x128xf32>
    %47 = arith.mulf %37, %46 : vector<8x128xf32>
    %48 = arith.mulf %31, %39 : vector<8x128xf32>
    %49 = arith.addf %47, %48 : vector<8x128xf32>
    %50 = math.tanh %49 : vector<8x128xf32>
    %51 = arith.mulf %45, %50 : vector<8x128xf32>
    %c0_32 = arith.constant 0 : index
    %c0_33 = arith.constant 0 : index
    %52 = vector.load %arg11[%c0_32, %c0_33] : memref<8x128xf32, #tpu.memory_space<vmem>>, vector<8x128xf32>
    tpu.vector_store %arg11[%c0_32, %c0_33], %49 {strides = array<i32>} : memref<8x128xf32, #tpu.memory_space<vmem>>, vector<8x128xf32>,
    %c0_34 = arith.constant 0 : index
    %c0_35 = arith.constant 0 : index
    %53 = vector.load %arg10[%c0_34, %c0_35] : memref<8x128xf32, #tpu.memory_space<vmem>>, vector<8x128xf32>
    tpu.vector_store %arg10[%c0_34, %c0_35], %51 {strides = array<i32>} : memref<8x128xf32, #tpu.memory_space<vmem>>, vector<8x128xf32>,
    %54 = arith.index_cast %c0_i32_21 : i32 to index
    %c0_36 = arith.constant 0 : index
    %c0_37 = arith.constant 0 : index
    %55 = vector.load %arg8[%54, %c0_36, %c0_37] : memref<8x8x128xf32, #tpu.memory_space<vmem>>, vector<1x8x128xf32>
    %56 = vector.shape_cast %55 : vector<1x8x128xf32> to vector<8x128xf32>
    %57 = vector.shape_cast %51 : vector<8x128xf32> to vector<1x8x128xf32>
    tpu.vector_store %arg8[%54, %c0_36, %c0_37], %57 {strides = array<i32>} : memref<8x8x128xf32, #tpu.memory_space<vmem>>, vector<1x8x128xf32>,
    %c1_i32 = arith.constant 1 : i32
    %58 = arith.index_cast %c1_i32 : i32 to index
    %c0_38 = arith.constant 0 : index
    %c0_39 = arith.constant 0 : index
    %59 = vector.load %arg9[%58, %c0_38, %c0_39] : memref<8x8x512xf32, #tpu.memory_space<vmem>>, vector<1x8x512xf32>
    %60 = vector.shape_cast %59 : vector<1x8x512xf32> to vector<8x512xf32>
    %c0_40 = arith.constant 0 : index
    %c0_41 = arith.constant 0 : index
    %61 = vector.load %arg10[%c0_40, %c0_41] : memref<8x128xf32, #tpu.memory_space<vmem>>, vector<8x128xf32>
    %cst_42 = arith.constant dense<0.000000e+00> : vector<8x512xf32>
    %62 = tpu.matmul %61, %19, %cst_42 {dimension_numbers = #tpu.dot_dimension_numbers<[1], [0], [0], [1], [0, 0, 1, 1], [], []>} : vector<8x128xf32>, vector<128x512xf32>, vector<8x512xf32> -> vector<8x512xf32>
    %63 = arith.addf %60, %62 : vector<8x512xf32>
    %64 = vector.extract_strided_slice %63 {offsets = [0, 0], sizes = [8, 128], strides = [1, 1]} : vector<8x512xf32> to vector<8x128xf32>
    %65 = arith.negf %64 : vector<8x128xf32>
    %66 = math.exp %65 : vector<8x128xf32>
    %cst_43 = arith.constant 1.000000e+00 : f32
    %67 = vector.broadcast %cst_43 : f32 to vector<8x128xf32>
    %68 = arith.addf %67, %66 : vector<8x128xf32>
    %69 = arith.divf %67, %68 : vector<8x128xf32>
    %70 = vector.extract_strided_slice %63 {offsets = [0, 128], sizes = [8, 128], strides = [1, 1]} : vector<8x512xf32> to vector<8x128xf32>
    %71 = arith.negf %70 : vector<8x128xf32>
    %72 = math.exp %71 : vector<8x128xf32>
    %cst_44 = arith.constant 1.000000e+00 : f32
    %73 = vector.broadcast %cst_44 : f32 to vector<8x128xf32>
    %74 = arith.addf %73, %72 : vector<8x128xf32>
    %75 = arith.divf %73, %74 : vector<8x128xf32>
    %76 = vector.extract_strided_slice %63 {offsets = [0, 256], sizes = [8, 128], strides = [1, 1]} : vector<8x512xf32> to vector<8x128xf32>
    %77 = math.tanh %76 : vector<8x128xf32>
    %78 = vector.extract_strided_slice %63 {offsets = [0, 384], sizes = [8, 128], strides = [1, 1]} : vector<8x512xf32> to vector<8x128xf32>
    %79 = arith.negf %78 : vector<8x128xf32>
    %80 = math.exp %79 : vector<8x128xf32>
    %cst_45 = arith.constant 1.000000e+00 : f32
    %81 = vector.broadcast %cst_45 : f32 to vector<8x128xf32>
    %82 = arith.addf %81, %80 : vector<8x128xf32>
    %83 = arith.divf %81, %82 : vector<8x128xf32>
    %c0_46 = arith.constant 0 : index
    %c0_47 = arith.constant 0 : index
    %84 = vector.load %arg11[%c0_46, %c0_47] : memref<8x128xf32, #tpu.memory_space<vmem>>, vector<8x128xf32>
    %85 = arith.mulf %75, %84 : vector<8x128xf32>
    %86 = arith.mulf %69, %77 : vector<8x128xf32>
    %87 = arith.addf %85, %86 : vector<8x128xf32>
    %88 = math.tanh %87 : vector<8x128xf32>
    %89 = arith.mulf %83, %88 : vector<8x128xf32>
    %c0_48 = arith.constant 0 : index
    %c0_49 = arith.constant 0 : index
    %90 = vector.load %arg11[%c0_48, %c0_49] : memref<8x128xf32, #tpu.memory_space<vmem>>, vector<8x128xf32>
    tpu.vector_store %arg11[%c0_48, %c0_49], %87 {strides = array<i32>} : memref<8x128xf32, #tpu.memory_space<vmem>>, vector<8x128xf32>,
    %c0_50 = arith.constant 0 : index
    %c0_51 = arith.constant 0 : index
    %91 = vector.load %arg10[%c0_50, %c0_51] : memref<8x128xf32, #tpu.memory_space<vmem>>, vector<8x128xf32>
    tpu.vector_store %arg10[%c0_50, %c0_51], %89 {strides = array<i32>} : memref<8x128xf32, #tpu.memory_space<vmem>>, vector<8x128xf32>,
    %92 = arith.index_cast %c1_i32 : i32 to index
    %c0_52 = arith.constant 0 : index
    %c0_53 = arith.constant 0 : index
    %93 = vector.load %arg8[%92, %c0_52, %c0_53] : memref<8x8x128xf32, #tpu.memory_space<vmem>>, vector<1x8x128xf32>
    %94 = vector.shape_cast %93 : vector<1x8x128xf32> to vector<8x128xf32>
    %95 = vector.shape_cast %89 : vector<8x128xf32> to vector<1x8x128xf32>
    tpu.vector_store %arg8[%92, %c0_52, %c0_53], %95 {strides = array<i32>} : memref<8x8x128xf32, #tpu.memory_space<vmem>>, vector<1x8x128xf32>,
    %c2_i32 = arith.constant 2 : i32
    %96 = arith.index_cast %c2_i32 : i32 to index
    %c0_54 = arith.constant 0 : index
    %c0_55 = arith.constant 0 : index
    %97 = vector.load %arg9[%96, %c0_54, %c0_55] : memref<8x8x512xf32, #tpu.memory_space<vmem>>, vector<1x8x512xf32>
    %98 = vector.shape_cast %97 : vector<1x8x512xf32> to vector<8x512xf32>
    %c0_56 = arith.constant 0 : index
    %c0_57 = arith.constant 0 : index
    %99 = vector.load %arg10[%c0_56, %c0_57] : memref<8x128xf32, #tpu.memory_space<vmem>>, vector<8x128xf32>
    %cst_58 = arith.constant dense<0.000000e+00> : vector<8x512xf32>
    %100 = tpu.matmul %99, %19, %cst_58 {dimension_numbers = #tpu.dot_dimension_numbers<[1], [0], [0], [1], [0, 0, 1, 1], [], []>} : vector<8x128xf32>, vector<128x512xf32>, vector<8x512xf32> -> vector<8x512xf32>
    %101 = arith.addf %98, %100 : vector<8x512xf32>
    %102 = vector.extract_strided_slice %101 {offsets = [0, 0], sizes = [8, 128], strides = [1, 1]} : vector<8x512xf32> to vector<8x128xf32>
    %103 = arith.negf %102 : vector<8x128xf32>
    %104 = math.exp %103 : vector<8x128xf32>
    %cst_59 = arith.constant 1.000000e+00 : f32
    %105 = vector.broadcast %cst_59 : f32 to vector<8x128xf32>
    %106 = arith.addf %105, %104 : vector<8x128xf32>
    %107 = arith.divf %105, %106 : vector<8x128xf32>
    %108 = vector.extract_strided_slice %101 {offsets = [0, 128], sizes = [8, 128], strides = [1, 1]} : vector<8x512xf32> to vector<8x128xf32>
    %109 = arith.negf %108 : vector<8x128xf32>
    %110 = math.exp %109 : vector<8x128xf32>
    %cst_60 = arith.constant 1.000000e+00 : f32
    %111 = vector.broadcast %cst_60 : f32 to vector<8x128xf32>
    %112 = arith.addf %111, %110 : vector<8x128xf32>
    %113 = arith.divf %111, %112 : vector<8x128xf32>
    %114 = vector.extract_strided_slice %101 {offsets = [0, 256], sizes = [8, 128], strides = [1, 1]} : vector<8x512xf32> to vector<8x128xf32>
    %115 = math.tanh %114 : vector<8x128xf32>
    %116 = vector.extract_strided_slice %101 {offsets = [0, 384], sizes = [8, 128], strides = [1, 1]} : vector<8x512xf32> to vector<8x128xf32>
    %117 = arith.negf %116 : vector<8x128xf32>
    %118 = math.exp %117 : vector<8x128xf32>
    %cst_61 = arith.constant 1.000000e+00 : f32
    %119 = vector.broadcast %cst_61 : f32 to vector<8x128xf32>
    %120 = arith.addf %119, %118 : vector<8x128xf32>
    %121 = arith.divf %119, %120 : vector<8x128xf32>
    %c0_62 = arith.constant 0 : index
    %c0_63 = arith.constant 0 : index
    %122 = vector.load %arg11[%c0_62, %c0_63] : memref<8x128xf32, #tpu.memory_space<vmem>>, vector<8x128xf32>
    %123 = arith.mulf %113, %122 : vector<8x128xf32>
    %124 = arith.mulf %107, %115 : vector<8x128xf32>
    %125 = arith.addf %123, %124 : vector<8x128xf32>
    %126 = math.tanh %125 : vector<8x128xf32>
    %127 = arith.mulf %121, %126 : vector<8x128xf32>
    %c0_64 = arith.constant 0 : index
    %c0_65 = arith.constant 0 : index
    %128 = vector.load %arg11[%c0_64, %c0_65] : memref<8x128xf32, #tpu.memory_space<vmem>>, vector<8x128xf32>
    tpu.vector_store %arg11[%c0_64, %c0_65], %125 {strides = array<i32>} : memref<8x128xf32, #tpu.memory_space<vmem>>, vector<8x128xf32>,
    %c0_66 = arith.constant 0 : index
    %c0_67 = arith.constant 0 : index
    %129 = vector.load %arg10[%c0_66, %c0_67] : memref<8x128xf32, #tpu.memory_space<vmem>>, vector<8x128xf32>
    tpu.vector_store %arg10[%c0_66, %c0_67], %127 {strides = array<i32>} : memref<8x128xf32, #tpu.memory_space<vmem>>, vector<8x128xf32>,
    %130 = arith.index_cast %c2_i32 : i32 to index
    %c0_68 = arith.constant 0 : index
    %c0_69 = arith.constant 0 : index
    %131 = vector.load %arg8[%130, %c0_68, %c0_69] : memref<8x8x128xf32, #tpu.memory_space<vmem>>, vector<1x8x128xf32>
    %132 = vector.shape_cast %131 : vector<1x8x128xf32> to vector<8x128xf32>
    %133 = vector.shape_cast %127 : vector<8x128xf32> to vector<1x8x128xf32>
    tpu.vector_store %arg8[%130, %c0_68, %c0_69], %133 {strides = array<i32>} : memref<8x8x128xf32, #tpu.memory_space<vmem>>, vector<1x8x128xf32>,
    %c3_i32 = arith.constant 3 : i32
    %134 = arith.index_cast %c3_i32 : i32 to index
    %c0_70 = arith.constant 0 : index
    %c0_71 = arith.constant 0 : index
    %135 = vector.load %arg9[%134, %c0_70, %c0_71] : memref<8x8x512xf32, #tpu.memory_space<vmem>>, vector<1x8x512xf32>
    %136 = vector.shape_cast %135 : vector<1x8x512xf32> to vector<8x512xf32>
    %c0_72 = arith.constant 0 : index
    %c0_73 = arith.constant 0 : index
    %137 = vector.load %arg10[%c0_72, %c0_73] : memref<8x128xf32, #tpu.memory_space<vmem>>, vector<8x128xf32>
    %cst_74 = arith.constant dense<0.000000e+00> : vector<8x512xf32>
    %138 = tpu.matmul %137, %19, %cst_74 {dimension_numbers = #tpu.dot_dimension_numbers<[1], [0], [0], [1], [0, 0, 1, 1], [], []>} : vector<8x128xf32>, vector<128x512xf32>, vector<8x512xf32> -> vector<8x512xf32>
    %139 = arith.addf %136, %138 : vector<8x512xf32>
    %140 = vector.extract_strided_slice %139 {offsets = [0, 0], sizes = [8, 128], strides = [1, 1]} : vector<8x512xf32> to vector<8x128xf32>
    %141 = arith.negf %140 : vector<8x128xf32>
    %142 = math.exp %141 : vector<8x128xf32>
    %cst_75 = arith.constant 1.000000e+00 : f32
    %143 = vector.broadcast %cst_75 : f32 to vector<8x128xf32>
    %144 = arith.addf %143, %142 : vector<8x128xf32>
    %145 = arith.divf %143, %144 : vector<8x128xf32>
    %146 = vector.extract_strided_slice %139 {offsets = [0, 128], sizes = [8, 128], strides = [1, 1]} : vector<8x512xf32> to vector<8x128xf32>
    %147 = arith.negf %146 : vector<8x128xf32>
    %148 = math.exp %147 : vector<8x128xf32>
    %cst_76 = arith.constant 1.000000e+00 : f32
    %149 = vector.broadcast %cst_76 : f32 to vector<8x128xf32>
    %150 = arith.addf %149, %148 : vector<8x128xf32>
    %151 = arith.divf %149, %150 : vector<8x128xf32>
    %152 = vector.extract_strided_slice %139 {offsets = [0, 256], sizes = [8, 128], strides = [1, 1]} : vector<8x512xf32> to vector<8x128xf32>
    %153 = math.tanh %152 : vector<8x128xf32>
    %154 = vector.extract_strided_slice %139 {offsets = [0, 384], sizes = [8, 128], strides = [1, 1]} : vector<8x512xf32> to vector<8x128xf32>
    %155 = arith.negf %154 : vector<8x128xf32>
    %156 = math.exp %155 : vector<8x128xf32>
    %cst_77 = arith.constant 1.000000e+00 : f32
    %157 = vector.broadcast %cst_77 : f32 to vector<8x128xf32>
    %158 = arith.addf %157, %156 : vector<8x128xf32>
    %159 = arith.divf %157, %158 : vector<8x128xf32>
    %c0_78 = arith.constant 0 : index
    %c0_79 = arith.constant 0 : index
    %160 = vector.load %arg11[%c0_78, %c0_79] : memref<8x128xf32, #tpu.memory_space<vmem>>, vector<8x128xf32>
    %161 = arith.mulf %151, %160 : vector<8x128xf32>
    %162 = arith.mulf %145, %153 : vector<8x128xf32>
    %163 = arith.addf %161, %162 : vector<8x128xf32>
    %164 = math.tanh %163 : vector<8x128xf32>
    %165 = arith.mulf %159, %164 : vector<8x128xf32>
    %c0_80 = arith.constant 0 : index
    %c0_81 = arith.constant 0 : index
    %166 = vector.load %arg11[%c0_80, %c0_81] : memref<8x128xf32, #tpu.memory_space<vmem>>, vector<8x128xf32>
    tpu.vector_store %arg11[%c0_80, %c0_81], %163 {strides = array<i32>} : memref<8x128xf32, #tpu.memory_space<vmem>>, vector<8x128xf32>,
    %c0_82 = arith.constant 0 : index
    %c0_83 = arith.constant 0 : index
    %167 = vector.load %arg10[%c0_82, %c0_83] : memref<8x128xf32, #tpu.memory_space<vmem>>, vector<8x128xf32>
    tpu.vector_store %arg10[%c0_82, %c0_83], %165 {strides = array<i32>} : memref<8x128xf32, #tpu.memory_space<vmem>>, vector<8x128xf32>,
    %168 = arith.index_cast %c3_i32 : i32 to index
    %c0_84 = arith.constant 0 : index
    %c0_85 = arith.constant 0 : index
    %169 = vector.load %arg8[%168, %c0_84, %c0_85] : memref<8x8x128xf32, #tpu.memory_space<vmem>>, vector<1x8x128xf32>
    %170 = vector.shape_cast %169 : vector<1x8x128xf32> to vector<8x128xf32>
    %171 = vector.shape_cast %165 : vector<8x128xf32> to vector<1x8x128xf32>
    tpu.vector_store %arg8[%168, %c0_84, %c0_85], %171 {strides = array<i32>} : memref<8x8x128xf32, #tpu.memory_space<vmem>>, vector<1x8x128xf32>,
    %c4_i32 = arith.constant 4 : i32
    %172 = arith.index_cast %c4_i32 : i32 to index
    %c0_86 = arith.constant 0 : index
    %c0_87 = arith.constant 0 : index
    %173 = vector.load %arg9[%172, %c0_86, %c0_87] : memref<8x8x512xf32, #tpu.memory_space<vmem>>, vector<1x8x512xf32>
    %174 = vector.shape_cast %173 : vector<1x8x512xf32> to vector<8x512xf32>
    %c0_88 = arith.constant 0 : index
    %c0_89 = arith.constant 0 : index
    %175 = vector.load %arg10[%c0_88, %c0_89] : memref<8x128xf32, #tpu.memory_space<vmem>>, vector<8x128xf32>
    %cst_90 = arith.constant dense<0.000000e+00> : vector<8x512xf32>
    %176 = tpu.matmul %175, %19, %cst_90 {dimension_numbers = #tpu.dot_dimension_numbers<[1], [0], [0], [1], [0, 0, 1, 1], [], []>} : vector<8x128xf32>, vector<128x512xf32>, vector<8x512xf32> -> vector<8x512xf32>
    %177 = arith.addf %174, %176 : vector<8x512xf32>
    %178 = vector.extract_strided_slice %177 {offsets = [0, 0], sizes = [8, 128], strides = [1, 1]} : vector<8x512xf32> to vector<8x128xf32>
    %179 = arith.negf %178 : vector<8x128xf32>
    %180 = math.exp %179 : vector<8x128xf32>
    %cst_91 = arith.constant 1.000000e+00 : f32
    %181 = vector.broadcast %cst_91 : f32 to vector<8x128xf32>
    %182 = arith.addf %181, %180 : vector<8x128xf32>
    %183 = arith.divf %181, %182 : vector<8x128xf32>
    %184 = vector.extract_strided_slice %177 {offsets = [0, 128], sizes = [8, 128], strides = [1, 1]} : vector<8x512xf32> to vector<8x128xf32>
    %185 = arith.negf %184 : vector<8x128xf32>
    %186 = math.exp %185 : vector<8x128xf32>
    %cst_92 = arith.constant 1.000000e+00 : f32
    %187 = vector.broadcast %cst_92 : f32 to vector<8x128xf32>
    %188 = arith.addf %187, %186 : vector<8x128xf32>
    %189 = arith.divf %187, %188 : vector<8x128xf32>
    %190 = vector.extract_strided_slice %177 {offsets = [0, 256], sizes = [8, 128], strides = [1, 1]} : vector<8x512xf32> to vector<8x128xf32>
    %191 = math.tanh %190 : vector<8x128xf32>
    %192 = vector.extract_strided_slice %177 {offsets = [0, 384], sizes = [8, 128], strides = [1, 1]} : vector<8x512xf32> to vector<8x128xf32>
    %193 = arith.negf %192 : vector<8x128xf32>
    %194 = math.exp %193 : vector<8x128xf32>
    %cst_93 = arith.constant 1.000000e+00 : f32
    %195 = vector.broadcast %cst_93 : f32 to vector<8x128xf32>
    %196 = arith.addf %195, %194 : vector<8x128xf32>
    %197 = arith.divf %195, %196 : vector<8x128xf32>
    %c0_94 = arith.constant 0 : index
    %c0_95 = arith.constant 0 : index
    %198 = vector.load %arg11[%c0_94, %c0_95] : memref<8x128xf32, #tpu.memory_space<vmem>>, vector<8x128xf32>
    %199 = arith.mulf %189, %198 : vector<8x128xf32>
    %200 = arith.mulf %183, %191 : vector<8x128xf32>
    %201 = arith.addf %199, %200 : vector<8x128xf32>
    %202 = math.tanh %201 : vector<8x128xf32>
    %203 = arith.mulf %197, %202 : vector<8x128xf32>
    %c0_96 = arith.constant 0 : index
    %c0_97 = arith.constant 0 : index
    %204 = vector.load %arg11[%c0_96, %c0_97] : memref<8x128xf32, #tpu.memory_space<vmem>>, vector<8x128xf32>
    tpu.vector_store %arg11[%c0_96, %c0_97], %201 {strides = array<i32>} : memref<8x128xf32, #tpu.memory_space<vmem>>, vector<8x128xf32>,
    %c0_98 = arith.constant 0 : index
    %c0_99 = arith.constant 0 : index
    %205 = vector.load %arg10[%c0_98, %c0_99] : memref<8x128xf32, #tpu.memory_space<vmem>>, vector<8x128xf32>
    tpu.vector_store %arg10[%c0_98, %c0_99], %203 {strides = array<i32>} : memref<8x128xf32, #tpu.memory_space<vmem>>, vector<8x128xf32>,
    %206 = arith.index_cast %c4_i32 : i32 to index
    %c0_100 = arith.constant 0 : index
    %c0_101 = arith.constant 0 : index
    %207 = vector.load %arg8[%206, %c0_100, %c0_101] : memref<8x8x128xf32, #tpu.memory_space<vmem>>, vector<1x8x128xf32>
    %208 = vector.shape_cast %207 : vector<1x8x128xf32> to vector<8x128xf32>
    %209 = vector.shape_cast %203 : vector<8x128xf32> to vector<1x8x128xf32>
    tpu.vector_store %arg8[%206, %c0_100, %c0_101], %209 {strides = array<i32>} : memref<8x8x128xf32, #tpu.memory_space<vmem>>, vector<1x8x128xf32>,
    %c5_i32 = arith.constant 5 : i32
    %210 = arith.index_cast %c5_i32 : i32 to index
    %c0_102 = arith.constant 0 : index
    %c0_103 = arith.constant 0 : index
    %211 = vector.load %arg9[%210, %c0_102, %c0_103] : memref<8x8x512xf32, #tpu.memory_space<vmem>>, vector<1x8x512xf32>
    %212 = vector.shape_cast %211 : vector<1x8x512xf32> to vector<8x512xf32>
    %c0_104 = arith.constant 0 : index
    %c0_105 = arith.constant 0 : index
    %213 = vector.load %arg10[%c0_104, %c0_105] : memref<8x128xf32, #tpu.memory_space<vmem>>, vector<8x128xf32>
    %cst_106 = arith.constant dense<0.000000e+00> : vector<8x512xf32>
    %214 = tpu.matmul %213, %19, %cst_106 {dimension_numbers = #tpu.dot_dimension_numbers<[1], [0], [0], [1], [0, 0, 1, 1], [], []>} : vector<8x128xf32>, vector<128x512xf32>, vector<8x512xf32> -> vector<8x512xf32>
    %215 = arith.addf %212, %214 : vector<8x512xf32>
    %216 = vector.extract_strided_slice %215 {offsets = [0, 0], sizes = [8, 128], strides = [1, 1]} : vector<8x512xf32> to vector<8x128xf32>
    %217 = arith.negf %216 : vector<8x128xf32>
    %218 = math.exp %217 : vector<8x128xf32>
    %cst_107 = arith.constant 1.000000e+00 : f32
    %219 = vector.broadcast %cst_107 : f32 to vector<8x128xf32>
    %220 = arith.addf %219, %218 : vector<8x128xf32>
    %221 = arith.divf %219, %220 : vector<8x128xf32>
    %222 = vector.extract_strided_slice %215 {offsets = [0, 128], sizes = [8, 128], strides = [1, 1]} : vector<8x512xf32> to vector<8x128xf32>
    %223 = arith.negf %222 : vector<8x128xf32>
    %224 = math.exp %223 : vector<8x128xf32>
    %cst_108 = arith.constant 1.000000e+00 : f32
    %225 = vector.broadcast %cst_108 : f32 to vector<8x128xf32>
    %226 = arith.addf %225, %224 : vector<8x128xf32>
    %227 = arith.divf %225, %226 : vector<8x128xf32>
    %228 = vector.extract_strided_slice %215 {offsets = [0, 256], sizes = [8, 128], strides = [1, 1]} : vector<8x512xf32> to vector<8x128xf32>
    %229 = math.tanh %228 : vector<8x128xf32>
    %230 = vector.extract_strided_slice %215 {offsets = [0, 384], sizes = [8, 128], strides = [1, 1]} : vector<8x512xf32> to vector<8x128xf32>
    %231 = arith.negf %230 : vector<8x128xf32>
    %232 = math.exp %231 : vector<8x128xf32>
    %cst_109 = arith.constant 1.000000e+00 : f32
    %233 = vector.broadcast %cst_109 : f32 to vector<8x128xf32>
    %234 = arith.addf %233, %232 : vector<8x128xf32>
    %235 = arith.divf %233, %234 : vector<8x128xf32>
    %c0_110 = arith.constant 0 : index
    %c0_111 = arith.constant 0 : index
    %236 = vector.load %arg11[%c0_110, %c0_111] : memref<8x128xf32, #tpu.memory_space<vmem>>, vector<8x128xf32>
    %237 = arith.mulf %227, %236 : vector<8x128xf32>
    %238 = arith.mulf %221, %229 : vector<8x128xf32>
    %239 = arith.addf %237, %238 : vector<8x128xf32>
    %240 = math.tanh %239 : vector<8x128xf32>
    %241 = arith.mulf %235, %240 : vector<8x128xf32>
    %c0_112 = arith.constant 0 : index
    %c0_113 = arith.constant 0 : index
    %242 = vector.load %arg11[%c0_112, %c0_113] : memref<8x128xf32, #tpu.memory_space<vmem>>, vector<8x128xf32>
    tpu.vector_store %arg11[%c0_112, %c0_113], %239 {strides = array<i32>} : memref<8x128xf32, #tpu.memory_space<vmem>>, vector<8x128xf32>,
    %c0_114 = arith.constant 0 : index
    %c0_115 = arith.constant 0 : index
    %243 = vector.load %arg10[%c0_114, %c0_115] : memref<8x128xf32, #tpu.memory_space<vmem>>, vector<8x128xf32>
    tpu.vector_store %arg10[%c0_114, %c0_115], %241 {strides = array<i32>} : memref<8x128xf32, #tpu.memory_space<vmem>>, vector<8x128xf32>,
    %244 = arith.index_cast %c5_i32 : i32 to index
    %c0_116 = arith.constant 0 : index
    %c0_117 = arith.constant 0 : index
    %245 = vector.load %arg8[%244, %c0_116, %c0_117] : memref<8x8x128xf32, #tpu.memory_space<vmem>>, vector<1x8x128xf32>
    %246 = vector.shape_cast %245 : vector<1x8x128xf32> to vector<8x128xf32>
    %247 = vector.shape_cast %241 : vector<8x128xf32> to vector<1x8x128xf32>
    tpu.vector_store %arg8[%244, %c0_116, %c0_117], %247 {strides = array<i32>} : memref<8x8x128xf32, #tpu.memory_space<vmem>>, vector<1x8x128xf32>,
    %c6_i32 = arith.constant 6 : i32
    %248 = arith.index_cast %c6_i32 : i32 to index
    %c0_118 = arith.constant 0 : index
    %c0_119 = arith.constant 0 : index
    %249 = vector.load %arg9[%248, %c0_118, %c0_119] : memref<8x8x512xf32, #tpu.memory_space<vmem>>, vector<1x8x512xf32>
    %250 = vector.shape_cast %249 : vector<1x8x512xf32> to vector<8x512xf32>
    %c0_120 = arith.constant 0 : index
    %c0_121 = arith.constant 0 : index
    %251 = vector.load %arg10[%c0_120, %c0_121] : memref<8x128xf32, #tpu.memory_space<vmem>>, vector<8x128xf32>
    %cst_122 = arith.constant dense<0.000000e+00> : vector<8x512xf32>
    %252 = tpu.matmul %251, %19, %cst_122 {dimension_numbers = #tpu.dot_dimension_numbers<[1], [0], [0], [1], [0, 0, 1, 1], [], []>} : vector<8x128xf32>, vector<128x512xf32>, vector<8x512xf32> -> vector<8x512xf32>
    %253 = arith.addf %250, %252 : vector<8x512xf32>
    %254 = vector.extract_strided_slice %253 {offsets = [0, 0], sizes = [8, 128], strides = [1, 1]} : vector<8x512xf32> to vector<8x128xf32>
    %255 = arith.negf %254 : vector<8x128xf32>
    %256 = math.exp %255 : vector<8x128xf32>
    %cst_123 = arith.constant 1.000000e+00 : f32
    %257 = vector.broadcast %cst_123 : f32 to vector<8x128xf32>
    %258 = arith.addf %257, %256 : vector<8x128xf32>
    %259 = arith.divf %257, %258 : vector<8x128xf32>
    %260 = vector.extract_strided_slice %253 {offsets = [0, 128], sizes = [8, 128], strides = [1, 1]} : vector<8x512xf32> to vector<8x128xf32>
    %261 = arith.negf %260 : vector<8x128xf32>
    %262 = math.exp %261 : vector<8x128xf32>
    %cst_124 = arith.constant 1.000000e+00 : f32
    %263 = vector.broadcast %cst_124 : f32 to vector<8x128xf32>
    %264 = arith.addf %263, %262 : vector<8x128xf32>
    %265 = arith.divf %263, %264 : vector<8x128xf32>
    %266 = vector.extract_strided_slice %253 {offsets = [0, 256], sizes = [8, 128], strides = [1, 1]} : vector<8x512xf32> to vector<8x128xf32>
    %267 = math.tanh %266 : vector<8x128xf32>
    %268 = vector.extract_strided_slice %253 {offsets = [0, 384], sizes = [8, 128], strides = [1, 1]} : vector<8x512xf32> to vector<8x128xf32>
    %269 = arith.negf %268 : vector<8x128xf32>
    %270 = math.exp %269 : vector<8x128xf32>
    %cst_125 = arith.constant 1.000000e+00 : f32
    %271 = vector.broadcast %cst_125 : f32 to vector<8x128xf32>
    %272 = arith.addf %271, %270 : vector<8x128xf32>
    %273 = arith.divf %271, %272 : vector<8x128xf32>
    %c0_126 = arith.constant 0 : index
    %c0_127 = arith.constant 0 : index
    %274 = vector.load %arg11[%c0_126, %c0_127] : memref<8x128xf32, #tpu.memory_space<vmem>>, vector<8x128xf32>
    %275 = arith.mulf %265, %274 : vector<8x128xf32>
    %276 = arith.mulf %259, %267 : vector<8x128xf32>
    %277 = arith.addf %275, %276 : vector<8x128xf32>
    %278 = math.tanh %277 : vector<8x128xf32>
    %279 = arith.mulf %273, %278 : vector<8x128xf32>
    %c0_128 = arith.constant 0 : index
    %c0_129 = arith.constant 0 : index
    %280 = vector.load %arg11[%c0_128, %c0_129] : memref<8x128xf32, #tpu.memory_space<vmem>>, vector<8x128xf32>
    tpu.vector_store %arg11[%c0_128, %c0_129], %277 {strides = array<i32>} : memref<8x128xf32, #tpu.memory_space<vmem>>, vector<8x128xf32>,
    %c0_130 = arith.constant 0 : index
    %c0_131 = arith.constant 0 : index
    %281 = vector.load %arg10[%c0_130, %c0_131] : memref<8x128xf32, #tpu.memory_space<vmem>>, vector<8x128xf32>
    tpu.vector_store %arg10[%c0_130, %c0_131], %279 {strides = array<i32>} : memref<8x128xf32, #tpu.memory_space<vmem>>, vector<8x128xf32>,
    %282 = arith.index_cast %c6_i32 : i32 to index
    %c0_132 = arith.constant 0 : index
    %c0_133 = arith.constant 0 : index
    %283 = vector.load %arg8[%282, %c0_132, %c0_133] : memref<8x8x128xf32, #tpu.memory_space<vmem>>, vector<1x8x128xf32>
    %284 = vector.shape_cast %283 : vector<1x8x128xf32> to vector<8x128xf32>
    %285 = vector.shape_cast %279 : vector<8x128xf32> to vector<1x8x128xf32>
    tpu.vector_store %arg8[%282, %c0_132, %c0_133], %285 {strides = array<i32>} : memref<8x8x128xf32, #tpu.memory_space<vmem>>, vector<1x8x128xf32>,
    %c7_i32 = arith.constant 7 : i32
    %286 = arith.index_cast %c7_i32 : i32 to index
    %c0_134 = arith.constant 0 : index
    %c0_135 = arith.constant 0 : index
    %287 = vector.load %arg9[%286, %c0_134, %c0_135] : memref<8x8x512xf32, #tpu.memory_space<vmem>>, vector<1x8x512xf32>
    %288 = vector.shape_cast %287 : vector<1x8x512xf32> to vector<8x512xf32>
    %c0_136 = arith.constant 0 : index
    %c0_137 = arith.constant 0 : index
    %289 = vector.load %arg10[%c0_136, %c0_137] : memref<8x128xf32, #tpu.memory_space<vmem>>, vector<8x128xf32>
    %cst_138 = arith.constant dense<0.000000e+00> : vector<8x512xf32>
    %290 = tpu.matmul %289, %19, %cst_138 {dimension_numbers = #tpu.dot_dimension_numbers<[1], [0], [0], [1], [0, 0, 1, 1], [], []>} : vector<8x128xf32>, vector<128x512xf32>, vector<8x512xf32> -> vector<8x512xf32>
    %291 = arith.addf %288, %290 : vector<8x512xf32>
    %292 = vector.extract_strided_slice %291 {offsets = [0, 0], sizes = [8, 128], strides = [1, 1]} : vector<8x512xf32> to vector<8x128xf32>
    %293 = arith.negf %292 : vector<8x128xf32>
    %294 = math.exp %293 : vector<8x128xf32>
    %cst_139 = arith.constant 1.000000e+00 : f32
    %295 = vector.broadcast %cst_139 : f32 to vector<8x128xf32>
    %296 = arith.addf %295, %294 : vector<8x128xf32>
    %297 = arith.divf %295, %296 : vector<8x128xf32>
    %298 = vector.extract_strided_slice %291 {offsets = [0, 128], sizes = [8, 128], strides = [1, 1]} : vector<8x512xf32> to vector<8x128xf32>
    %299 = arith.negf %298 : vector<8x128xf32>
    %300 = math.exp %299 : vector<8x128xf32>
    %cst_140 = arith.constant 1.000000e+00 : f32
    %301 = vector.broadcast %cst_140 : f32 to vector<8x128xf32>
    %302 = arith.addf %301, %300 : vector<8x128xf32>
    %303 = arith.divf %301, %302 : vector<8x128xf32>
    %304 = vector.extract_strided_slice %291 {offsets = [0, 256], sizes = [8, 128], strides = [1, 1]} : vector<8x512xf32> to vector<8x128xf32>
    %305 = math.tanh %304 : vector<8x128xf32>
    %306 = vector.extract_strided_slice %291 {offsets = [0, 384], sizes = [8, 128], strides = [1, 1]} : vector<8x512xf32> to vector<8x128xf32>
    %307 = arith.negf %306 : vector<8x128xf32>
    %308 = math.exp %307 : vector<8x128xf32>
    %cst_141 = arith.constant 1.000000e+00 : f32
    %309 = vector.broadcast %cst_141 : f32 to vector<8x128xf32>
    %310 = arith.addf %309, %308 : vector<8x128xf32>
    %311 = arith.divf %309, %310 : vector<8x128xf32>
    %c0_142 = arith.constant 0 : index
    %c0_143 = arith.constant 0 : index
    %312 = vector.load %arg11[%c0_142, %c0_143] : memref<8x128xf32, #tpu.memory_space<vmem>>, vector<8x128xf32>
    %313 = arith.mulf %303, %312 : vector<8x128xf32>
    %314 = arith.mulf %297, %305 : vector<8x128xf32>
    %315 = arith.addf %313, %314 : vector<8x128xf32>
    %316 = math.tanh %315 : vector<8x128xf32>
    %317 = arith.mulf %311, %316 : vector<8x128xf32>
    %c0_144 = arith.constant 0 : index
    %c0_145 = arith.constant 0 : index
    %318 = vector.load %arg11[%c0_144, %c0_145] : memref<8x128xf32, #tpu.memory_space<vmem>>, vector<8x128xf32>
    tpu.vector_store %arg11[%c0_144, %c0_145], %315 {strides = array<i32>} : memref<8x128xf32, #tpu.memory_space<vmem>>, vector<8x128xf32>,
    %c0_146 = arith.constant 0 : index
    %c0_147 = arith.constant 0 : index
    %319 = vector.load %arg10[%c0_146, %c0_147] : memref<8x128xf32, #tpu.memory_space<vmem>>, vector<8x128xf32>
    tpu.vector_store %arg10[%c0_146, %c0_147], %317 {strides = array<i32>} : memref<8x128xf32, #tpu.memory_space<vmem>>, vector<8x128xf32>,
    %320 = arith.index_cast %c7_i32 : i32 to index
    %c0_148 = arith.constant 0 : index
    %c0_149 = arith.constant 0 : index
    %321 = vector.load %arg8[%320, %c0_148, %c0_149] : memref<8x8x128xf32, #tpu.memory_space<vmem>>, vector<1x8x128xf32>
    %322 = vector.shape_cast %321 : vector<1x8x128xf32> to vector<8x128xf32>
    %323 = vector.shape_cast %317 : vector<8x128xf32> to vector<1x8x128xf32>
    tpu.vector_store %arg8[%320, %c0_148, %c0_149], %323 {strides = array<i32>} : memref<8x8x128xf32, #tpu.memory_space<vmem>>, vector<1x8x128xf32>,
    %c8_i32 = arith.constant 8 : i32
    %c0_150 = arith.constant 0 : index
    %c0_151 = arith.constant 0 : index
    %324 = vector.load %arg10[%c0_150, %c0_151] : memref<8x128xf32, #tpu.memory_space<vmem>>, vector<8x128xf32>
    %c0_152 = arith.constant 0 : index
    %c0_153 = arith.constant 0 : index
    %325 = vector.load %arg5[%c0_152, %c0_153] : memref<128x128xf32, #tpu.memory_space<vmem>>, vector<128x128xf32>
    %cst_154 = arith.constant dense<0.000000e+00> : vector<8x128xf32>
    %326 = tpu.matmul %324, %325, %cst_154 {dimension_numbers = #tpu.dot_dimension_numbers<[1], [0], [0], [1], [0, 0, 1, 1], [], []>} : vector<8x128xf32>, vector<128x128xf32>, vector<8x128xf32> -> vector<8x128xf32>
    %c0_155 = arith.constant 0 : index
    %c0_156 = arith.constant 0 : index
    %327 = vector.load %arg6[%c0_155, %c0_156] : memref<1x128xf32, #tpu.memory_space<vmem>>, vector<1x128xf32>
    %328 = vector.broadcast %327 : vector<1x128xf32> to vector<8x128xf32>
    %329 = arith.addf %326, %328 : vector<8x128xf32>
    %c0_157 = arith.constant 0 : index
    %c0_158 = arith.constant 0 : index
    %c0_159 = arith.constant 0 : index
    %330 = vector.load %arg7[%c0_157, %c0_158, %c0_159] : memref<1x8x128xf32, #tpu.memory_space<vmem>>, vector<1x8x128xf32>
    %331 = vector.shape_cast %330 : vector<1x8x128xf32> to vector<8x128xf32>
    %332 = vector.shape_cast %329 : vector<8x128xf32> to vector<1x8x128xf32>
    tpu.vector_store %arg7[%c0_157, %c0_158, %c0_159], %332 {strides = array<i32>} : memref<1x8x128xf32, #tpu.memory_space<vmem>>, vector<1x8x128xf32>,
    return
  }
  func.func @transform_0(%arg0: i32) -> (i32, i32, i32) {
    %c0_i32 = arith.constant 0 : i32
    %c0_i32_0 = arith.constant 0 : i32
    %c0_i32_1 = arith.constant 0 : i32
    %c0_i32_2 = arith.constant 0 : i32
    return %c0_i32, %c0_i32_0, %c0_i32_1 : i32, i32, i32
  }
  func.func @transform_1(%arg0: i32) -> (i32, i32, i32) {
    %c0_i32 = arith.constant 0 : i32
    %c0_i32_0 = arith.constant 0 : i32
    %c0_i32_1 = arith.constant 0 : i32
    return %arg0, %c0_i32, %c0_i32_0 : i32, i32, i32
  }
  func.func @transform_2(%arg0: i32) -> (i32, i32, i32) {
    %c0_i32 = arith.constant 0 : i32
    %c0_i32_0 = arith.constant 0 : i32
    %c0_i32_1 = arith.constant 0 : i32
    return %arg0, %c0_i32, %c0_i32_0 : i32, i32, i32
  }
  func.func @transform_3(%arg0: i32) -> (i32, i32, i32) {
    %c0_i32 = arith.constant 0 : i32
    %c0_i32_0 = arith.constant 0 : i32
    %c0_i32_1 = arith.constant 0 : i32
    return %arg0, %c0_i32, %c0_i32_0 : i32, i32, i32
  }
  func.func @transform_4(%arg0: i32) -> (i32, i32) {
    %c0_i32 = arith.constant 0 : i32
    %c0_i32_0 = arith.constant 0 : i32
    %c0_i32_1 = arith.constant 0 : i32
    return %c0_i32, %c0_i32_0 : i32, i32
  }
  func.func @transform_5(%arg0: i32) -> (i32, i32) {
    %c0_i32 = arith.constant 0 : i32
    %c0_i32_0 = arith.constant 0 : i32
    %c0_i32_1 = arith.constant 0 : i32
    return %c0_i32, %c0_i32_0 : i32, i32
  }
  func.func @transform_6(%arg0: i32) -> (i32, i32, i32) {
    %c0_i32 = arith.constant 0 : i32
    %c0_i32_0 = arith.constant 0 : i32
    %c0_i32_1 = arith.constant 0 : i32
    return %arg0, %c0_i32, %c0_i32_0 : i32, i32, i32
  }
}

</mosaic_0001>

<llo_original>
// kernel: tpu_custom_call.1
$region0: #{tpu_custom_call.1}
  #allocation0 [shape = 'u32[]', space=smem, size = 0x4, offset = 0x4, fixed_abs, tag = 'smem constant byte address 0x4 - core index']
  #allocation1 [shape = 'u32[144,128]{1,0:T(1,128)}', space=vmem, size = 0x12000, scoped, tag = 'internal scratch']
  #allocation2 [shape = 'f32[8,8,128]{2,1,0:T(8,128)}', space=vmem, size = 0x8000, scoped, tag = 'scratch operand']
  #allocation3 [shape = 'f32[8,8,512]{2,1,0:T(8,128)}', space=vmem, size = 0x20000, scoped, tag = 'scratch operand']
  #allocation4 [shape = 'f32[8,128]{1,0:T(8,128)}', space=vmem, size = 0x1000, scoped, tag = 'scratch operand']
  #allocation5 [shape = 'f32[8,128]{1,0:T(8,128)}', space=vmem, size = 0x1000, scoped, tag = 'scratch operand']
  %s0 = inlined_call_operand.hbm [shape: f32[8,8,128], index: 0, kind: input, shape index: {}]
  %s1 = inlined_call_operand.hbm [shape: f32[2,128,512], index: 1, kind: input, shape index: {}]
  %s2 = inlined_call_operand.hbm [shape: f32[2,128,512], index: 2, kind: input, shape index: {}]
  %s3 = inlined_call_operand.vmem [shape: f32[2,1,512], index: 3, kind: input, shape index: {}]
  %s4 = inlined_call_operand.hbm [shape: f32[128,128], index: 4, kind: input, shape index: {}]
  %s5 = inlined_call_operand.vmem [shape: f32[1,128], index: 5, kind: input, shape index: {}]
  %s6 = inlined_call_operand.hbm [shape: f32[2,8,128], index: 6, kind: output, shape index: {}]
  %s7 = sld [smem:[#allocation0]]
  $region77: #{tpu_custom_call.1} parent=0
    _
  %s9 = ssub.s32 1, %s7
  %s10 = scalar_select 0, %s9, %s7
  $region1: #{tpu_custom_call.1} parent=0
    #allocation6 [shape = 'u8[32768]{0}', space=vmem, size = 0x8000, scoped, tag = 'input window, operand 0, single buffered']
    #allocation7 [shape = 's32[2]{0}', space=sflag, size = 0x8, scoped, tag = 'scoped memory for tpu_custom_call.1']
    #allocation8 [shape = 's32[2]{0}', space=sflag, size = 0x8, scoped, tag = 'scoped memory for tpu_custom_call.1']
    #allocation9 [shape = 'u8[524288]{0}', space=vmem, size = 0x80000, scoped, tag = 'input window, operand 1']
    #allocation10 [shape = 's32[2]{0}', space=sflag, size = 0x8, scoped, tag = 'scoped memory for tpu_custom_call.1']
    #allocation11 [shape = 'u8[524288]{0}', space=vmem, size = 0x80000, scoped, tag = 'input window, operand 2']
    #allocation12 [shape = 'u8[65536]{0}', space=vmem, size = 0x10000, scoped, tag = 'input window, operand 4, single buffered']
    #allocation13 [shape = 's32[1]{0}', space=sflag, size = 0x4, scoped, tag = 'scoped memory for tpu_custom_call.1']
    #allocation14 [shape = 'u8[8192]{0}', space=vmem, size = 0x2000, scoped, tag = 'output window, operand 0']
    %11 = vsyncpa [#allocation7], 0
    %12 = vsyncpa [#allocation10], 0
    %s13 = scalar_lea.sflag [#allocation10], 1
    %14 = vsyncpa %s13, 0
    %15 = vsyncpa [#allocation13], 0
    %16 = vsyncpa [#allocation8], 0
    %s17 = scalar_lea.sflag [#allocation8], 1
    %18 = vsyncpa %s17, 0
    loop: start=0, step=1, limit=4
    $region2: #{tpu_custom_call.1} parent=1 // loop_pre_header
      _
    $region3: #{tpu_custom_call.1} parent=1 // loop_header
      %s20 = sphi 0, %s24
      %p21 = scmp.ge.s32.totalorder %s20, 4
      %s28 = sphi 0, %s28
      %s30 = sphi 0, %s28
      %s31 = sphi 0, %s30
      %s45 = sphi 0, %s31
      %s51 = sphi 0, %s53
      %s54 = sphi 0, %s51
      %s55 = sphi 0, %s54
      %s71 = sphi 0, %s55
      %s77 = sphi 0, %s79
      %s80 = sphi 0, %s77
      %s81 = sphi 0, %s80
      %s97 = sphi 0, %s81
      %s103 = sphi 0, %s105
      %s106 = sphi 0, %s103
      %s107 = sphi 0, %s106
      %s123 = sphi 0, %s107
      %s127 = sphi 0, %s127
      %s129 = sphi 0, %s127
      %s130 = sphi 0, %s129
      %s144 = sphi 0, %s130
      %s148 = sphi 0, %s148
      %s150 = sphi 0, %s148
      %s151 = sphi 0, %s150
      %s165 = sphi 0, %s151
      %s171 = sphi 0, %s173
      %s174 = sphi 0, %s171
      %s175 = sphi 0, %s174
      %s191 = sphi 0, %s175
    $region4: #{tpu_custom_call.1} parent=1 // loop_header_branch
      %23 = sbr.rel (%p21) target = $region8
    $region5: #{tpu_custom_call.1} parent=1 // loop_body
      %s25 = ssub.s32 %s20, 1
      %s26 = ssub.s32 %s20, 2
      %s27 = sadd.s32 %s20, 1
      %s29 = sadd.s32 %s28, 1
      %p32 = scmp.eq.s32.totalorder %s20, 1
      %p33 = scmp.ne.s32.totalorder %s28, %s30
      %p34 = scmp.eq.s32.totalorder %s20, 0
      %p35 = por %p33, %p34
      %p36 = scmp.ne.s32.totalorder %s28, %s30
      %p37 = scmp.eq.s32.totalorder %s25, 1
      %p38 = por %p36, %p37
      %p39 = scmp.ne.s32.totalorder %s30, %s31
      %p40 = scmp.eq.s32.totalorder %s25, 0
      %p41 = por %p39, %p40
      %p42 = scmp.ne.s32.totalorder %s30, %s31
      %p43 = scmp.eq.s32.totalorder %s26, 1
      %p44 = por %p42, %p43
      %p46 = scmp.ne.s32.totalorder %s31, %s45
      %p47 = scmp.eq.s32.totalorder %s26, 0
      %p48 = por %p46, %p47
      %s49 = ssub.s32 %s20, %s27
      %p50 = scmp.eq.s32.totalorder %s49, 0
      %s52 = sadd.s32 %s51, 1
      %s53 = scalar_select %p50, %s51, %s52
      %p56 = pneg %p50
      %p57 = scmp.eq.s32.totalorder %s20, 1
      %p58 = por %p56, %p57
      %p59 = scmp.ne.s32.totalorder %s51, %s54
      %p60 = scmp.eq.s32.totalorder %s20, 0
      %p61 = por %p59, %p60
      %p62 = scmp.ne.s32.totalorder %s51, %s54
      %p63 = scmp.eq.s32.totalorder %s25, 1
      %p64 = por %p62, %p63
      %p65 = scmp.ne.s32.totalorder %s54, %s55
      %p66 = scmp.eq.s32.totalorder %s25, 0
      %p67 = por %p65, %p66
      %p68 = scmp.ne.s32.totalorder %s54, %s55
      %p69 = scmp.eq.s32.totalorder %s26, 1
      %p70 = por %p68, %p69
      %p72 = scmp.ne.s32.totalorder %s55, %s71
      %p73 = scmp.eq.s32.totalorder %s26, 0
      %p74 = por %p72, %p73
      %s75 = ssub.s32 %s20, %s27
      %p76 = scmp.eq.s32.totalorder %s75, 0
      %s78 = sadd.s32 %s77, 1
      %s79 = scalar_select %p76, %s77, %s78
      %p82 = pneg %p76
      %p83 = scmp.eq.s32.totalorder %s20, 1
      %p84 = por %p82, %p83
      %p85 = scmp.ne.s32.totalorder %s77, %s80
      %p86 = scmp.eq.s32.totalorder %s20, 0
      %p87 = por %p85, %p86
      %p88 = scmp.ne.s32.totalorder %s77, %s80
      %p89 = scmp.eq.s32.totalorder %s25, 1
      %p90 = por %p88, %p89
      %p91 = scmp.ne.s32.totalorder %s80, %s81
      %p92 = scmp.eq.s32.totalorder %s25, 0
      %p93 = por %p91, %p92
      %p94 = scmp.ne.s32.totalorder %s80, %s81
      %p95 = scmp.eq.s32.totalorder %s26, 1
      %p96 = por %p94, %p95
      %p98 = scmp.ne.s32.totalorder %s81, %s97
      %p99 = scmp.eq.s32.totalorder %s26, 0
      %p100 = por %p98, %p99
      %s101 = ssub.s32 %s20, %s27
      %p102 = scmp.eq.s32.totalorder %s101, 0
      %s104 = sadd.s32 %s103, 1
      %s105 = scalar_select %p102, %s103, %s104
      %p108 = pneg %p102
      %p109 = scmp.eq.s32.totalorder %s20, 1
      %p110 = por %p108, %p109
      %p111 = scmp.ne.s32.totalorder %s103, %s106
      %p112 = scmp.eq.s32.totalorder %s20, 0
      %p113 = por %p111, %p112
      %p114 = scmp.ne.s32.totalorder %s103, %s106
      %p115 = scmp.eq.s32.totalorder %s25, 1
      %p116 = por %p114, %p115
      %p117 = scmp.ne.s32.totalorder %s106, %s107
      %p118 = scmp.eq.s32.totalorder %s25, 0
      %p119 = por %p117, %p118
      %p120 = scmp.ne.s32.totalorder %s106, %s107
      %p121 = scmp.eq.s32.totalorder %s26, 1
      %p122 = por %p120, %p121
      %p124 = scmp.ne.s32.totalorder %s107, %s123
      %p125 = scmp.eq.s32.totalorder %s26, 0
      %p126 = por %p124, %p125
      %s128 = sadd.s32 %s127, 1
      %p131 = scmp.eq.s32.totalorder %s20, 1
      %p132 = scmp.ne.s32.totalorder %s127, %s129
      %p133 = scmp.eq.s32.totalorder %s20, 0
      %p134 = por %p132, %p133
      %p135 = scmp.ne.s32.totalorder %s127, %s129
      %p136 = scmp.eq.s32.totalorder %s25, 1
      %p137 = por %p135, %p136
      %p138 = scmp.ne.s32.totalorder %s129, %s130
      %p139 = scmp.eq.s32.totalorder %s25, 0
      %p140 = por %p138, %p139
      %p141 = scmp.ne.s32.totalorder %s129, %s130
      %p142 = scmp.eq.s32.totalorder %s26, 1
      %p143 = por %p141, %p142
      %p145 = scmp.ne.s32.totalorder %s130, %s144
      %p146 = scmp.eq.s32.totalorder %s26, 0
      %p147 = por %p145, %p146
      %s149 = sadd.s32 %s148, 1
      %p152 = scmp.eq.s32.totalorder %s20, 1
      %p153 = scmp.ne.s32.totalorder %s148, %s150
      %p154 = scmp.eq.s32.totalorder %s20, 0
      %p155 = por %p153, %p154
      %p156 = scmp.ne.s32.totalorder %s148, %s150
      %p157 = scmp.eq.s32.totalorder %s25, 1
      %p158 = por %p156, %p157
      %p159 = scmp.ne.s32.totalorder %s150, %s151
      %p160 = scmp.eq.s32.totalorder %s25, 0
      %p161 = por %p159, %p160
      %p162 = scmp.ne.s32.totalorder %s150, %s151
      %p163 = scmp.eq.s32.totalorder %s26, 1
      %p164 = por %p162, %p163
      %p166 = scmp.ne.s32.totalorder %s151, %s165
      %p167 = scmp.eq.s32.totalorder %s26, 0
      %p168 = por %p166, %p167
      %s169 = ssub.s32 %s20, %s27
      %p170 = scmp.eq.s32.totalorder %s169, 0
      %s172 = sadd.s32 %s171, 1
      %s173 = scalar_select %p170, %s171, %s172
      %p176 = pneg %p170
      %p177 = scmp.eq.s32.totalorder %s20, 1
      %p178 = por %p176, %p177
      %p179 = scmp.ne.s32.totalorder %s171, %s174
      %p180 = scmp.eq.s32.totalorder %s20, 0
      %p181 = por %p179, %p180
      %p182 = scmp.ne.s32.totalorder %s171, %s174
      %p183 = scmp.eq.s32.totalorder %s25, 1
      %p184 = por %p182, %p183
      %p185 = scmp.ne.s32.totalorder %s174, %s175
      %p186 = scmp.eq.s32.totalorder %s25, 0
      %p187 = por %p185, %p186
      %p188 = scmp.ne.s32.totalorder %s174, %s175
      %p189 = scmp.eq.s32.totalorder %s26, 1
      %p190 = por %p188, %p189
      %p192 = scmp.ne.s32.totalorder %s175, %s191
      %p193 = scmp.eq.s32.totalorder %s26, 0
      %p194 = por %p192, %p193
      %p195 = scmp.le.s32.totalorder 1, %s20
      %p196 = scmp.lt.s32.totalorder %s20, 3
      %p197 = pnand %p195, %p196
      %p198 = pneg %p197
      // Predicated region
      $region9: #{tpu_custom_call.1} parent=5 // pred_check
        _
      $region10: #{tpu_custom_call.1} parent=5 // pred_check_branch
        %200 = sbr.rel (%p197) target = $region12
      $region11: #{tpu_custom_call.1} parent=5 // pred_region
        %s201 = ssub.s32 %s20, 1
        // Predicated region
        $region13: #{tpu_custom_call.1} parent=11 // pred_check
          %p202 = pneg %p41
        $region14: #{tpu_custom_call.1} parent=11 // pred_check_branch
          %204 = sbr.rel (%p202) target = $region16
        $region15: #{tpu_custom_call.1} parent=11 // pred_region
          %s206 = ssub.s32 1024, 1024
          %207 = vsyncadd [#allocation7], %s206
          %s208 = sshll.u32 [#allocation6], 4
          %s209 = int_to_ptr.vmem [resolvable:$true] %s208
          %214 = dma.hbm_to_vmem [thread:$0]  %s0, 1024, %s209, [#allocation7], 128, 128, 8
        $region16: #{tpu_custom_call.1} parent=11 // pred_fallthru
          _
        // Predicated region
        $region17: #{tpu_custom_call.1} parent=11 // pred_check
          %p215 = pneg %p140
        $region18: #{tpu_custom_call.1} parent=11 // pred_check_branch
          %217 = sbr.rel (%p215) target = $region20
        $region19: #{tpu_custom_call.1} parent=11 // pred_region
          %s219 = ssub.s32 2048, 2048
          %220 = vsyncadd [#allocation13], %s219
          %s221 = sshll.u32 [#allocation12], 4
          %s222 = int_to_ptr.vmem [resolvable:$true] %s221
          %227 = dma.hbm_to_vmem [thread:$0]  %s4, 2048, %s222, [#allocation13], 128, 128, 8
        $region20: #{tpu_custom_call.1} parent=11 // pred_fallthru
          _
        // Predicated region
        $region21: #{tpu_custom_call.1} parent=11 // pred_check
          %p228 = pneg %p161
        $region22: #{tpu_custom_call.1} parent=11 // pred_check_branch
          %230 = sbr.rel (%p228) target = $region24
        $region23: #{tpu_custom_call.1} parent=11 // pred_region
          _
        $region24: #{tpu_custom_call.1} parent=11 // pred_fallthru
          _
      $region12: #{tpu_custom_call.1} parent=5 // pred_fallthru
        _
      %p231 = scmp.lt.s32.totalorder %s20, 2
      // Predicated region
      $region25: #{tpu_custom_call.1} parent=5 // pred_check
        %p232 = pneg %p231
      $region26: #{tpu_custom_call.1} parent=5 // pred_check_branch
        %234 = sbr.rel (%p232) target = $region28
      $region27: #{tpu_custom_call.1} parent=5 // pred_region
        // Predicated region
        $region29: #{tpu_custom_call.1} parent=27 // pred_check
          %p235 = pneg %p61
        $region30: #{tpu_custom_call.1} parent=27 // pred_check_branch
          %237 = sbr.rel (%p235) target = $region32
        $region31: #{tpu_custom_call.1} parent=27 // pred_region
          %s238 = sand.u32 %s20, 1
          %s239 = scalar_lea.sflag [#allocation10], %s238
          %s240 = sand.u32 %s51, 1
          %s241 = smul.addr %s240, 512
          %s242 = scalar_lea.vmem [#allocation9], %s241
          %s244 = ssub.s32 8192, 8192
          %245 = vsyncadd %s239, %s244
          %s246 = smul.addr %s20, 64
          %s247 = smul.addr %s246, 128
          %s248 = scalar_lea.hbm %s1, %s247
          %s249 = sshll.u32 %s242, 4
          %s250 = int_to_ptr.vmem [resolvable:$true] %s249
          %255 = dma.hbm_to_vmem [thread:$0]  %s248, 8192, %s250, %s239, 512, 512, 32
        $region32: #{tpu_custom_call.1} parent=27 // pred_fallthru
          _
        // Predicated region
        $region33: #{tpu_custom_call.1} parent=27 // pred_check
          %p256 = pneg %p87
        $region34: #{tpu_custom_call.1} parent=27 // pred_check_branch
          %258 = sbr.rel (%p256) target = $region36
        $region35: #{tpu_custom_call.1} parent=27 // pred_region
          %s259 = sand.u32 %s20, 1
          %s260 = scalar_lea.sflag [#allocation10], %s259
          %s261 = sand.u32 %s77, 1
          %s262 = smul.addr %s261, 512
          %s263 = scalar_lea.vmem [#allocation11], %s262
          %s265 = ssub.s32 8192, 8192
          %266 = vsyncadd %s260, %s265
          %s267 = smul.addr %s20, 64
          %s268 = smul.addr %s267, 128
          %s269 = scalar_lea.hbm %s2, %s268
          %s270 = sshll.u32 %s263, 4
          %s271 = int_to_ptr.vmem [resolvable:$true] %s270
          %276 = dma.hbm_to_vmem [thread:$0]  %s269, 8192, %s271, %s260, 512, 512, 32
        $region36: #{tpu_custom_call.1} parent=27 // pred_fallthru
          _
        // Predicated region
        $region37: #{tpu_custom_call.1} parent=27 // pred_check
          %p277 = pneg %p113
        $region38: #{tpu_custom_call.1} parent=27 // pred_check_branch
          %279 = sbr.rel (%p277) target = $region40
        $region39: #{tpu_custom_call.1} parent=27 // pred_region
          %p280 = scmp.lt.s32.totalorder %s20, 1
          %s281 = scalar_select %p280, %s20, 1
          %s282 = smul.addr %s281, 4
          %s283 = scalar_lea.vmem %s3, %s282
        $region40: #{tpu_custom_call.1} parent=27 // pred_fallthru
          _
      $region28: #{tpu_custom_call.1} parent=5 // pred_fallthru
        _
      %p284 = scmp.le.s32.totalorder 1, %s20
      %p285 = scmp.lt.s32.totalorder %s20, 3
      %p286 = pnand %p284, %p285
      %p287 = pneg %p286
      // Predicated region
      $region41: #{tpu_custom_call.1} parent=5 // pred_check
        _
      $region42: #{tpu_custom_call.1} parent=5 // pred_check_branch
        %289 = sbr.rel (%p286) target = $region44
      $region43: #{tpu_custom_call.1} parent=5 // pred_region
        %s290 = ssub.s32 %s20, 1
        // Predicated region
        $region45: #{tpu_custom_call.1} parent=43 // pred_check
          %p291 = pneg %p41
        $region46: #{tpu_custom_call.1} parent=43 // pred_check_branch
          %293 = sbr.rel (%p291) target = $region48
        $region47: #{tpu_custom_call.1} parent=43 // pred_region
          %294 = dma.done [#allocation7], 1024
        $region48: #{tpu_custom_call.1} parent=43 // pred_fallthru
          _
        %s295 = sand.u32 %s25, 1
        %s296 = scalar_lea.sflag [#allocation10], %s295
        %s297 = sand.u32 %s54, 1
        %s298 = smul.addr %s297, 512
        %s299 = scalar_lea.vmem [#allocation9], %s298
        // Predicated region
        $region49: #{tpu_custom_call.1} parent=43 // pred_check
          %p300 = pneg %p67
        $region50: #{tpu_custom_call.1} parent=43 // pred_check_branch
          %302 = sbr.rel (%p300) target = $region52
        $region51: #{tpu_custom_call.1} parent=43 // pred_region
          %303 = dma.done %s296, 8192
        $region52: #{tpu_custom_call.1} parent=43 // pred_fallthru
          _
        %s304 = sand.u32 %s25, 1
        %s305 = scalar_lea.sflag [#allocation10], %s304
        %s306 = sand.u32 %s80, 1
        %s307 = smul.addr %s306, 512
        %s308 = scalar_lea.vmem [#allocation11], %s307
        // Predicated region
        $region53: #{tpu_custom_call.1} parent=43 // pred_check
          %p309 = pneg %p93
        $region54: #{tpu_custom_call.1} parent=43 // pred_check_branch
          %311 = sbr.rel (%p309) target = $region56
        $region55: #{tpu_custom_call.1} parent=43 // pred_region
          %312 = dma.done %s305, 8192
        $region56: #{tpu_custom_call.1} parent=43 // pred_fallthru
          _
        // Predicated region
        $region57: #{tpu_custom_call.1} parent=43 // pred_check
          %p313 = pneg %p140
        $region58: #{tpu_custom_call.1} parent=43 // pred_check_branch
          %315 = sbr.rel (%p313) target = $region60
        $region59: #{tpu_custom_call.1} parent=43 // pred_region
          %316 = dma.done [#allocation13], 2048
        $region60: #{tpu_custom_call.1} parent=43 // pred_fallthru
          _
        %p317 = pneg %p41
        %p318 = pneg %p38
        %s319 = sand.u32 %s25, 1
        %s320 = scalar_lea.sflag [#allocation10], %s319
        %s321 = sand.u32 %s54, 1
        %s322 = smul.addr %s321, 512
        %s323 = scalar_lea.vmem [#allocation9], %s322
        %p324 = pneg %p67
        %p325 = pneg %p64
        %s326 = sand.u32 %s25, 1
        %s327 = scalar_lea.sflag [#allocation10], %s326
        %s328 = sand.u32 %s80, 1
        %s329 = smul.addr %s328, 512
        %s330 = scalar_lea.vmem [#allocation11], %s329
        %p331 = pneg %p93
        %p332 = pneg %p90
        %p333 = scmp.lt.s32.totalorder %s25, 1
        %s334 = scalar_select %p333, %s25, 1
        %s335 = smul.addr %s334, 4
        %s336 = scalar_lea.vmem %s3, %s335
        %p337 = pneg %p119
        %p338 = pneg %p116
        %p339 = pneg %p140
        %p340 = pneg %p137
        %p341 = pneg %p161
        %p342 = pneg %p158
        %p343 = pneg %p187
        %p344 = pneg %p184
        %s345 = sand.u32 %s174, 1
        %s346 = scalar_lea.sflag [#allocation8], %s345
        %s347 = sand.u32 %s174, 1
        %s348 = smul.addr %s347, 8
        %s349 = scalar_lea.vmem [#allocation14], %s348
        %p350 = scmp.lt.s32.totalorder %s25, 1
        %s351 = scalar_select %p350, %s25, 1
        %s352 = smul.addr %s351, 4
        %s353 = scalar_lea.vmem %s3, %s352
        %p354 = scmp.eq.s32.totalorder %s25, 0
        // Predicated region
        $region61: #{tpu_custom_call.1} parent=43 // pred_check
          %p355 = pneg %p354
        $region62: #{tpu_custom_call.1} parent=43 // pred_check_branch
          %357 = sbr.rel (%p355) target = $region64
        $region63: #{tpu_custom_call.1} parent=43 // pred_region
          %v358 = vld [vmem:[#allocation6] sm:$0xff]
          %v359 = vld [vmem:[#allocation6 + $0x8] sm:$0xff]
          %v360 = vld [vmem:[#allocation6 + $0x10] sm:$0xff]
          %v361 = vld [vmem:[#allocation6 + $0x18] sm:$0xff]
          %v362 = vld [vmem:[#allocation6 + $0x20] sm:$0xff]
          %v363 = vld [vmem:[#allocation6 + $0x28] sm:$0xff]
          %v364 = vld [vmem:[#allocation6 + $0x30] sm:$0xff]
          %v365 = vld [vmem:[#allocation6 + $0x38] sm:$0xff]
          %366 = vst [vmem:[#allocation2] sm:$0xff] %v358
          %367 = vst [vmem:[#allocation2 + $0x8] sm:$0xff] %v359
          %368 = vst [vmem:[#allocation2 + $0x10] sm:$0xff] %v360
          %369 = vst [vmem:[#allocation2 + $0x18] sm:$0xff] %v361
          %370 = vst [vmem:[#allocation2 + $0x20] sm:$0xff] %v362
          %371 = vst [vmem:[#allocation2 + $0x28] sm:$0xff] %v363
          %372 = vst [vmem:[#allocation2 + $0x30] sm:$0xff] %v364
          %373 = vst [vmem:[#allocation2 + $0x38] sm:$0xff] %v365
        $region64: #{tpu_custom_call.1} parent=43 // pred_fallthru
          _
        %v374 = vld [vmem:[#allocation2] sm:$0xff]
        %v375 = vld [vmem:[#allocation2 + $0x8] sm:$0xff]
        %v376 = vld [vmem:[#allocation2 + $0x10] sm:$0xff]
        %v377 = vld [vmem:[#allocation2 + $0x18] sm:$0xff]
        %v378 = vld [vmem:[#allocation2 + $0x20] sm:$0xff]
        %v379 = vld [vmem:[#allocation2 + $0x28] sm:$0xff]
        %v380 = vld [vmem:[#allocation2 + $0x30] sm:$0xff]
        %v381 = vld [vmem:[#allocation2 + $0x38] sm:$0xff]
        %v382 = vld [vmem:[%s299] sm:$0xff]
        %v383 = vld [vmem:[%s299 + $0x8] sm:$0xff]
        %v384 = vld [vmem:[%s299 + $0x10] sm:$0xff]
        %v385 = vld [vmem:[%s299 + $0x18] sm:$0xff]
        %v386 = vld [vmem:[%s299 + $0x20] sm:$0xff]
        %v387 = vld [vmem:[%s299 + $0x28] sm:$0xff]
        %v388 = vld [vmem:[%s299 + $0x30] sm:$0xff]
        %v389 = vld [vmem:[%s299 + $0x38] sm:$0xff]
        %v390 = vld [vmem:[%s299 + $0x40] sm:$0xff]
        %v391 = vld [vmem:[%s299 + $0x48] sm:$0xff]
        %v392 = vld [vmem:[%s299 + $0x50] sm:$0xff]
        %v393 = vld [vmem:[%s299 + $0x58] sm:$0xff]
        %v394 = vld [vmem:[%s299 + $0x60] sm:$0xff]
        %v395 = vld [vmem:[%s299 + $0x68] sm:$0xff]
        %v396 = vld [vmem:[%s299 + $0x70] sm:$0xff]
        %v397 = vld [vmem:[%s299 + $0x78] sm:$0xff]
        %v398 = vld [vmem:[%s299 + $0x80] sm:$0xff]
        %v399 = vld [vmem:[%s299 + $0x88] sm:$0xff]
        %v400 = vld [vmem:[%s299 + $0x90] sm:$0xff]
        %v401 = vld [vmem:[%s299 + $0x98] sm:$0xff]
        %v402 = vld [vmem:[%s299 + $0xa0] sm:$0xff]
        %v403 = vld [vmem:[%s299 + $0xa8] sm:$0xff]
        %v404 = vld [vmem:[%s299 + $0xb0] sm:$0xff]
        %v405 = vld [vmem:[%s299 + $0xb8] sm:$0xff]
        %v406 = vld [vmem:[%s299 + $0xc0] sm:$0xff]
        %v407 = vld [vmem:[%s299 + $0xc8] sm:$0xff]
        %v408 = vld [vmem:[%s299 + $0xd0] sm:$0xff]
        %v409 = vld [vmem:[%s299 + $0xd8] sm:$0xff]
        %v410 = vld [vmem:[%s299 + $0xe0] sm:$0xff]
        %v411 = vld [vmem:[%s299 + $0xe8] sm:$0xff]
        %v412 = vld [vmem:[%s299 + $0xf0] sm:$0xff]
        %v413 = vld [vmem:[%s299 + $0xf8] sm:$0xff]
        %v414 = vld [vmem:[%s299 + $0x100] sm:$0xff]
        %v415 = vld [vmem:[%s299 + $0x108] sm:$0xff]
        %v416 = vld [vmem:[%s299 + $0x110] sm:$0xff]
        %v417 = vld [vmem:[%s299 + $0x118] sm:$0xff]
        %v418 = vld [vmem:[%s299 + $0x120] sm:$0xff]
        %v419 = vld [vmem:[%s299 + $0x128] sm:$0xff]
        %v420 = vld [vmem:[%s299 + $0x130] sm:$0xff]
        %v421 = vld [vmem:[%s299 + $0x138] sm:$0xff]
        %v422 = vld [vmem:[%s299 + $0x140] sm:$0xff]
        %v423 = vld [vmem:[%s299 + $0x148] sm:$0xff]
        %v424 = vld [vmem:[%s299 + $0x150] sm:$0xff]
        %v425 = vld [vmem:[%s299 + $0x158] sm:$0xff]
        %v426 = vld [vmem:[%s299 + $0x160] sm:$0xff]
        %v427 = vld [vmem:[%s299 + $0x168] sm:$0xff]
        %v428 = vld [vmem:[%s299 + $0x170] sm:$0xff]
        %v429 = vld [vmem:[%s299 + $0x178] sm:$0xff]
        %v430 = vld [vmem:[%s299 + $0x180] sm:$0xff]
        %v431 = vld [vmem:[%s299 + $0x188] sm:$0xff]
        %v432 = vld [vmem:[%s299 + $0x190] sm:$0xff]
        %v433 = vld [vmem:[%s299 + $0x198] sm:$0xff]
        %v434 = vld [vmem:[%s299 + $0x1a0] sm:$0xff]
        %v435 = vld [vmem:[%s299 + $0x1a8] sm:$0xff]
        %v436 = vld [vmem:[%s299 + $0x1b0] sm:$0xff]
        %v437 = vld [vmem:[%s299 + $0x1b8] sm:$0xff]
        %v438 = vld [vmem:[%s299 + $0x1c0] sm:$0xff]
        %v439 = vld [vmem:[%s299 + $0x1c8] sm:$0xff]
        %v440 = vld [vmem:[%s299 + $0x1d0] sm:$0xff]
        %v441 = vld [vmem:[%s299 + $0x1d8] sm:$0xff]
        %v442 = vld [vmem:[%s299 + $0x1e0] sm:$0xff]
        %v443 = vld [vmem:[%s299 + $0x1e8] sm:$0xff]
        %v444 = vld [vmem:[%s299 + $0x1f0] sm:$0xff]
        %v445 = vld [vmem:[%s299 + $0x1f8] sm:$0xff]
        %v446 = vld [vmem:[%s353] sm:$0xf]
        %v448 = vlaneseq
        %v449 = vshrl.u32 %v448, 7
        %v450 = vsub.s32 0, %v449
        %v451 = vrot.slane %v446, %v450
        %v452 = vlaneseq
        %v453 = vshrl.u32 %v452, 7
        %v454 = vsub.s32 1, %v453
        %v455 = vrot.slane %v446, %v454
        %v456 = vlaneseq
        %v457 = vshrl.u32 %v456, 7
        %v458 = vsub.s32 2, %v457
        %v459 = vrot.slane %v446, %v458
        %v460 = vlaneseq
        %v461 = vshrl.u32 %v460, 7
        %v462 = vsub.s32 3, %v461
        %v463 = vrot.slane %v446, %v462
        %468 = vmatprep.subr.mxu0 %v383
        %469 = vmatpush1.msra.mxu0 %v382
        %470 = vmatprep.subr.mxu0 %v387
        %471 = vmatpush1.msra.mxu0 %v386
        %472 = vmatprep.subr.mxu0 %v391
        %473 = vmatpush1.msra.mxu0 %v390
        %474 = vmatprep.subr.mxu0 %v395
        %475 = vmatpush1.msra.mxu0 %v394
        %476 = vmatprep.subr.mxu0 %v399
        %477 = vmatpush1.msra.mxu0 %v398
        %478 = vmatprep.subr.mxu0 %v403
        %479 = vmatpush1.msra.mxu0 %v402
        %480 = vmatprep.subr.mxu0 %v407
        %481 = vmatpush1.msra.mxu0 %v406
        %482 = vmatprep.subr.mxu0 %v411
        %483 = vmatpush1.msra.mxu0 %v410
        %484 = vmatprep.subr.mxu0 %v415
        %485 = vmatpush1.msra.mxu0 %v414
        %486 = vmatprep.subr.mxu0 %v419
        %487 = vmatpush1.msra.mxu0 %v418
        %488 = vmatprep.subr.mxu0 %v423
        %489 = vmatpush1.msra.mxu0 %v422
        %490 = vmatprep.subr.mxu0 %v427
        %491 = vmatpush1.msra.mxu0 %v426
        %492 = vmatprep.subr.mxu0 %v431
        %493 = vmatpush1.msra.mxu0 %v430
        %494 = vmatprep.subr.mxu0 %v435
        %495 = vmatpush1.msra.mxu0 %v434
        %496 = vmatprep.subr.mxu0 %v439
        %497 = vmatpush1.msra.mxu0 %v438
        %498 = vmatprep.subr.mxu0 %v443
        %499 = vmatpush1.msra.mxu0 %v442
        %500 = vmatprep.subr.mxu0 0.0
        %501 = vmatpush1.msra.mxu0 0.0
        %502 = vmatprep.subr.mxu0 0.0
        %503 = vmatpush1.msra.mxu0 0.0
        %504 = vmatprep.subr.mxu0 0.0
        %505 = vmatpush1.msra.mxu0 0.0
        %506 = vmatprep.subr.mxu0 0.0
        %507 = vmatpush1.msra.mxu0 0.0
        %508 = vmatprep.subr.mxu0 0.0
        %509 = vmatpush1.msra.mxu0 0.0
        %510 = vmatprep.subr.mxu0 0.0
        %511 = vmatpush1.msra.mxu0 0.0
        %512 = vmatprep.subr.mxu0 0.0
        %513 = vmatpush1.msra.mxu0 0.0
        %514 = vmatprep.subr.mxu0 0.0
        %515 = vmatpush1.msra.mxu0 0.0
        %516 = vmatprep.subr.mxu0 0.0
        %517 = vmatpush1.msra.mxu0 0.0
        %518 = vmatprep.subr.mxu0 0.0
        %519 = vmatpush1.msra.mxu0 0.0
        %520 = vmatprep.subr.mxu0 0.0
        %521 = vmatpush1.msra.mxu0 0.0
        %522 = vmatprep.subr.mxu0 0.0
        %523 = vmatpush1.msra.mxu0 0.0
        %524 = vmatprep.subr.mxu0 0.0
        %525 = vmatpush1.msra.mxu0 0.0
        %526 = vmatprep.subr.mxu0 0.0
        %527 = vmatpush1.msra.mxu0 0.0
        %528 = vmatprep.subr.mxu0 0.0
        %529 = vmatpush1.msra.mxu0 0.0
        %530 = vmatprep.subr.mxu0 0.0
        %531 = vmatpush1.msra.mxu0 0.0
        %532 = vmatprep.mubr.f32.mxu0 0.0
        %533 = vmatmul.mubr.f32.gmra.mrb[0].mxu0 %v374
        %v534 = vpop.f32.mrb[0].mxu0
        %v535 = vadd.f32 %v451, %v534
        %v536 = vpop.f32.mrb[0].mxu0
        %v537 = vadd.f32 %v455, %v536
        %538 = vmatprep.mubr.f32.mxu0 0.0
        %539 = vmatmul.mubr.f32.gmra.mrb[0].mxu0 %v375
        %v540 = vpop.f32.mrb[0].mxu0
        %v541 = vadd.f32 %v451, %v540
        %v542 = vpop.f32.mrb[0].mxu0
        %v543 = vadd.f32 %v455, %v542
        %544 = vmatprep.mubr.f32.mxu0 0.0
        %545 = vmatmul.mubr.f32.gmra.mrb[0].mxu0 %v376
        %v546 = vpop.f32.mrb[0].mxu0
        %v547 = vadd.f32 %v451, %v546
        %v548 = vpop.f32.mrb[0].mxu0
        %v549 = vadd.f32 %v455, %v548
        %550 = vmatprep.mubr.f32.mxu0 0.0
        %551 = vmatmul.mubr.f32.gmra.mrb[0].mxu0 %v377
        %v552 = vpop.f32.mrb[0].mxu0
        %v553 = vadd.f32 %v451, %v552
        %v554 = vpop.f32.mrb[0].mxu0
        %v555 = vadd.f32 %v455, %v554
        %556 = vmatprep.mubr.f32.mxu0 0.0
        %557 = vmatmul.mubr.f32.gmra.mrb[0].mxu0 %v378
        %v558 = vpop.f32.mrb[0].mxu0
        %v559 = vadd.f32 %v451, %v558
        %v560 = vpop.f32.mrb[0].mxu0
        %v561 = vadd.f32 %v455, %v560
        %562 = vmatprep.mubr.f32.mxu0 0.0
        %563 = vmatmul.mubr.f32.gmra.mrb[0].mxu0 %v379
        %v564 = vpop.f32.mrb[0].mxu0
        %v565 = vadd.f32 %v451, %v564
        %v566 = vpop.f32.mrb[0].mxu0
        %v567 = vadd.f32 %v455, %v566
        %568 = vmatprep.mubr.f32.mxu0 0.0
        %569 = vmatmul.mubr.f32.gmra.mrb[0].mxu0 %v380
        %v570 = vpop.f32.mrb[0].mxu0
        %v571 = vadd.f32 %v451, %v570
        %v572 = vpop.f32.mrb[0].mxu0
        %v573 = vadd.f32 %v455, %v572
        %574 = vmatprep.mubr.f32.mxu0 0.0
        %575 = vmatmul.mubr.f32.gmra.mrb[0].mxu0 %v381
        %v576 = vpop.f32.mrb[0].mxu0
        %v577 = vadd.f32 %v451, %v576
        %v578 = vpop.f32.mrb[0].mxu0
        %v579 = vadd.f32 %v455, %v578
        %580 = vdwg.mxu0
        %581 = vmatprep.subr.mxu0 %v385
        %582 = vmatpush1.msra.mxu0 %v384
        %583 = vmatprep.subr.mxu0 %v389
        %584 = vmatpush1.msra.mxu0 %v388
        %585 = vmatprep.subr.mxu0 %v393
        %586 = vmatpush1.msra.mxu0 %v392
        %587 = vmatprep.subr.mxu0 %v397
        %588 = vmatpush1.msra.mxu0 %v396
        %589 = vmatprep.subr.mxu0 %v401
        %590 = vmatpush1.msra.mxu0 %v400
        %591 = vmatprep.subr.mxu0 %v405
        %592 = vmatpush1.msra.mxu0 %v404
        %593 = vmatprep.subr.mxu0 %v409
        %594 = vmatpush1.msra.mxu0 %v408
        %595 = vmatprep.subr.mxu0 %v413
        %596 = vmatpush1.msra.mxu0 %v412
        %597 = vmatprep.subr.mxu0 %v417
        %598 = vmatpush1.msra.mxu0 %v416
        %599 = vmatprep.subr.mxu0 %v421
        %600 = vmatpush1.msra.mxu0 %v420
        %601 = vmatprep.subr.mxu0 %v425
        %602 = vmatpush1.msra.mxu0 %v424
        %603 = vmatprep.subr.mxu0 %v429
        %604 = vmatpush1.msra.mxu0 %v428
        %605 = vmatprep.subr.mxu0 %v433
        %606 = vmatpush1.msra.mxu0 %v432
        %607 = vmatprep.subr.mxu0 %v437
        %608 = vmatpush1.msra.mxu0 %v436
        %609 = vmatprep.subr.mxu0 %v441
        %610 = vmatpush1.msra.mxu0 %v440
        %611 = vmatprep.subr.mxu0 %v445
        %612 = vmatpush1.msra.mxu0 %v444
        %613 = vmatprep.subr.mxu0 0.0
        %614 = vmatpush1.msra.mxu0 0.0
        %615 = vmatprep.subr.mxu0 0.0
        %616 = vmatpush1.msra.mxu0 0.0
        %617 = vmatprep.subr.mxu0 0.0
        %618 = vmatpush1.msra.mxu0 0.0
        %619 = vmatprep.subr.mxu0 0.0
        %620 = vmatpush1.msra.mxu0 0.0
        %621 = vmatprep.subr.mxu0 0.0
        %622 = vmatpush1.msra.mxu0 0.0
        %623 = vmatprep.subr.mxu0 0.0
        %624 = vmatpush1.msra.mxu0 0.0
        %625 = vmatprep.subr.mxu0 0.0
        %626 = vmatpush1.msra.mxu0 0.0
        %627 = vmatprep.subr.mxu0 0.0
        %628 = vmatpush1.msra.mxu0 0.0
        %629 = vmatprep.subr.mxu0 0.0
        %630 = vmatpush1.msra.mxu0 0.0
        %631 = vmatprep.subr.mxu0 0.0
        %632 = vmatpush1.msra.mxu0 0.0
        %633 = vmatprep.subr.mxu0 0.0
        %634 = vmatpush1.msra.mxu0 0.0
        %635 = vmatprep.subr.mxu0 0.0
        %636 = vmatpush1.msra.mxu0 0.0
        %637 = vmatprep.subr.mxu0 0.0
        %638 = vmatpush1.msra.mxu0 0.0
        %639 = vmatprep.subr.mxu0 0.0
        %640 = vmatpush1.msra.mxu0 0.0
        %641 = vmatprep.subr.mxu0 0.0
        %642 = vmatpush1.msra.mxu0 0.0
        %643 = vmatprep.subr.mxu0 0.0
        %644 = vmatpush1.msra.mxu0 0.0
        %645 = vmatprep.mubr.f32.mxu0 0.0
        %646 = vmatmul.mubr.f32.gmra.mrb[0].mxu0 %v374
        %v647 = vpop.f32.mrb[0].mxu0
        %v648 = vadd.f32 %v459, %v647
        %v649 = vpop.f32.mrb[0].mxu0
        %v650 = vadd.f32 %v463, %v649
        %651 = vmatprep.mubr.f32.mxu0 0.0
        %652 = vmatmul.mubr.f32.gmra.mrb[0].mxu0 %v375
        %v653 = vpop.f32.mrb[0].mxu0
        %v654 = vadd.f32 %v459, %v653
        %v655 = vpop.f32.mrb[0].mxu0
        %v656 = vadd.f32 %v463, %v655
        %657 = vmatprep.mubr.f32.mxu0 0.0
        %658 = vmatmul.mubr.f32.gmra.mrb[0].mxu0 %v376
        %v659 = vpop.f32.mrb[0].mxu0
        %v660 = vadd.f32 %v459, %v659
        %v661 = vpop.f32.mrb[0].mxu0
        %v662 = vadd.f32 %v463, %v661
        %663 = vmatprep.mubr.f32.mxu0 0.0
        %664 = vmatmul.mubr.f32.gmra.mrb[0].mxu0 %v377
        %v665 = vpop.f32.mrb[0].mxu0
        %v666 = vadd.f32 %v459, %v665
        %v667 = vpop.f32.mrb[0].mxu0
        %v668 = vadd.f32 %v463, %v667
        %669 = vmatprep.mubr.f32.mxu0 0.0
        %670 = vmatmul.mubr.f32.gmra.mrb[0].mxu0 %v378
        %v671 = vpop.f32.mrb[0].mxu0
        %v672 = vadd.f32 %v459, %v671
        %v673 = vpop.f32.mrb[0].mxu0
        %v674 = vadd.f32 %v463, %v673
        %675 = vmatprep.mubr.f32.mxu0 0.0
        %676 = vmatmul.mubr.f32.gmra.mrb[0].mxu0 %v379
        %v677 = vpop.f32.mrb[0].mxu0
        %v678 = vadd.f32 %v459, %v677
        %v679 = vpop.f32.mrb[0].mxu0
        %v680 = vadd.f32 %v463, %v679
        %681 = vmatprep.mubr.f32.mxu0 0.0
        %682 = vmatmul.mubr.f32.gmra.mrb[0].mxu0 %v380
        %v683 = vpop.f32.mrb[0].mxu0
        %v684 = vadd.f32 %v459, %v683
        %v685 = vpop.f32.mrb[0].mxu0
        %v686 = vadd.f32 %v463, %v685
        %687 = vmatprep.mubr.f32.mxu0 0.0
        %688 = vmatmul.mubr.f32.gmra.mrb[0].mxu0 %v381
        %v689 = vpop.f32.mrb[0].mxu0
        %v690 = vadd.f32 %v459, %v689
        %v691 = vpop.f32.mrb[0].mxu0
        %v692 = vadd.f32 %v463, %v691
        %693 = vdwg.mxu0
        %694 = vst [vmem:[#allocation3] sm:$0xff] %v535
        %695 = vst [vmem:[#allocation3 + $0x8] sm:$0xff] %v537
        %696 = vst [vmem:[#allocation3 + $0x10] sm:$0xff] %v648
        %697 = vst [vmem:[#allocation3 + $0x18] sm:$0xff] %v650
        %698 = vst [vmem:[#allocation3 + $0x20] sm:$0xff] %v541
        %699 = vst [vmem:[#allocation3 + $0x28] sm:$0xff] %v543
        %700 = vst [vmem:[#allocation3 + $0x30] sm:$0xff] %v654
        %701 = vst [vmem:[#allocation3 + $0x38] sm:$0xff] %v656
        %702 = vst [vmem:[#allocation3 + $0x40] sm:$0xff] %v547
        %703 = vst [vmem:[#allocation3 + $0x48] sm:$0xff] %v549
        %704 = vst [vmem:[#allocation3 + $0x50] sm:$0xff] %v660
        %705 = vst [vmem:[#allocation3 + $0x58] sm:$0xff] %v662
        %706 = vst [vmem:[#allocation3 + $0x60] sm:$0xff] %v553
        %707 = vst [vmem:[#allocation3 + $0x68] sm:$0xff] %v555
        %708 = vst [vmem:[#allocation3 + $0x70] sm:$0xff] %v666
        %709 = vst [vmem:[#allocation3 + $0x78] sm:$0xff] %v668
        %710 = vst [vmem:[#allocation3 + $0x80] sm:$0xff] %v559
        %711 = vst [vmem:[#allocation3 + $0x88] sm:$0xff] %v561
        %712 = vst [vmem:[#allocation3 + $0x90] sm:$0xff] %v672
        %713 = vst [vmem:[#allocation3 + $0x98] sm:$0xff] %v674
        %714 = vst [vmem:[#allocation3 + $0xa0] sm:$0xff] %v565
        %715 = vst [vmem:[#allocation3 + $0xa8] sm:$0xff] %v567
        %716 = vst [vmem:[#allocation3 + $0xb0] sm:$0xff] %v678
        %717 = vst [vmem:[#allocation3 + $0xb8] sm:$0xff] %v680
        %718 = vst [vmem:[#allocation3 + $0xc0] sm:$0xff] %v571
        %719 = vst [vmem:[#allocation3 + $0xc8] sm:$0xff] %v573
        %720 = vst [vmem:[#allocation3 + $0xd0] sm:$0xff] %v684
        %721 = vst [vmem:[#allocation3 + $0xd8] sm:$0xff] %v686
        %722 = vst [vmem:[#allocation3 + $0xe0] sm:$0xff] %v577
        %723 = vst [vmem:[#allocation3 + $0xe8] sm:$0xff] %v579
        %724 = vst [vmem:[#allocation3 + $0xf0] sm:$0xff] %v690
        %725 = vst [vmem:[#allocation3 + $0xf8] sm:$0xff] %v692
        %726 = vst [vmem:[#allocation4] sm:$0xff] 0.0
        %727 = vst [vmem:[#allocation5] sm:$0xff] 0.0
        %v728 = vld [vmem:[%s308] sm:$0xff]
        %v729 = vld [vmem:[%s308 + $0x8] sm:$0xff]
        %v730 = vld [vmem:[%s308 + $0x10] sm:$0xff]
        %v731 = vld [vmem:[%s308 + $0x18] sm:$0xff]
        %v732 = vld [vmem:[%s308 + $0x20] sm:$0xff]
        %v733 = vld [vmem:[%s308 + $0x28] sm:$0xff]
        %v734 = vld [vmem:[%s308 + $0x30] sm:$0xff]
        %v735 = vld [vmem:[%s308 + $0x38] sm:$0xff]
        %v736 = vld [vmem:[%s308 + $0x40] sm:$0xff]
        %v737 = vld [vmem:[%s308 + $0x48] sm:$0xff]
        %v738 = vld [vmem:[%s308 + $0x50] sm:$0xff]
        %v739 = vld [vmem:[%s308 + $0x58] sm:$0xff]
        %v740 = vld [vmem:[%s308 + $0x60] sm:$0xff]
        %v741 = vld [vmem:[%s308 + $0x68] sm:$0xff]
        %v742 = vld [vmem:[%s308 + $0x70] sm:$0xff]
        %v743 = vld [vmem:[%s308 + $0x78] sm:$0xff]
        %v744 = vld [vmem:[%s308 + $0x80] sm:$0xff]
        %v745 = vld [vmem:[%s308 + $0x88] sm:$0xff]
        %v746 = vld [vmem:[%s308 + $0x90] sm:$0xff]
        %v747 = vld [vmem:[%s308 + $0x98] sm:$0xff]
        %v748 = vld [vmem:[%s308 + $0xa0] sm:$0xff]
        %v749 = vld [vmem:[%s308 + $0xa8] sm:$0xff]
        %v750 = vld [vmem:[%s308 + $0xb0] sm:$0xff]
        %v751 = vld [vmem:[%s308 + $0xb8] sm:$0xff]
        %v752 = vld [vmem:[%s308 + $0xc0] sm:$0xff]
        %v753 = vld [vmem:[%s308 + $0xc8] sm:$0xff]
        %v754 = vld [vmem:[%s308 + $0xd0] sm:$0xff]
        %v755 = vld [vmem:[%s308 + $0xd8] sm:$0xff]
        %v756 = vld [vmem:[%s308 + $0xe0] sm:$0xff]
        %v757 = vld [vmem:[%s308 + $0xe8] sm:$0xff]
        %v758 = vld [vmem:[%s308 + $0xf0] sm:$0xff]
        %v759 = vld [vmem:[%s308 + $0xf8] sm:$0xff]
        %v760 = vld [vmem:[%s308 + $0x100] sm:$0xff]
        %v761 = vld [vmem:[%s308 + $0x108] sm:$0xff]
        %v762 = vld [vmem:[%s308 + $0x110] sm:$0xff]
        %v763 = vld [vmem:[%s308 + $0x118] sm:$0xff]
        %v764 = vld [vmem:[%s308 + $0x120] sm:$0xff]
        %v765 = vld [vmem:[%s308 + $0x128] sm:$0xff]
        %v766 = vld [vmem:[%s308 + $0x130] sm:$0xff]
        %v767 = vld [vmem:[%s308 + $0x138] sm:$0xff]
        %v768 = vld [vmem:[%s308 + $0x140] sm:$0xff]
        %v769 = vld [vmem:[%s308 + $0x148] sm:$0xff]
        %v770 = vld [vmem:[%s308 + $0x150] sm:$0xff]
        %v771 = vld [vmem:[%s308 + $0x158] sm:$0xff]
        %v772 = vld [vmem:[%s308 + $0x160] sm:$0xff]
        %v773 = vld [vmem:[%s308 + $0x168] sm:$0xff]
        %v774 = vld [vmem:[%s308 + $0x170] sm:$0xff]
        %v775 = vld [vmem:[%s308 + $0x178] sm:$0xff]
        %v776 = vld [vmem:[%s308 + $0x180] sm:$0xff]
        %v777 = vld [vmem:[%s308 + $0x188] sm:$0xff]
        %v778 = vld [vmem:[%s308 + $0x190] sm:$0xff]
        %v779 = vld [vmem:[%s308 + $0x198] sm:$0xff]
        %v780 = vld [vmem:[%s308 + $0x1a0] sm:$0xff]
        %v781 = vld [vmem:[%s308 + $0x1a8] sm:$0xff]
        %v782 = vld [vmem:[%s308 + $0x1b0] sm:$0xff]
        %v783 = vld [vmem:[%s308 + $0x1b8] sm:$0xff]
        %v784 = vld [vmem:[%s308 + $0x1c0] sm:$0xff]
        %v785 = vld [vmem:[%s308 + $0x1c8] sm:$0xff]
        %v786 = vld [vmem:[%s308 + $0x1d0] sm:$0xff]
        %v787 = vld [vmem:[%s308 + $0x1d8] sm:$0xff]
        %v788 = vld [vmem:[%s308 + $0x1e0] sm:$0xff]
        %v789 = vld [vmem:[%s308 + $0x1e8] sm:$0xff]
        %v790 = vld [vmem:[%s308 + $0x1f0] sm:$0xff]
        %v791 = vld [vmem:[%s308 + $0x1f8] sm:$0xff]
        %v792 = vld [vmem:[#allocation3] sm:$0xff]
        %v793 = vld [vmem:[#allocation3 + $0x8] sm:$0xff]
        %v794 = vld [vmem:[#allocation3 + $0x10] sm:$0xff]
        %v795 = vld [vmem:[#allocation3 + $0x18] sm:$0xff]
        %v796 = vld [vmem:[#allocation4] sm:$0xff]
        %797 = vmatprep.subr.mxu0 %v729
        %798 = vmatpush1.msra.mxu0 %v728
        %799 = vmatprep.subr.mxu0 %v733
        %800 = vmatpush1.msra.mxu0 %v732
        %801 = vmatprep.subr.mxu0 %v737
        %802 = vmatpush1.msra.mxu0 %v736
        %803 = vmatprep.subr.mxu0 %v741
        %804 = vmatpush1.msra.mxu0 %v740
        %805 = vmatprep.subr.mxu0 %v745
        %806 = vmatpush1.msra.mxu0 %v744
        %807 = vmatprep.subr.mxu0 %v749
        %808 = vmatpush1.msra.mxu0 %v748
        %809 = vmatprep.subr.mxu0 %v753
        %810 = vmatpush1.msra.mxu0 %v752
        %811 = vmatprep.subr.mxu0 %v757
        %812 = vmatpush1.msra.mxu0 %v756
        %813 = vmatprep.subr.mxu0 %v761
        %814 = vmatpush1.msra.mxu0 %v760
        %815 = vmatprep.subr.mxu0 %v765
        %816 = vmatpush1.msra.mxu0 %v764
        %817 = vmatprep.subr.mxu0 %v769
        %818 = vmatpush1.msra.mxu0 %v768
        %819 = vmatprep.subr.mxu0 %v773
        %820 = vmatpush1.msra.mxu0 %v772
        %821 = vmatprep.subr.mxu0 %v777
        %822 = vmatpush1.msra.mxu0 %v776
        %823 = vmatprep.subr.mxu0 %v781
        %824 = vmatpush1.msra.mxu0 %v780
        %825 = vmatprep.subr.mxu0 %v785
        %826 = vmatpush1.msra.mxu0 %v784
        %827 = vmatprep.subr.mxu0 %v789
        %828 = vmatpush1.msra.mxu0 %v788
        %829 = vmatprep.subr.mxu0 0.0
        %830 = vmatpush1.msra.mxu0 0.0
        %831 = vmatprep.subr.mxu0 0.0
        %832 = vmatpush1.msra.mxu0 0.0
        %833 = vmatprep.subr.mxu0 0.0
        %834 = vmatpush1.msra.mxu0 0.0
        %835 = vmatprep.subr.mxu0 0.0
        %836 = vmatpush1.msra.mxu0 0.0
        %837 = vmatprep.subr.mxu0 0.0
        %838 = vmatpush1.msra.mxu0 0.0
        %839 = vmatprep.subr.mxu0 0.0
        %840 = vmatpush1.msra.mxu0 0.0
        %841 = vmatprep.subr.mxu0 0.0
        %842 = vmatpush1.msra.mxu0 0.0
        %843 = vmatprep.subr.mxu0 0.0
        %844 = vmatpush1.msra.mxu0 0.0
        %845 = vmatprep.subr.mxu0 0.0
        %846 = vmatpush1.msra.mxu0 0.0
        %847 = vmatprep.subr.mxu0 0.0
        %848 = vmatpush1.msra.mxu0 0.0
        %849 = vmatprep.subr.mxu0 0.0
        %850 = vmatpush1.msra.mxu0 0.0
        %851 = vmatprep.subr.mxu0 0.0
        %852 = vmatpush1.msra.mxu0 0.0
        %853 = vmatprep.subr.mxu0 0.0
        %854 = vmatpush1.msra.mxu0 0.0
        %855 = vmatprep.subr.mxu0 0.0
        %856 = vmatpush1.msra.mxu0 0.0
        %857 = vmatprep.subr.mxu0 0.0
        %858 = vmatpush1.msra.mxu0 0.0
        %859 = vmatprep.subr.mxu0 0.0
        %860 = vmatpush1.msra.mxu0 0.0
        %861 = vmatprep.mubr.f32.mxu0 0.0
        %862 = vmatmul.mubr.f32.gmra.mrb[0].mxu0 %v796
        %v863 = vpop.f32.mrb[0].mxu0
        %v864 = vadd.f32 0.0, %v863
        %v865 = vpop.f32.mrb[0].mxu0
        %v866 = vadd.f32 0.0, %v865
        %867 = vdwg.mxu0
        %868 = vmatprep.subr.mxu0 %v731
        %869 = vmatpush1.msra.mxu0 %v730
        %870 = vmatprep.subr.mxu0 %v735
        %871 = vmatpush1.msra.mxu0 %v734
        %872 = vmatprep.subr.mxu0 %v739
        %873 = vmatpush1.msra.mxu0 %v738
        %874 = vmatprep.subr.mxu0 %v743
        %875 = vmatpush1.msra.mxu0 %v742
        %876 = vmatprep.subr.mxu0 %v747
        %877 = vmatpush1.msra.mxu0 %v746
        %878 = vmatprep.subr.mxu0 %v751
        %879 = vmatpush1.msra.mxu0 %v750
        %880 = vmatprep.subr.mxu0 %v755
        %881 = vmatpush1.msra.mxu0 %v754
        %882 = vmatprep.subr.mxu0 %v759
        %883 = vmatpush1.msra.mxu0 %v758
        %884 = vmatprep.subr.mxu0 %v763
        %885 = vmatpush1.msra.mxu0 %v762
        %886 = vmatprep.subr.mxu0 %v767
        %887 = vmatpush1.msra.mxu0 %v766
        %888 = vmatprep.subr.mxu0 %v771
        %889 = vmatpush1.msra.mxu0 %v770
        %890 = vmatprep.subr.mxu0 %v775
        %891 = vmatpush1.msra.mxu0 %v774
        %892 = vmatprep.subr.mxu0 %v779
        %893 = vmatpush1.msra.mxu0 %v778
        %894 = vmatprep.subr.mxu0 %v783
        %895 = vmatpush1.msra.mxu0 %v782
        %896 = vmatprep.subr.mxu0 %v787
        %897 = vmatpush1.msra.mxu0 %v786
        %898 = vmatprep.subr.mxu0 %v791
        %899 = vmatpush1.msra.mxu0 %v790
        %900 = vmatprep.subr.mxu0 0.0
        %901 = vmatpush1.msra.mxu0 0.0
        %902 = vmatprep.subr.mxu0 0.0
        %903 = vmatpush1.msra.mxu0 0.0
        %904 = vmatprep.subr.mxu0 0.0
        %905 = vmatpush1.msra.mxu0 0.0
        %906 = vmatprep.subr.mxu0 0.0
        %907 = vmatpush1.msra.mxu0 0.0
        %908 = vmatprep.subr.mxu0 0.0
        %909 = vmatpush1.msra.mxu0 0.0
        %910 = vmatprep.subr.mxu0 0.0
        %911 = vmatpush1.msra.mxu0 0.0
        %912 = vmatprep.subr.mxu0 0.0
        %913 = vmatpush1.msra.mxu0 0.0
        %914 = vmatprep.subr.mxu0 0.0
        %915 = vmatpush1.msra.mxu0 0.0
        %916 = vmatprep.subr.mxu0 0.0
        %917 = vmatpush1.msra.mxu0 0.0
        %918 = vmatprep.subr.mxu0 0.0
        %919 = vmatpush1.msra.mxu0 0.0
        %920 = vmatprep.subr.mxu0 0.0
        %921 = vmatpush1.msra.mxu0 0.0
        %922 = vmatprep.subr.mxu0 0.0
        %923 = vmatpush1.msra.mxu0 0.0
        %924 = vmatprep.subr.mxu0 0.0
        %925 = vmatpush1.msra.mxu0 0.0
        %926 = vmatprep.subr.mxu0 0.0
        %927 = vmatpush1.msra.mxu0 0.0
        %928 = vmatprep.subr.mxu0 0.0
        %929 = vmatpush1.msra.mxu0 0.0
        %930 = vmatprep.subr.mxu0 0.0
        %931 = vmatpush1.msra.mxu0 0.0
        %932 = vmatprep.mubr.f32.mxu0 0.0
        %933 = vmatmul.mubr.f32.gmra.mrb[0].mxu0 %v796
        %v934 = vpop.f32.mrb[0].mxu0
        %v935 = vadd.f32 0.0, %v934
        %v936 = vpop.f32.mrb[0].mxu0
        %v937 = vadd.f32 0.0, %v936
        %938 = vdwg.mxu0
        %v939 = vadd.f32 %v792, %v864
        %v940 = vadd.f32 %v793, %v866
        %v941 = vadd.f32 %v794, %v935
        %v942 = vadd.f32 %v795, %v937
        %v943 = vxor.u32 %v939, 2147483648
        %v944 = vmul.f32 %v943, 1.442695
        %v945 = vpow.pop %v944
        %v946 = vadd.f32 %v945, 1.0
        %v947 = vrcp.pop %v946
        %v948 = vmul.f32 1.0, %v947
        %v949 = vxor.u32 %v940, 2147483648
        %v950 = vmul.f32 %v949, 1.442695
        %v951 = vpow.pop %v950
        %v952 = vadd.f32 %v951, 1.0
        %v953 = vrcp.pop %v952
        %v954 = vmul.f32 1.0, %v953
        %v955 = vtanh.pop %v941
        %v956 = vxor.u32 %v942, 2147483648
        %v957 = vmul.f32 %v956, 1.442695
        %v958 = vpow.pop %v957
        %v959 = vadd.f32 %v958, 1.0
        %v960 = vrcp.pop %v959
        %v961 = vmul.f32 1.0, %v960
        %v962 = vld [vmem:[#allocation5] sm:$0xff]
        %v963 = vmul.f32 %v954, %v962
        %v964 = vmul.f32 %v948, %v955
        %v965 = vadd.f32 %v963, %v964
        %v966 = vtanh.pop %v965
        %v967 = vmul.f32 %v961, %v966
        %968 = vst [vmem:[#allocation5] sm:$0xff] %v965
        %969 = vst [vmem:[#allocation4] sm:$0xff] %v967
        %970 = vst [vmem:[#allocation2] sm:$0xff] %v967
        %s971 = scalar_lea.vmem [#allocation3], 32
        %v972 = vld [vmem:[%s971] sm:$0xff]
        %v973 = vld [vmem:[%s971 + $0x8] sm:$0xff]
        %v974 = vld [vmem:[%s971 + $0x10] sm:$0xff]
        %v975 = vld [vmem:[%s971 + $0x18] sm:$0xff]
        %v976 = vld [vmem:[#allocation4] sm:$0xff]
        %977 = vmatprep.subr.mxu0 %v729
        %978 = vmatpush1.msra.mxu0 %v728
        %979 = vmatprep.subr.mxu0 %v733
        %980 = vmatpush1.msra.mxu0 %v732
        %981 = vmatprep.subr.mxu0 %v737
        %982 = vmatpush1.msra.mxu0 %v736
        %983 = vmatprep.subr.mxu0 %v741
        %984 = vmatpush1.msra.mxu0 %v740
        %985 = vmatprep.subr.mxu0 %v745
        %986 = vmatpush1.msra.mxu0 %v744
        %987 = vmatprep.subr.mxu0 %v749
        %988 = vmatpush1.msra.mxu0 %v748
        %989 = vmatprep.subr.mxu0 %v753
        %990 = vmatpush1.msra.mxu0 %v752
        %991 = vmatprep.subr.mxu0 %v757
        %992 = vmatpush1.msra.mxu0 %v756
        %993 = vmatprep.subr.mxu0 %v761
        %994 = vmatpush1.msra.mxu0 %v760
        %995 = vmatprep.subr.mxu0 %v765
        %996 = vmatpush1.msra.mxu0 %v764
        %997 = vmatprep.subr.mxu0 %v769
        %998 = vmatpush1.msra.mxu0 %v768
        %999 = vmatprep.subr.mxu0 %v773
        %1000 = vmatpush1.msra.mxu0 %v772
        %1001 = vmatprep.subr.mxu0 %v777
        %1002 = vmatpush1.msra.mxu0 %v776
        %1003 = vmatprep.subr.mxu0 %v781
        %1004 = vmatpush1.msra.mxu0 %v780
        %1005 = vmatprep.subr.mxu0 %v785
        %1006 = vmatpush1.msra.mxu0 %v784
        %1007 = vmatprep.subr.mxu0 %v789
        %1008 = vmatpush1.msra.mxu0 %v788
        %1009 = vmatprep.subr.mxu0 0.0
        %1010 = vmatpush1.msra.mxu0 0.0
        %1011 = vmatprep.subr.mxu0 0.0
        %1012 = vmatpush1.msra.mxu0 0.0
        %1013 = vmatprep.subr.mxu0 0.0
        %1014 = vmatpush1.msra.mxu0 0.0
        %1015 = vmatprep.subr.mxu0 0.0
        %1016 = vmatpush1.msra.mxu0 0.0
        %1017 = vmatprep.subr.mxu0 0.0
        %1018 = vmatpush1.msra.mxu0 0.0
        %1019 = vmatprep.subr.mxu0 0.0
        %1020 = vmatpush1.msra.mxu0 0.0
        %1021 = vmatprep.subr.mxu0 0.0
        %1022 = vmatpush1.msra.mxu0 0.0
        %1023 = vmatprep.subr.mxu0 0.0
        %1024 = vmatpush1.msra.mxu0 0.0
        %1025 = vmatprep.subr.mxu0 0.0
        %1026 = vmatpush1.msra.mxu0 0.0
        %1027 = vmatprep.subr.mxu0 0.0
        %1028 = vmatpush1.msra.mxu0 0.0
        %1029 = vmatprep.subr.mxu0 0.0
        %1030 = vmatpush1.msra.mxu0 0.0
        %1031 = vmatprep.subr.mxu0 0.0
        %1032 = vmatpush1.msra.mxu0 0.0
        %1033 = vmatprep.subr.mxu0 0.0
        %1034 = vmatpush1.msra.mxu0 0.0
        %1035 = vmatprep.subr.mxu0 0.0
        %1036 = vmatpush1.msra.mxu0 0.0
        %1037 = vmatprep.subr.mxu0 0.0
        %1038 = vmatpush1.msra.mxu0 0.0
        %1039 = vmatprep.subr.mxu0 0.0
        %1040 = vmatpush1.msra.mxu0 0.0
        %1041 = vmatprep.mubr.f32.mxu0 0.0
        %1042 = vmatmul.mubr.f32.gmra.mrb[0].mxu0 %v976
        %v1043 = vpop.f32.mrb[0].mxu0
        %v1044 = vadd.f32 0.0, %v1043
        %v1045 = vpop.f32.mrb[0].mxu0
        %v1046 = vadd.f32 0.0, %v1045
        %1047 = vdwg.mxu0
        %1048 = vmatprep.subr.mxu0 %v731
        %1049 = vmatpush1.msra.mxu0 %v730
        %1050 = vmatprep.subr.mxu0 %v735
        %1051 = vmatpush1.msra.mxu0 %v734
        %1052 = vmatprep.subr.mxu0 %v739
        %1053 = vmatpush1.msra.mxu0 %v738
        %1054 = vmatprep.subr.mxu0 %v743
        %1055 = vmatpush1.msra.mxu0 %v742
        %1056 = vmatprep.subr.mxu0 %v747
        %1057 = vmatpush1.msra.mxu0 %v746
        %1058 = vmatprep.subr.mxu0 %v751
        %1059 = vmatpush1.msra.mxu0 %v750
        %1060 = vmatprep.subr.mxu0 %v755
        %1061 = vmatpush1.msra.mxu0 %v754
        %1062 = vmatprep.subr.mxu0 %v759
        %1063 = vmatpush1.msra.mxu0 %v758
        %1064 = vmatprep.subr.mxu0 %v763
        %1065 = vmatpush1.msra.mxu0 %v762
        %1066 = vmatprep.subr.mxu0 %v767
        %1067 = vmatpush1.msra.mxu0 %v766
        %1068 = vmatprep.subr.mxu0 %v771
        %1069 = vmatpush1.msra.mxu0 %v770
        %1070 = vmatprep.subr.mxu0 %v775
        %1071 = vmatpush1.msra.mxu0 %v774
        %1072 = vmatprep.subr.mxu0 %v779
        %1073 = vmatpush1.msra.mxu0 %v778
        %1074 = vmatprep.subr.mxu0 %v783
        %1075 = vmatpush1.msra.mxu0 %v782
        %1076 = vmatprep.subr.mxu0 %v787
        %1077 = vmatpush1.msra.mxu0 %v786
        %1078 = vmatprep.subr.mxu0 %v791
        %1079 = vmatpush1.msra.mxu0 %v790
        %1080 = vmatprep.subr.mxu0 0.0
        %1081 = vmatpush1.msra.mxu0 0.0
        %1082 = vmatprep.subr.mxu0 0.0
        %1083 = vmatpush1.msra.mxu0 0.0
        %1084 = vmatprep.subr.mxu0 0.0
        %1085 = vmatpush1.msra.mxu0 0.0
        %1086 = vmatprep.subr.mxu0 0.0
        %1087 = vmatpush1.msra.mxu0 0.0
        %1088 = vmatprep.subr.mxu0 0.0
        %1089 = vmatpush1.msra.mxu0 0.0
        %1090 = vmatprep.subr.mxu0 0.0
        %1091 = vmatpush1.msra.mxu0 0.0
        %1092 = vmatprep.subr.mxu0 0.0
        %1093 = vmatpush1.msra.mxu0 0.0
        %1094 = vmatprep.subr.mxu0 0.0
        %1095 = vmatpush1.msra.mxu0 0.0
        %1096 = vmatprep.subr.mxu0 0.0
        %1097 = vmatpush1.msra.mxu0 0.0
        %1098 = vmatprep.subr.mxu0 0.0
        %1099 = vmatpush1.msra.mxu0 0.0
        %1100 = vmatprep.subr.mxu0 0.0
        %1101 = vmatpush1.msra.mxu0 0.0
        %1102 = vmatprep.subr.mxu0 0.0
        %1103 = vmatpush1.msra.mxu0 0.0
        %1104 = vmatprep.subr.mxu0 0.0
        %1105 = vmatpush1.msra.mxu0 0.0
        %1106 = vmatprep.subr.mxu0 0.0
        %1107 = vmatpush1.msra.mxu0 0.0
        %1108 = vmatprep.subr.mxu0 0.0
        %1109 = vmatpush1.msra.mxu0 0.0
        %1110 = vmatprep.subr.mxu0 0.0
        %1111 = vmatpush1.msra.mxu0 0.0
        %1112 = vmatprep.mubr.f32.mxu0 0.0
        %1113 = vmatmul.mubr.f32.gmra.mrb[0].mxu0 %v976
        %v1114 = vpop.f32.mrb[0].mxu0
        %v1115 = vadd.f32 0.0, %v1114
        %v1116 = vpop.f32.mrb[0].mxu0
        %v1117 = vadd.f32 0.0, %v1116
        %1118 = vdwg.mxu0
        %v1119 = vadd.f32 %v972, %v1044
        %v1120 = vadd.f32 %v973, %v1046
        %v1121 = vadd.f32 %v974, %v1115
        %v1122 = vadd.f32 %v975, %v1117
        %v1123 = vxor.u32 %v1119, 2147483648
        %v1124 = vmul.f32 %v1123, 1.442695
        %v1125 = vpow.pop %v1124
        %v1126 = vadd.f32 %v1125, 1.0
        %v1127 = vrcp.pop %v1126
        %v1128 = vmul.f32 1.0, %v1127
        %v1129 = vxor.u32 %v1120, 2147483648
        %v1130 = vmul.f32 %v1129, 1.442695
        %v1131 = vpow.pop %v1130
        %v1132 = vadd.f32 %v1131, 1.0
        %v1133 = vrcp.pop %v1132
        %v1134 = vmul.f32 1.0, %v1133
        %v1135 = vtanh.pop %v1121
        %v1136 = vxor.u32 %v1122, 2147483648
        %v1137 = vmul.f32 %v1136, 1.442695
        %v1138 = vpow.pop %v1137
        %v1139 = vadd.f32 %v1138, 1.0
        %v1140 = vrcp.pop %v1139
        %v1141 = vmul.f32 1.0, %v1140
        %v1142 = vld [vmem:[#allocation5] sm:$0xff]
        %v1143 = vmul.f32 %v1134, %v1142
        %v1144 = vmul.f32 %v1128, %v1135
        %v1145 = vadd.f32 %v1143, %v1144
        %v1146 = vtanh.pop %v1145
        %v1147 = vmul.f32 %v1141, %v1146
        %1148 = vst [vmem:[#allocation5] sm:$0xff] %v1145
        %1149 = vst [vmem:[#allocation4] sm:$0xff] %v1147
        %s1150 = scalar_lea.vmem [#allocation2], 8
        %1151 = vst [vmem:[%s1150] sm:$0xff] %v1147
        %s1152 = scalar_lea.vmem [#allocation3], 64
        %v1153 = vld [vmem:[%s1152] sm:$0xff]
        %v1154 = vld [vmem:[%s1152 + $0x8] sm:$0xff]
        %v1155 = vld [vmem:[%s1152 + $0x10] sm:$0xff]
        %v1156 = vld [vmem:[%s1152 + $0x18] sm:$0xff]
        %v1157 = vld [vmem:[#allocation4] sm:$0xff]
        %1158 = vmatprep.subr.mxu0 %v729
        %1159 = vmatpush1.msra.mxu0 %v728
        %1160 = vmatprep.subr.mxu0 %v733
        %1161 = vmatpush1.msra.mxu0 %v732
        %1162 = vmatprep.subr.mxu0 %v737
        %1163 = vmatpush1.msra.mxu0 %v736
        %1164 = vmatprep.subr.mxu0 %v741
        %1165 = vmatpush1.msra.mxu0 %v740
        %1166 = vmatprep.subr.mxu0 %v745
        %1167 = vmatpush1.msra.mxu0 %v744
        %1168 = vmatprep.subr.mxu0 %v749
        %1169 = vmatpush1.msra.mxu0 %v748
        %1170 = vmatprep.subr.mxu0 %v753
        %1171 = vmatpush1.msra.mxu0 %v752
        %1172 = vmatprep.subr.mxu0 %v757
        %1173 = vmatpush1.msra.mxu0 %v756
        %1174 = vmatprep.subr.mxu0 %v761
        %1175 = vmatpush1.msra.mxu0 %v760
        %1176 = vmatprep.subr.mxu0 %v765
        %1177 = vmatpush1.msra.mxu0 %v764
        %1178 = vmatprep.subr.mxu0 %v769
        %1179 = vmatpush1.msra.mxu0 %v768
        %1180 = vmatprep.subr.mxu0 %v773
        %1181 = vmatpush1.msra.mxu0 %v772
        %1182 = vmatprep.subr.mxu0 %v777
        %1183 = vmatpush1.msra.mxu0 %v776
        %1184 = vmatprep.subr.mxu0 %v781
        %1185 = vmatpush1.msra.mxu0 %v780
        %1186 = vmatprep.subr.mxu0 %v785
        %1187 = vmatpush1.msra.mxu0 %v784
        %1188 = vmatprep.subr.mxu0 %v789
        %1189 = vmatpush1.msra.mxu0 %v788
        %1190 = vmatprep.subr.mxu0 0.0
        %1191 = vmatpush1.msra.mxu0 0.0
        %1192 = vmatprep.subr.mxu0 0.0
        %1193 = vmatpush1.msra.mxu0 0.0
        %1194 = vmatprep.subr.mxu0 0.0
        %1195 = vmatpush1.msra.mxu0 0.0
        %1196 = vmatprep.subr.mxu0 0.0
        %1197 = vmatpush1.msra.mxu0 0.0
        %1198 = vmatprep.subr.mxu0 0.0
        %1199 = vmatpush1.msra.mxu0 0.0
        %1200 = vmatprep.subr.mxu0 0.0
        %1201 = vmatpush1.msra.mxu0 0.0
        %1202 = vmatprep.subr.mxu0 0.0
        %1203 = vmatpush1.msra.mxu0 0.0
        %1204 = vmatprep.subr.mxu0 0.0
        %1205 = vmatpush1.msra.mxu0 0.0
        %1206 = vmatprep.subr.mxu0 0.0
        %1207 = vmatpush1.msra.mxu0 0.0
        %1208 = vmatprep.subr.mxu0 0.0
        %1209 = vmatpush1.msra.mxu0 0.0
        %1210 = vmatprep.subr.mxu0 0.0
        %1211 = vmatpush1.msra.mxu0 0.0
        %1212 = vmatprep.subr.mxu0 0.0
        %1213 = vmatpush1.msra.mxu0 0.0
        %1214 = vmatprep.subr.mxu0 0.0
        %1215 = vmatpush1.msra.mxu0 0.0
        %1216 = vmatprep.subr.mxu0 0.0
        %1217 = vmatpush1.msra.mxu0 0.0
        %1218 = vmatprep.subr.mxu0 0.0
        %1219 = vmatpush1.msra.mxu0 0.0
        %1220 = vmatprep.subr.mxu0 0.0
        %1221 = vmatpush1.msra.mxu0 0.0
        %1222 = vmatprep.mubr.f32.mxu0 0.0
        %1223 = vmatmul.mubr.f32.gmra.mrb[0].mxu0 %v1157
        %v1224 = vpop.f32.mrb[0].mxu0
        %v1225 = vadd.f32 0.0, %v1224
        %v1226 = vpop.f32.mrb[0].mxu0
        %v1227 = vadd.f32 0.0, %v1226
        %1228 = vdwg.mxu0
        %1229 = vmatprep.subr.mxu0 %v731
        %1230 = vmatpush1.msra.mxu0 %v730
        %1231 = vmatprep.subr.mxu0 %v735
        %1232 = vmatpush1.msra.mxu0 %v734
        %1233 = vmatprep.subr.mxu0 %v739
        %1234 = vmatpush1.msra.mxu0 %v738
        %1235 = vmatprep.subr.mxu0 %v743
        %1236 = vmatpush1.msra.mxu0 %v742
        %1237 = vmatprep.subr.mxu0 %v747
        %1238 = vmatpush1.msra.mxu0 %v746
        %1239 = vmatprep.subr.mxu0 %v751
        %1240 = vmatpush1.msra.mxu0 %v750
        %1241 = vmatprep.subr.mxu0 %v755
        %1242 = vmatpush1.msra.mxu0 %v754
        %1243 = vmatprep.subr.mxu0 %v759
        %1244 = vmatpush1.msra.mxu0 %v758
        %1245 = vmatprep.subr.mxu0 %v763
        %1246 = vmatpush1.msra.mxu0 %v762
        %1247 = vmatprep.subr.mxu0 %v767
        %1248 = vmatpush1.msra.mxu0 %v766
        %1249 = vmatprep.subr.mxu0 %v771
        %1250 = vmatpush1.msra.mxu0 %v770
        %1251 = vmatprep.subr.mxu0 %v775
        %1252 = vmatpush1.msra.mxu0 %v774
        %1253 = vmatprep.subr.mxu0 %v779
        %1254 = vmatpush1.msra.mxu0 %v778
        %1255 = vmatprep.subr.mxu0 %v783
        %1256 = vmatpush1.msra.mxu0 %v782
        %1257 = vmatprep.subr.mxu0 %v787
        %1258 = vmatpush1.msra.mxu0 %v786
        %1259 = vmatprep.subr.mxu0 %v791
        %1260 = vmatpush1.msra.mxu0 %v790
        %1261 = vmatprep.subr.mxu0 0.0
        %1262 = vmatpush1.msra.mxu0 0.0
        %1263 = vmatprep.subr.mxu0 0.0
        %1264 = vmatpush1.msra.mxu0 0.0
        %1265 = vmatprep.subr.mxu0 0.0
        %1266 = vmatpush1.msra.mxu0 0.0
        %1267 = vmatprep.subr.mxu0 0.0
        %1268 = vmatpush1.msra.mxu0 0.0
        %1269 = vmatprep.subr.mxu0 0.0
        %1270 = vmatpush1.msra.mxu0 0.0
        %1271 = vmatprep.subr.mxu0 0.0
        %1272 = vmatpush1.msra.mxu0 0.0
        %1273 = vmatprep.subr.mxu0 0.0
        %1274 = vmatpush1.msra.mxu0 0.0
        %1275 = vmatprep.subr.mxu0 0.0
        %1276 = vmatpush1.msra.mxu0 0.0
        %1277 = vmatprep.subr.mxu0 0.0
        %1278 = vmatpush1.msra.mxu0 0.0
        %1279 = vmatprep.subr.mxu0 0.0
        %1280 = vmatpush1.msra.mxu0 0.0
        %1281 = vmatprep.subr.mxu0 0.0
        %1282 = vmatpush1.msra.mxu0 0.0
        %1283 = vmatprep.subr.mxu0 0.0
        %1284 = vmatpush1.msra.mxu0 0.0
        %1285 = vmatprep.subr.mxu0 0.0
        %1286 = vmatpush1.msra.mxu0 0.0
        %1287 = vmatprep.subr.mxu0 0.0
        %1288 = vmatpush1.msra.mxu0 0.0
        %1289 = vmatprep.subr.mxu0 0.0
        %1290 = vmatpush1.msra.mxu0 0.0
        %1291 = vmatprep.subr.mxu0 0.0
        %1292 = vmatpush1.msra.mxu0 0.0
        %1293 = vmatprep.mubr.f32.mxu0 0.0
        %1294 = vmatmul.mubr.f32.gmra.mrb[0].mxu0 %v1157
        %v1295 = vpop.f32.mrb[0].mxu0
        %v1296 = vadd.f32 0.0, %v1295
        %v1297 = vpop.f32.mrb[0].mxu0
        %v1298 = vadd.f32 0.0, %v1297
        %1299 = vdwg.mxu0
        %v1300 = vadd.f32 %v1153, %v1225
        %v1301 = vadd.f32 %v1154, %v1227
        %v1302 = vadd.f32 %v1155, %v1296
        %v1303 = vadd.f32 %v1156, %v1298
        %v1304 = vxor.u32 %v1300, 2147483648
        %v1305 = vmul.f32 %v1304, 1.442695
        %v1306 = vpow.pop %v1305
        %v1307 = vadd.f32 %v1306, 1.0
        %v1308 = vrcp.pop %v1307
        %v1309 = vmul.f32 1.0, %v1308
        %v1310 = vxor.u32 %v1301, 2147483648
        %v1311 = vmul.f32 %v1310, 1.442695
        %v1312 = vpow.pop %v1311
        %v1313 = vadd.f32 %v1312, 1.0
        %v1314 = vrcp.pop %v1313
        %v1315 = vmul.f32 1.0, %v1314
        %v1316 = vtanh.pop %v1302
        %v1317 = vxor.u32 %v1303, 2147483648
        %v1318 = vmul.f32 %v1317, 1.442695
        %v1319 = vpow.pop %v1318
        %v1320 = vadd.f32 %v1319, 1.0
        %v1321 = vrcp.pop %v1320
        %v1322 = vmul.f32 1.0, %v1321
        %v1323 = vld [vmem:[#allocation5] sm:$0xff]
        %v1324 = vmul.f32 %v1315, %v1323
        %v1325 = vmul.f32 %v1309, %v1316
        %v1326 = vadd.f32 %v1324, %v1325
        %v1327 = vtanh.pop %v1326
        %v1328 = vmul.f32 %v1322, %v1327
        %1329 = vst [vmem:[#allocation5] sm:$0xff] %v1326
        %1330 = vst [vmem:[#allocation4] sm:$0xff] %v1328
        %s1331 = scalar_lea.vmem [#allocation2], 16
        %1332 = vst [vmem:[%s1331] sm:$0xff] %v1328
        %s1333 = scalar_lea.vmem [#allocation3], 96
        %v1334 = vld [vmem:[%s1333] sm:$0xff]
        %v1335 = vld [vmem:[%s1333 + $0x8] sm:$0xff]
        %v1336 = vld [vmem:[%s1333 + $0x10] sm:$0xff]
        %v1337 = vld [vmem:[%s1333 + $0x18] sm:$0xff]
        %v1338 = vld [vmem:[#allocation4] sm:$0xff]
        %1339 = vmatprep.subr.mxu0 %v729
        %1340 = vmatpush1.msra.mxu0 %v728
        %1341 = vmatprep.subr.mxu0 %v733
        %1342 = vmatpush1.msra.mxu0 %v732
        %1343 = vmatprep.subr.mxu0 %v737
        %1344 = vmatpush1.msra.mxu0 %v736
        %1345 = vmatprep.subr.mxu0 %v741
        %1346 = vmatpush1.msra.mxu0 %v740
        %1347 = vmatprep.subr.mxu0 %v745
        %1348 = vmatpush1.msra.mxu0 %v744
        %1349 = vmatprep.subr.mxu0 %v749
        %1350 = vmatpush1.msra.mxu0 %v748
        %1351 = vmatprep.subr.mxu0 %v753
        %1352 = vmatpush1.msra.mxu0 %v752
        %1353 = vmatprep.subr.mxu0 %v757
        %1354 = vmatpush1.msra.mxu0 %v756
        %1355 = vmatprep.subr.mxu0 %v761
        %1356 = vmatpush1.msra.mxu0 %v760
        %1357 = vmatprep.subr.mxu0 %v765
        %1358 = vmatpush1.msra.mxu0 %v764
        %1359 = vmatprep.subr.mxu0 %v769
        %1360 = vmatpush1.msra.mxu0 %v768
        %1361 = vmatprep.subr.mxu0 %v773
        %1362 = vmatpush1.msra.mxu0 %v772
        %1363 = vmatprep.subr.mxu0 %v777
        %1364 = vmatpush1.msra.mxu0 %v776
        %1365 = vmatprep.subr.mxu0 %v781
        %1366 = vmatpush1.msra.mxu0 %v780
        %1367 = vmatprep.subr.mxu0 %v785
        %1368 = vmatpush1.msra.mxu0 %v784
        %1369 = vmatprep.subr.mxu0 %v789
        %1370 = vmatpush1.msra.mxu0 %v788
        %1371 = vmatprep.subr.mxu0 0.0
        %1372 = vmatpush1.msra.mxu0 0.0
        %1373 = vmatprep.subr.mxu0 0.0
        %1374 = vmatpush1.msra.mxu0 0.0
        %1375 = vmatprep.subr.mxu0 0.0
        %1376 = vmatpush1.msra.mxu0 0.0
        %1377 = vmatprep.subr.mxu0 0.0
        %1378 = vmatpush1.msra.mxu0 0.0
        %1379 = vmatprep.subr.mxu0 0.0
        %1380 = vmatpush1.msra.mxu0 0.0
        %1381 = vmatprep.subr.mxu0 0.0
        %1382 = vmatpush1.msra.mxu0 0.0
        %1383 = vmatprep.subr.mxu0 0.0
        %1384 = vmatpush1.msra.mxu0 0.0
        %1385 = vmatprep.subr.mxu0 0.0
        %1386 = vmatpush1.msra.mxu0 0.0
        %1387 = vmatprep.subr.mxu0 0.0
        %1388 = vmatpush1.msra.mxu0 0.0
        %1389 = vmatprep.subr.mxu0 0.0
        %1390 = vmatpush1.msra.mxu0 0.0
        %1391 = vmatprep.subr.mxu0 0.0
        %1392 = vmatpush1.msra.mxu0 0.0
        %1393 = vmatprep.subr.mxu0 0.0
        %1394 = vmatpush1.msra.mxu0 0.0
        %1395 = vmatprep.subr.mxu0 0.0
        %1396 = vmatpush1.msra.mxu0 0.0
        %1397 = vmatprep.subr.mxu0 0.0
        %1398 = vmatpush1.msra.mxu0 0.0
        %1399 = vmatprep.subr.mxu0 0.0
        %1400 = vmatpush1.msra.mxu0 0.0
        %1401 = vmatprep.subr.mxu0 0.0
        %1402 = vmatpush1.msra.mxu0 0.0
        %1403 = vmatprep.mubr.f32.mxu0 0.0
        %1404 = vmatmul.mubr.f32.gmra.mrb[0].mxu0 %v1338
        %v1405 = vpop.f32.mrb[0].mxu0
        %v1406 = vadd.f32 0.0, %v1405
        %v1407 = vpop.f32.mrb[0].mxu0
        %v1408 = vadd.f32 0.0, %v1407
        %1409 = vdwg.mxu0
        %1410 = vmatprep.subr.mxu0 %v731
        %1411 = vmatpush1.msra.mxu0 %v730
        %1412 = vmatprep.subr.mxu0 %v735
        %1413 = vmatpush1.msra.mxu0 %v734
        %1414 = vmatprep.subr.mxu0 %v739
        %1415 = vmatpush1.msra.mxu0 %v738
        %1416 = vmatprep.subr.mxu0 %v743
        %1417 = vmatpush1.msra.mxu0 %v742
        %1418 = vmatprep.subr.mxu0 %v747
        %1419 = vmatpush1.msra.mxu0 %v746
        %1420 = vmatprep.subr.mxu0 %v751
        %1421 = vmatpush1.msra.mxu0 %v750
        %1422 = vmatprep.subr.mxu0 %v755
        %1423 = vmatpush1.msra.mxu0 %v754
        %1424 = vmatprep.subr.mxu0 %v759
        %1425 = vmatpush1.msra.mxu0 %v758
        %1426 = vmatprep.subr.mxu0 %v763
        %1427 = vmatpush1.msra.mxu0 %v762
        %1428 = vmatprep.subr.mxu0 %v767
        %1429 = vmatpush1.msra.mxu0 %v766
        %1430 = vmatprep.subr.mxu0 %v771
        %1431 = vmatpush1.msra.mxu0 %v770
        %1432 = vmatprep.subr.mxu0 %v775
        %1433 = vmatpush1.msra.mxu0 %v774
        %1434 = vmatprep.subr.mxu0 %v779
        %1435 = vmatpush1.msra.mxu0 %v778
        %1436 = vmatprep.subr.mxu0 %v783
        %1437 = vmatpush1.msra.mxu0 %v782
        %1438 = vmatprep.subr.mxu0 %v787
        %1439 = vmatpush1.msra.mxu0 %v786
        %1440 = vmatprep.subr.mxu0 %v791
        %1441 = vmatpush1.msra.mxu0 %v790
        %1442 = vmatprep.subr.mxu0 0.0
        %1443 = vmatpush1.msra.mxu0 0.0
        %1444 = vmatprep.subr.mxu0 0.0
        %1445 = vmatpush1.msra.mxu0 0.0
        %1446 = vmatprep.subr.mxu0 0.0
        %1447 = vmatpush1.msra.mxu0 0.0
        %1448 = vmatprep.subr.mxu0 0.0
        %1449 = vmatpush1.msra.mxu0 0.0
        %1450 = vmatprep.subr.mxu0 0.0
        %1451 = vmatpush1.msra.mxu0 0.0
        %1452 = vmatprep.subr.mxu0 0.0
        %1453 = vmatpush1.msra.mxu0 0.0
        %1454 = vmatprep.subr.mxu0 0.0
        %1455 = vmatpush1.msra.mxu0 0.0
        %1456 = vmatprep.subr.mxu0 0.0
        %1457 = vmatpush1.msra.mxu0 0.0
        %1458 = vmatprep.subr.mxu0 0.0
        %1459 = vmatpush1.msra.mxu0 0.0
        %1460 = vmatprep.subr.mxu0 0.0
        %1461 = vmatpush1.msra.mxu0 0.0
        %1462 = vmatprep.subr.mxu0 0.0
        %1463 = vmatpush1.msra.mxu0 0.0
        %1464 = vmatprep.subr.mxu0 0.0
        %1465 = vmatpush1.msra.mxu0 0.0
        %1466 = vmatprep.subr.mxu0 0.0
        %1467 = vmatpush1.msra.mxu0 0.0
        %1468 = vmatprep.subr.mxu0 0.0
        %1469 = vmatpush1.msra.mxu0 0.0
        %1470 = vmatprep.subr.mxu0 0.0
        %1471 = vmatpush1.msra.mxu0 0.0
        %1472 = vmatprep.subr.mxu0 0.0
        %1473 = vmatpush1.msra.mxu0 0.0
        %1474 = vmatprep.mubr.f32.mxu0 0.0
        %1475 = vmatmul.mubr.f32.gmra.mrb[0].mxu0 %v1338
        %v1476 = vpop.f32.mrb[0].mxu0
        %v1477 = vadd.f32 0.0, %v1476
        %v1478 = vpop.f32.mrb[0].mxu0
        %v1479 = vadd.f32 0.0, %v1478
        %1480 = vdwg.mxu0
        %v1481 = vadd.f32 %v1334, %v1406
        %v1482 = vadd.f32 %v1335, %v1408
        %v1483 = vadd.f32 %v1336, %v1477
        %v1484 = vadd.f32 %v1337, %v1479
        %v1485 = vxor.u32 %v1481, 2147483648
        %v1486 = vmul.f32 %v1485, 1.442695
        %v1487 = vpow.pop %v1486
        %v1488 = vadd.f32 %v1487, 1.0
        %v1489 = vrcp.pop %v1488
        %v1490 = vmul.f32 1.0, %v1489
        %v1491 = vxor.u32 %v1482, 2147483648
        %v1492 = vmul.f32 %v1491, 1.442695
        %v1493 = vpow.pop %v1492
        %v1494 = vadd.f32 %v1493, 1.0
        %v1495 = vrcp.pop %v1494
        %v1496 = vmul.f32 1.0, %v1495
        %v1497 = vtanh.pop %v1483
        %v1498 = vxor.u32 %v1484, 2147483648
        %v1499 = vmul.f32 %v1498, 1.442695
        %v1500 = vpow.pop %v1499
        %v1501 = vadd.f32 %v1500, 1.0
        %v1502 = vrcp.pop %v1501
        %v1503 = vmul.f32 1.0, %v1502
        %v1504 = vld [vmem:[#allocation5] sm:$0xff]
        %v1505 = vmul.f32 %v1496, %v1504
        %v1506 = vmul.f32 %v1490, %v1497
        %v1507 = vadd.f32 %v1505, %v1506
        %v1508 = vtanh.pop %v1507
        %v1509 = vmul.f32 %v1503, %v1508
        %1510 = vst [vmem:[#allocation5] sm:$0xff] %v1507
        %1511 = vst [vmem:[#allocation4] sm:$0xff] %v1509
        %s1512 = scalar_lea.vmem [#allocation2], 24
        %1513 = vst [vmem:[%s1512] sm:$0xff] %v1509
        %s1514 = scalar_lea.vmem [#allocation3], 128
        %v1515 = vld [vmem:[%s1514] sm:$0xff]
        %v1516 = vld [vmem:[%s1514 + $0x8] sm:$0xff]
        %v1517 = vld [vmem:[%s1514 + $0x10] sm:$0xff]
        %v1518 = vld [vmem:[%s1514 + $0x18] sm:$0xff]
        %v1519 = vld [vmem:[#allocation4] sm:$0xff]
        %1520 = vmatprep.subr.mxu0 %v729
        %1521 = vmatpush1.msra.mxu0 %v728
        %1522 = vmatprep.subr.mxu0 %v733
        %1523 = vmatpush1.msra.mxu0 %v732
        %1524 = vmatprep.subr.mxu0 %v737
        %1525 = vmatpush1.msra.mxu0 %v736
        %1526 = vmatprep.subr.mxu0 %v741
        %1527 = vmatpush1.msra.mxu0 %v740
        %1528 = vmatprep.subr.mxu0 %v745
        %1529 = vmatpush1.msra.mxu0 %v744
        %1530 = vmatprep.subr.mxu0 %v749
        %1531 = vmatpush1.msra.mxu0 %v748
        %1532 = vmatprep.subr.mxu0 %v753
        %1533 = vmatpush1.msra.mxu0 %v752
        %1534 = vmatprep.subr.mxu0 %v757
        %1535 = vmatpush1.msra.mxu0 %v756
        %1536 = vmatprep.subr.mxu0 %v761
        %1537 = vmatpush1.msra.mxu0 %v760
        %1538 = vmatprep.subr.mxu0 %v765
        %1539 = vmatpush1.msra.mxu0 %v764
        %1540 = vmatprep.subr.mxu0 %v769
        %1541 = vmatpush1.msra.mxu0 %v768
        %1542 = vmatprep.subr.mxu0 %v773
        %1543 = vmatpush1.msra.mxu0 %v772
        %1544 = vmatprep.subr.mxu0 %v777
        %1545 = vmatpush1.msra.mxu0 %v776
        %1546 = vmatprep.subr.mxu0 %v781
        %1547 = vmatpush1.msra.mxu0 %v780
        %1548 = vmatprep.subr.mxu0 %v785
        %1549 = vmatpush1.msra.mxu0 %v784
        %1550 = vmatprep.subr.mxu0 %v789
        %1551 = vmatpush1.msra.mxu0 %v788
        %1552 = vmatprep.subr.mxu0 0.0
        %1553 = vmatpush1.msra.mxu0 0.0
        %1554 = vmatprep.subr.mxu0 0.0
        %1555 = vmatpush1.msra.mxu0 0.0
        %1556 = vmatprep.subr.mxu0 0.0
        %1557 = vmatpush1.msra.mxu0 0.0
        %1558 = vmatprep.subr.mxu0 0.0
        %1559 = vmatpush1.msra.mxu0 0.0
        %1560 = vmatprep.subr.mxu0 0.0
        %1561 = vmatpush1.msra.mxu0 0.0
        %1562 = vmatprep.subr.mxu0 0.0
        %1563 = vmatpush1.msra.mxu0 0.0
        %1564 = vmatprep.subr.mxu0 0.0
        %1565 = vmatpush1.msra.mxu0 0.0
        %1566 = vmatprep.subr.mxu0 0.0
        %1567 = vmatpush1.msra.mxu0 0.0
        %1568 = vmatprep.subr.mxu0 0.0
        %1569 = vmatpush1.msra.mxu0 0.0
        %1570 = vmatprep.subr.mxu0 0.0
        %1571 = vmatpush1.msra.mxu0 0.0
        %1572 = vmatprep.subr.mxu0 0.0
        %1573 = vmatpush1.msra.mxu0 0.0
        %1574 = vmatprep.subr.mxu0 0.0
        %1575 = vmatpush1.msra.mxu0 0.0
        %1576 = vmatprep.subr.mxu0 0.0
        %1577 = vmatpush1.msra.mxu0 0.0
        %1578 = vmatprep.subr.mxu0 0.0
        %1579 = vmatpush1.msra.mxu0 0.0
        %1580 = vmatprep.subr.mxu0 0.0
        %1581 = vmatpush1.msra.mxu0 0.0
        %1582 = vmatprep.subr.mxu0 0.0
        %1583 = vmatpush1.msra.mxu0 0.0
        %1584 = vmatprep.mubr.f32.mxu0 0.0
        %1585 = vmatmul.mubr.f32.gmra.mrb[0].mxu0 %v1519
        %v1586 = vpop.f32.mrb[0].mxu0
        %v1587 = vadd.f32 0.0, %v1586
        %v1588 = vpop.f32.mrb[0].mxu0
        %v1589 = vadd.f32 0.0, %v1588
        %1590 = vdwg.mxu0
        %1591 = vmatprep.subr.mxu0 %v731
        %1592 = vmatpush1.msra.mxu0 %v730
        %1593 = vmatprep.subr.mxu0 %v735
        %1594 = vmatpush1.msra.mxu0 %v734
        %1595 = vmatprep.subr.mxu0 %v739
        %1596 = vmatpush1.msra.mxu0 %v738
        %1597 = vmatprep.subr.mxu0 %v743
        %1598 = vmatpush1.msra.mxu0 %v742
        %1599 = vmatprep.subr.mxu0 %v747
        %1600 = vmatpush1.msra.mxu0 %v746
        %1601 = vmatprep.subr.mxu0 %v751
        %1602 = vmatpush1.msra.mxu0 %v750
        %1603 = vmatprep.subr.mxu0 %v755
        %1604 = vmatpush1.msra.mxu0 %v754
        %1605 = vmatprep.subr.mxu0 %v759
        %1606 = vmatpush1.msra.mxu0 %v758
        %1607 = vmatprep.subr.mxu0 %v763
        %1608 = vmatpush1.msra.mxu0 %v762
        %1609 = vmatprep.subr.mxu0 %v767
        %1610 = vmatpush1.msra.mxu0 %v766
        %1611 = vmatprep.subr.mxu0 %v771
        %1612 = vmatpush1.msra.mxu0 %v770
        %1613 = vmatprep.subr.mxu0 %v775
        %1614 = vmatpush1.msra.mxu0 %v774
        %1615 = vmatprep.subr.mxu0 %v779
        %1616 = vmatpush1.msra.mxu0 %v778
        %1617 = vmatprep.subr.mxu0 %v783
        %1618 = vmatpush1.msra.mxu0 %v782
        %1619 = vmatprep.subr.mxu0 %v787
        %1620 = vmatpush1.msra.mxu0 %v786
        %1621 = vmatprep.subr.mxu0 %v791
        %1622 = vmatpush1.msra.mxu0 %v790
        %1623 = vmatprep.subr.mxu0 0.0
        %1624 = vmatpush1.msra.mxu0 0.0
        %1625 = vmatprep.subr.mxu0 0.0
        %1626 = vmatpush1.msra.mxu0 0.0
        %1627 = vmatprep.subr.mxu0 0.0
        %1628 = vmatpush1.msra.mxu0 0.0
        %1629 = vmatprep.subr.mxu0 0.0
        %1630 = vmatpush1.msra.mxu0 0.0
        %1631 = vmatprep.subr.mxu0 0.0
        %1632 = vmatpush1.msra.mxu0 0.0
        %1633 = vmatprep.subr.mxu0 0.0
        %1634 = vmatpush1.msra.mxu0 0.0
        %1635 = vmatprep.subr.mxu0 0.0
        %1636 = vmatpush1.msra.mxu0 0.0
        %1637 = vmatprep.subr.mxu0 0.0
        %1638 = vmatpush1.msra.mxu0 0.0
        %1639 = vmatprep.subr.mxu0 0.0
        %1640 = vmatpush1.msra.mxu0 0.0
        %1641 = vmatprep.subr.mxu0 0.0
        %1642 = vmatpush1.msra.mxu0 0.0
        %1643 = vmatprep.subr.mxu0 0.0
        %1644 = vmatpush1.msra.mxu0 0.0
        %1645 = vmatprep.subr.mxu0 0.0
        %1646 = vmatpush1.msra.mxu0 0.0
        %1647 = vmatprep.subr.mxu0 0.0
        %1648 = vmatpush1.msra.mxu0 0.0
        %1649 = vmatprep.subr.mxu0 0.0
        %1650 = vmatpush1.msra.mxu0 0.0
        %1651 = vmatprep.subr.mxu0 0.0
        %1652 = vmatpush1.msra.mxu0 0.0
        %1653 = vmatprep.subr.mxu0 0.0
        %1654 = vmatpush1.msra.mxu0 0.0
        %1655 = vmatprep.mubr.f32.mxu0 0.0
        %1656 = vmatmul.mubr.f32.gmra.mrb[0].mxu0 %v1519
        %v1657 = vpop.f32.mrb[0].mxu0
        %v1658 = vadd.f32 0.0, %v1657
        %v1659 = vpop.f32.mrb[0].mxu0
        %v1660 = vadd.f32 0.0, %v1659
        %1661 = vdwg.mxu0
        %v1662 = vadd.f32 %v1515, %v1587
        %v1663 = vadd.f32 %v1516, %v1589
        %v1664 = vadd.f32 %v1517, %v1658
        %v1665 = vadd.f32 %v1518, %v1660
        %v1666 = vxor.u32 %v1662, 2147483648
        %v1667 = vmul.f32 %v1666, 1.442695
        %v1668 = vpow.pop %v1667
        %v1669 = vadd.f32 %v1668, 1.0
        %v1670 = vrcp.pop %v1669
        %v1671 = vmul.f32 1.0, %v1670
        %v1672 = vxor.u32 %v1663, 2147483648
        %v1673 = vmul.f32 %v1672, 1.442695
        %v1674 = vpow.pop %v1673
        %v1675 = vadd.f32 %v1674, 1.0
        %v1676 = vrcp.pop %v1675
        %v1677 = vmul.f32 1.0, %v1676
        %v1678 = vtanh.pop %v1664
        %v1679 = vxor.u32 %v1665, 2147483648
        %v1680 = vmul.f32 %v1679, 1.442695
        %v1681 = vpow.pop %v1680
        %v1682 = vadd.f32 %v1681, 1.0
        %v1683 = vrcp.pop %v1682
        %v1684 = vmul.f32 1.0, %v1683
        %v1685 = vld [vmem:[#allocation5] sm:$0xff]
        %v1686 = vmul.f32 %v1677, %v1685
        %v1687 = vmul.f32 %v1671, %v1678
        %v1688 = vadd.f32 %v1686, %v1687
        %v1689 = vtanh.pop %v1688
        %v1690 = vmul.f32 %v1684, %v1689
        %1691 = vst [vmem:[#allocation5] sm:$0xff] %v1688
        %1692 = vst [vmem:[#allocation4] sm:$0xff] %v1690
        %s1693 = scalar_lea.vmem [#allocation2], 32
        %1694 = vst [vmem:[%s1693] sm:$0xff] %v1690
        %s1695 = scalar_lea.vmem [#allocation3], 160
        %v1696 = vld [vmem:[%s1695] sm:$0xff]
        %v1697 = vld [vmem:[%s1695 + $0x8] sm:$0xff]
        %v1698 = vld [vmem:[%s1695 + $0x10] sm:$0xff]
        %v1699 = vld [vmem:[%s1695 + $0x18] sm:$0xff]
        %v1700 = vld [vmem:[#allocation4] sm:$0xff]
        %1701 = vmatprep.subr.mxu0 %v729
        %1702 = vmatpush1.msra.mxu0 %v728
        %1703 = vmatprep.subr.mxu0 %v733
        %1704 = vmatpush1.msra.mxu0 %v732
        %1705 = vmatprep.subr.mxu0 %v737
        %1706 = vmatpush1.msra.mxu0 %v736
        %1707 = vmatprep.subr.mxu0 %v741
        %1708 = vmatpush1.msra.mxu0 %v740
        %1709 = vmatprep.subr.mxu0 %v745
        %1710 = vmatpush1.msra.mxu0 %v744
        %1711 = vmatprep.subr.mxu0 %v749
        %1712 = vmatpush1.msra.mxu0 %v748
        %1713 = vmatprep.subr.mxu0 %v753
        %1714 = vmatpush1.msra.mxu0 %v752
        %1715 = vmatprep.subr.mxu0 %v757
        %1716 = vmatpush1.msra.mxu0 %v756
        %1717 = vmatprep.subr.mxu0 %v761
        %1718 = vmatpush1.msra.mxu0 %v760
        %1719 = vmatprep.subr.mxu0 %v765
        %1720 = vmatpush1.msra.mxu0 %v764
        %1721 = vmatprep.subr.mxu0 %v769
        %1722 = vmatpush1.msra.mxu0 %v768
        %1723 = vmatprep.subr.mxu0 %v773
        %1724 = vmatpush1.msra.mxu0 %v772
        %1725 = vmatprep.subr.mxu0 %v777
        %1726 = vmatpush1.msra.mxu0 %v776
        %1727 = vmatprep.subr.mxu0 %v781
        %1728 = vmatpush1.msra.mxu0 %v780
        %1729 = vmatprep.subr.mxu0 %v785
        %1730 = vmatpush1.msra.mxu0 %v784
        %1731 = vmatprep.subr.mxu0 %v789
        %1732 = vmatpush1.msra.mxu0 %v788
        %1733 = vmatprep.subr.mxu0 0.0
        %1734 = vmatpush1.msra.mxu0 0.0
        %1735 = vmatprep.subr.mxu0 0.0
        %1736 = vmatpush1.msra.mxu0 0.0
        %1737 = vmatprep.subr.mxu0 0.0
        %1738 = vmatpush1.msra.mxu0 0.0
        %1739 = vmatprep.subr.mxu0 0.0
        %1740 = vmatpush1.msra.mxu0 0.0
        %1741 = vmatprep.subr.mxu0 0.0
        %1742 = vmatpush1.msra.mxu0 0.0
        %1743 = vmatprep.subr.mxu0 0.0
        %1744 = vmatpush1.msra.mxu0 0.0
        %1745 = vmatprep.subr.mxu0 0.0
        %1746 = vmatpush1.msra.mxu0 0.0
        %1747 = vmatprep.subr.mxu0 0.0
        %1748 = vmatpush1.msra.mxu0 0.0
        %1749 = vmatprep.subr.mxu0 0.0
        %1750 = vmatpush1.msra.mxu0 0.0
        %1751 = vmatprep.subr.mxu0 0.0
        %1752 = vmatpush1.msra.mxu0 0.0
        %1753 = vmatprep.subr.mxu0 0.0
        %1754 = vmatpush1.msra.mxu0 0.0
        %1755 = vmatprep.subr.mxu0 0.0
        %1756 = vmatpush1.msra.mxu0 0.0
        %1757 = vmatprep.subr.mxu0 0.0
        %1758 = vmatpush1.msra.mxu0 0.0
        %1759 = vmatprep.subr.mxu0 0.0
        %1760 = vmatpush1.msra.mxu0 0.0
        %1761 = vmatprep.subr.mxu0 0.0
        %1762 = vmatpush1.msra.mxu0 0.0
        %1763 = vmatprep.subr.mxu0 0.0
        %1764 = vmatpush1.msra.mxu0 0.0
        %1765 = vmatprep.mubr.f32.mxu0 0.0
        %1766 = vmatmul.mubr.f32.gmra.mrb[0].mxu0 %v1700
        %v1767 = vpop.f32.mrb[0].mxu0
        %v1768 = vadd.f32 0.0, %v1767
        %v1769 = vpop.f32.mrb[0].mxu0
        %v1770 = vadd.f32 0.0, %v1769
        %1771 = vdwg.mxu0
        %1772 = vmatprep.subr.mxu0 %v731
        %1773 = vmatpush1.msra.mxu0 %v730
        %1774 = vmatprep.subr.mxu0 %v735
        %1775 = vmatpush1.msra.mxu0 %v734
        %1776 = vmatprep.subr.mxu0 %v739
        %1777 = vmatpush1.msra.mxu0 %v738
        %1778 = vmatprep.subr.mxu0 %v743
        %1779 = vmatpush1.msra.mxu0 %v742
        %1780 = vmatprep.subr.mxu0 %v747
        %1781 = vmatpush1.msra.mxu0 %v746
        %1782 = vmatprep.subr.mxu0 %v751
        %1783 = vmatpush1.msra.mxu0 %v750
        %1784 = vmatprep.subr.mxu0 %v755
        %1785 = vmatpush1.msra.mxu0 %v754
        %1786 = vmatprep.subr.mxu0 %v759
        %1787 = vmatpush1.msra.mxu0 %v758
        %1788 = vmatprep.subr.mxu0 %v763
        %1789 = vmatpush1.msra.mxu0 %v762
        %1790 = vmatprep.subr.mxu0 %v767
        %1791 = vmatpush1.msra.mxu0 %v766
        %1792 = vmatprep.subr.mxu0 %v771
        %1793 = vmatpush1.msra.mxu0 %v770
        %1794 = vmatprep.subr.mxu0 %v775
        %1795 = vmatpush1.msra.mxu0 %v774
        %1796 = vmatprep.subr.mxu0 %v779
        %1797 = vmatpush1.msra.mxu0 %v778
        %1798 = vmatprep.subr.mxu0 %v783
        %1799 = vmatpush1.msra.mxu0 %v782
        %1800 = vmatprep.subr.mxu0 %v787
        %1801 = vmatpush1.msra.mxu0 %v786
        %1802 = vmatprep.subr.mxu0 %v791
        %1803 = vmatpush1.msra.mxu0 %v790
        %1804 = vmatprep.subr.mxu0 0.0
        %1805 = vmatpush1.msra.mxu0 0.0
        %1806 = vmatprep.subr.mxu0 0.0
        %1807 = vmatpush1.msra.mxu0 0.0
        %1808 = vmatprep.subr.mxu0 0.0
        %1809 = vmatpush1.msra.mxu0 0.0
        %1810 = vmatprep.subr.mxu0 0.0
        %1811 = vmatpush1.msra.mxu0 0.0
        %1812 = vmatprep.subr.mxu0 0.0
        %1813 = vmatpush1.msra.mxu0 0.0
        %1814 = vmatprep.subr.mxu0 0.0
        %1815 = vmatpush1.msra.mxu0 0.0
        %1816 = vmatprep.subr.mxu0 0.0
        %1817 = vmatpush1.msra.mxu0 0.0
        %1818 = vmatprep.subr.mxu0 0.0
        %1819 = vmatpush1.msra.mxu0 0.0
        %1820 = vmatprep.subr.mxu0 0.0
        %1821 = vmatpush1.msra.mxu0 0.0
        %1822 = vmatprep.subr.mxu0 0.0
        %1823 = vmatpush1.msra.mxu0 0.0
        %1824 = vmatprep.subr.mxu0 0.0
        %1825 = vmatpush1.msra.mxu0 0.0
        %1826 = vmatprep.subr.mxu0 0.0
        %1827 = vmatpush1.msra.mxu0 0.0
        %1828 = vmatprep.subr.mxu0 0.0
        %1829 = vmatpush1.msra.mxu0 0.0
        %1830 = vmatprep.subr.mxu0 0.0
        %1831 = vmatpush1.msra.mxu0 0.0
        %1832 = vmatprep.subr.mxu0 0.0
        %1833 = vmatpush1.msra.mxu0 0.0
        %1834 = vmatprep.subr.mxu0 0.0
        %1835 = vmatpush1.msra.mxu0 0.0
        %1836 = vmatprep.mubr.f32.mxu0 0.0
        %1837 = vmatmul.mubr.f32.gmra.mrb[0].mxu0 %v1700
        %v1838 = vpop.f32.mrb[0].mxu0
        %v1839 = vadd.f32 0.0, %v1838
        %v1840 = vpop.f32.mrb[0].mxu0
        %v1841 = vadd.f32 0.0, %v1840
        %1842 = vdwg.mxu0
        %v1843 = vadd.f32 %v1696, %v1768
        %v1844 = vadd.f32 %v1697, %v1770
        %v1845 = vadd.f32 %v1698, %v1839
        %v1846 = vadd.f32 %v1699, %v1841
        %v1847 = vxor.u32 %v1843, 2147483648
        %v1848 = vmul.f32 %v1847, 1.442695
        %v1849 = vpow.pop %v1848
        %v1850 = vadd.f32 %v1849, 1.0
        %v1851 = vrcp.pop %v1850
        %v1852 = vmul.f32 1.0, %v1851
        %v1853 = vxor.u32 %v1844, 2147483648
        %v1854 = vmul.f32 %v1853, 1.442695
        %v1855 = vpow.pop %v1854
        %v1856 = vadd.f32 %v1855, 1.0
        %v1857 = vrcp.pop %v1856
        %v1858 = vmul.f32 1.0, %v1857
        %v1859 = vtanh.pop %v1845
        %v1860 = vxor.u32 %v1846, 2147483648
        %v1861 = vmul.f32 %v1860, 1.442695
        %v1862 = vpow.pop %v1861
        %v1863 = vadd.f32 %v1862, 1.0
        %v1864 = vrcp.pop %v1863
        %v1865 = vmul.f32 1.0, %v1864
        %v1866 = vld [vmem:[#allocation5] sm:$0xff]
        %v1867 = vmul.f32 %v1858, %v1866
        %v1868 = vmul.f32 %v1852, %v1859
        %v1869 = vadd.f32 %v1867, %v1868
        %v1870 = vtanh.pop %v1869
        %v1871 = vmul.f32 %v1865, %v1870
        %1872 = vst [vmem:[#allocation5] sm:$0xff] %v1869
        %1873 = vst [vmem:[#allocation4] sm:$0xff] %v1871
        %s1874 = scalar_lea.vmem [#allocation2], 40
        %1875 = vst [vmem:[%s1874] sm:$0xff] %v1871
        %s1876 = scalar_lea.vmem [#allocation3], 192
        %v1877 = vld [vmem:[%s1876] sm:$0xff]
        %v1878 = vld [vmem:[%s1876 + $0x8] sm:$0xff]
        %v1879 = vld [vmem:[%s1876 + $0x10] sm:$0xff]
        %v1880 = vld [vmem:[%s1876 + $0x18] sm:$0xff]
        %v1881 = vld [vmem:[#allocation4] sm:$0xff]
        %1882 = vmatprep.subr.mxu0 %v729
        %1883 = vmatpush1.msra.mxu0 %v728
        %1884 = vmatprep.subr.mxu0 %v733
        %1885 = vmatpush1.msra.mxu0 %v732
        %1886 = vmatprep.subr.mxu0 %v737
        %1887 = vmatpush1.msra.mxu0 %v736
        %1888 = vmatprep.subr.mxu0 %v741
        %1889 = vmatpush1.msra.mxu0 %v740
        %1890 = vmatprep.subr.mxu0 %v745
        %1891 = vmatpush1.msra.mxu0 %v744
        %1892 = vmatprep.subr.mxu0 %v749
        %1893 = vmatpush1.msra.mxu0 %v748
        %1894 = vmatprep.subr.mxu0 %v753
        %1895 = vmatpush1.msra.mxu0 %v752
        %1896 = vmatprep.subr.mxu0 %v757
        %1897 = vmatpush1.msra.mxu0 %v756
        %1898 = vmatprep.subr.mxu0 %v761
        %1899 = vmatpush1.msra.mxu0 %v760
        %1900 = vmatprep.subr.mxu0 %v765
        %1901 = vmatpush1.msra.mxu0 %v764
        %1902 = vmatprep.subr.mxu0 %v769
        %1903 = vmatpush1.msra.mxu0 %v768
        %1904 = vmatprep.subr.mxu0 %v773
        %1905 = vmatpush1.msra.mxu0 %v772
        %1906 = vmatprep.subr.mxu0 %v777
        %1907 = vmatpush1.msra.mxu0 %v776
        %1908 = vmatprep.subr.mxu0 %v781
        %1909 = vmatpush1.msra.mxu0 %v780
        %1910 = vmatprep.subr.mxu0 %v785
        %1911 = vmatpush1.msra.mxu0 %v784
        %1912 = vmatprep.subr.mxu0 %v789
        %1913 = vmatpush1.msra.mxu0 %v788
        %1914 = vmatprep.subr.mxu0 0.0
        %1915 = vmatpush1.msra.mxu0 0.0
        %1916 = vmatprep.subr.mxu0 0.0
        %1917 = vmatpush1.msra.mxu0 0.0
        %1918 = vmatprep.subr.mxu0 0.0
        %1919 = vmatpush1.msra.mxu0 0.0
        %1920 = vmatprep.subr.mxu0 0.0
        %1921 = vmatpush1.msra.mxu0 0.0
        %1922 = vmatprep.subr.mxu0 0.0
        %1923 = vmatpush1.msra.mxu0 0.0
        %1924 = vmatprep.subr.mxu0 0.0
        %1925 = vmatpush1.msra.mxu0 0.0
        %1926 = vmatprep.subr.mxu0 0.0
        %1927 = vmatpush1.msra.mxu0 0.0
        %1928 = vmatprep.subr.mxu0 0.0
        %1929 = vmatpush1.msra.mxu0 0.0
        %1930 = vmatprep.subr.mxu0 0.0
        %1931 = vmatpush1.msra.mxu0 0.0
        %1932 = vmatprep.subr.mxu0 0.0
        %1933 = vmatpush1.msra.mxu0 0.0
        %1934 = vmatprep.subr.mxu0 0.0
        %1935 = vmatpush1.msra.mxu0 0.0
        %1936 = vmatprep.subr.mxu0 0.0
        %1937 = vmatpush1.msra.mxu0 0.0
        %1938 = vmatprep.subr.mxu0 0.0
        %1939 = vmatpush1.msra.mxu0 0.0
        %1940 = vmatprep.subr.mxu0 0.0
        %1941 = vmatpush1.msra.mxu0 0.0
        %1942 = vmatprep.subr.mxu0 0.0
        %1943 = vmatpush1.msra.mxu0 0.0
        %1944 = vmatprep.subr.mxu0 0.0
        %1945 = vmatpush1.msra.mxu0 0.0
        %1946 = vmatprep.mubr.f32.mxu0 0.0
        %1947 = vmatmul.mubr.f32.gmra.mrb[0].mxu0 %v1881
        %v1948 = vpop.f32.mrb[0].mxu0
        %v1949 = vadd.f32 0.0, %v1948
        %v1950 = vpop.f32.mrb[0].mxu0
        %v1951 = vadd.f32 0.0, %v1950
        %1952 = vdwg.mxu0
        %1953 = vmatprep.subr.mxu0 %v731
        %1954 = vmatpush1.msra.mxu0 %v730
        %1955 = vmatprep.subr.mxu0 %v735
        %1956 = vmatpush1.msra.mxu0 %v734
        %1957 = vmatprep.subr.mxu0 %v739
        %1958 = vmatpush1.msra.mxu0 %v738
        %1959 = vmatprep.subr.mxu0 %v743
        %1960 = vmatpush1.msra.mxu0 %v742
        %1961 = vmatprep.subr.mxu0 %v747
        %1962 = vmatpush1.msra.mxu0 %v746
        %1963 = vmatprep.subr.mxu0 %v751
        %1964 = vmatpush1.msra.mxu0 %v750
        %1965 = vmatprep.subr.mxu0 %v755
        %1966 = vmatpush1.msra.mxu0 %v754
        %1967 = vmatprep.subr.mxu0 %v759
        %1968 = vmatpush1.msra.mxu0 %v758
        %1969 = vmatprep.subr.mxu0 %v763
        %1970 = vmatpush1.msra.mxu0 %v762
        %1971 = vmatprep.subr.mxu0 %v767
        %1972 = vmatpush1.msra.mxu0 %v766
        %1973 = vmatprep.subr.mxu0 %v771
        %1974 = vmatpush1.msra.mxu0 %v770
        %1975 = vmatprep.subr.mxu0 %v775
        %1976 = vmatpush1.msra.mxu0 %v774
        %1977 = vmatprep.subr.mxu0 %v779
        %1978 = vmatpush1.msra.mxu0 %v778
        %1979 = vmatprep.subr.mxu0 %v783
        %1980 = vmatpush1.msra.mxu0 %v782
        %1981 = vmatprep.subr.mxu0 %v787
        %1982 = vmatpush1.msra.mxu0 %v786
        %1983 = vmatprep.subr.mxu0 %v791
        %1984 = vmatpush1.msra.mxu0 %v790
        %1985 = vmatprep.subr.mxu0 0.0
        %1986 = vmatpush1.msra.mxu0 0.0
        %1987 = vmatprep.subr.mxu0 0.0
        %1988 = vmatpush1.msra.mxu0 0.0
        %1989 = vmatprep.subr.mxu0 0.0
        %1990 = vmatpush1.msra.mxu0 0.0
        %1991 = vmatprep.subr.mxu0 0.0
        %1992 = vmatpush1.msra.mxu0 0.0
        %1993 = vmatprep.subr.mxu0 0.0
        %1994 = vmatpush1.msra.mxu0 0.0
        %1995 = vmatprep.subr.mxu0 0.0
        %1996 = vmatpush1.msra.mxu0 0.0
        %1997 = vmatprep.subr.mxu0 0.0
        %1998 = vmatpush1.msra.mxu0 0.0
        %1999 = vmatprep.subr.mxu0 0.0
        %2000 = vmatpush1.msra.mxu0 0.0
        %2001 = vmatprep.subr.mxu0 0.0
        %2002 = vmatpush1.msra.mxu0 0.0
        %2003 = vmatprep.subr.mxu0 0.0
        %2004 = vmatpush1.msra.mxu0 0.0
        %2005 = vmatprep.subr.mxu0 0.0
        %2006 = vmatpush1.msra.mxu0 0.0
        %2007 = vmatprep.subr.mxu0 0.0
        %2008 = vmatpush1.msra.mxu0 0.0
        %2009 = vmatprep.subr.mxu0 0.0
        %2010 = vmatpush1.msra.mxu0 0.0
        %2011 = vmatprep.subr.mxu0 0.0
        %2012 = vmatpush1.msra.mxu0 0.0
        %2013 = vmatprep.subr.mxu0 0.0
        %2014 = vmatpush1.msra.mxu0 0.0
        %2015 = vmatprep.subr.mxu0 0.0
        %2016 = vmatpush1.msra.mxu0 0.0
        %2017 = vmatprep.mubr.f32.mxu0 0.0
        %2018 = vmatmul.mubr.f32.gmra.mrb[0].mxu0 %v1881
        %v2019 = vpop.f32.mrb[0].mxu0
        %v2020 = vadd.f32 0.0, %v2019
        %v2021 = vpop.f32.mrb[0].mxu0
        %v2022 = vadd.f32 0.0, %v2021
        %2023 = vdwg.mxu0
        %v2024 = vadd.f32 %v1877, %v1949
        %v2025 = vadd.f32 %v1878, %v1951
        %v2026 = vadd.f32 %v1879, %v2020
        %v2027 = vadd.f32 %v1880, %v2022
        %v2028 = vxor.u32 %v2024, 2147483648
        %v2029 = vmul.f32 %v2028, 1.442695
        %v2030 = vpow.pop %v2029
        %v2031 = vadd.f32 %v2030, 1.0
        %v2032 = vrcp.pop %v2031
        %v2033 = vmul.f32 1.0, %v2032
        %v2034 = vxor.u32 %v2025, 2147483648
        %v2035 = vmul.f32 %v2034, 1.442695
        %v2036 = vpow.pop %v2035
        %v2037 = vadd.f32 %v2036, 1.0
        %v2038 = vrcp.pop %v2037
        %v2039 = vmul.f32 1.0, %v2038
        %v2040 = vtanh.pop %v2026
        %v2041 = vxor.u32 %v2027, 2147483648
        %v2042 = vmul.f32 %v2041, 1.442695
        %v2043 = vpow.pop %v2042
        %v2044 = vadd.f32 %v2043, 1.0
        %v2045 = vrcp.pop %v2044
        %v2046 = vmul.f32 1.0, %v2045
        %v2047 = vld [vmem:[#allocation5] sm:$0xff]
        %v2048 = vmul.f32 %v2039, %v2047
        %v2049 = vmul.f32 %v2033, %v2040
        %v2050 = vadd.f32 %v2048, %v2049
        %v2051 = vtanh.pop %v2050
        %v2052 = vmul.f32 %v2046, %v2051
        %2053 = vst [vmem:[#allocation5] sm:$0xff] %v2050
        %2054 = vst [vmem:[#allocation4] sm:$0xff] %v2052
        %s2055 = scalar_lea.vmem [#allocation2], 48
        %2056 = vst [vmem:[%s2055] sm:$0xff] %v2052
        %s2057 = scalar_lea.vmem [#allocation3], 224
        %v2058 = vld [vmem:[%s2057] sm:$0xff]
        %v2059 = vld [vmem:[%s2057 + $0x8] sm:$0xff]
        %v2060 = vld [vmem:[%s2057 + $0x10] sm:$0xff]
        %v2061 = vld [vmem:[%s2057 + $0x18] sm:$0xff]
        %v2062 = vld [vmem:[#allocation4] sm:$0xff]
        %2063 = vmatprep.subr.mxu0 %v729
        %2064 = vmatpush1.msra.mxu0 %v728
        %2065 = vmatprep.subr.mxu0 %v733
        %2066 = vmatpush1.msra.mxu0 %v732
        %2067 = vmatprep.subr.mxu0 %v737
        %2068 = vmatpush1.msra.mxu0 %v736
        %2069 = vmatprep.subr.mxu0 %v741
        %2070 = vmatpush1.msra.mxu0 %v740
        %2071 = vmatprep.subr.mxu0 %v745
        %2072 = vmatpush1.msra.mxu0 %v744
        %2073 = vmatprep.subr.mxu0 %v749
        %2074 = vmatpush1.msra.mxu0 %v748
        %2075 = vmatprep.subr.mxu0 %v753
        %2076 = vmatpush1.msra.mxu0 %v752
        %2077 = vmatprep.subr.mxu0 %v757
        %2078 = vmatpush1.msra.mxu0 %v756
        %2079 = vmatprep.subr.mxu0 %v761
        %2080 = vmatpush1.msra.mxu0 %v760
        %2081 = vmatprep.subr.mxu0 %v765
        %2082 = vmatpush1.msra.mxu0 %v764
        %2083 = vmatprep.subr.mxu0 %v769
        %2084 = vmatpush1.msra.mxu0 %v768
        %2085 = vmatprep.subr.mxu0 %v773
        %2086 = vmatpush1.msra.mxu0 %v772
        %2087 = vmatprep.subr.mxu0 %v777
        %2088 = vmatpush1.msra.mxu0 %v776
        %2089 = vmatprep.subr.mxu0 %v781
        %2090 = vmatpush1.msra.mxu0 %v780
        %2091 = vmatprep.subr.mxu0 %v785
        %2092 = vmatpush1.msra.mxu0 %v784
        %2093 = vmatprep.subr.mxu0 %v789
        %2094 = vmatpush1.msra.mxu0 %v788
        %2095 = vmatprep.subr.mxu0 0.0
        %2096 = vmatpush1.msra.mxu0 0.0
        %2097 = vmatprep.subr.mxu0 0.0
        %2098 = vmatpush1.msra.mxu0 0.0
        %2099 = vmatprep.subr.mxu0 0.0
        %2100 = vmatpush1.msra.mxu0 0.0
        %2101 = vmatprep.subr.mxu0 0.0
        %2102 = vmatpush1.msra.mxu0 0.0
        %2103 = vmatprep.subr.mxu0 0.0
        %2104 = vmatpush1.msra.mxu0 0.0
        %2105 = vmatprep.subr.mxu0 0.0
        %2106 = vmatpush1.msra.mxu0 0.0
        %2107 = vmatprep.subr.mxu0 0.0
        %2108 = vmatpush1.msra.mxu0 0.0
        %2109 = vmatprep.subr.mxu0 0.0
        %2110 = vmatpush1.msra.mxu0 0.0
        %2111 = vmatprep.subr.mxu0 0.0
        %2112 = vmatpush1.msra.mxu0 0.0
        %2113 = vmatprep.subr.mxu0 0.0
        %2114 = vmatpush1.msra.mxu0 0.0
        %2115 = vmatprep.subr.mxu0 0.0
        %2116 = vmatpush1.msra.mxu0 0.0
        %2117 = vmatprep.subr.mxu0 0.0
        %2118 = vmatpush1.msra.mxu0 0.0
        %2119 = vmatprep.subr.mxu0 0.0
        %2120 = vmatpush1.msra.mxu0 0.0
        %2121 = vmatprep.subr.mxu0 0.0
        %2122 = vmatpush1.msra.mxu0 0.0
        %2123 = vmatprep.subr.mxu0 0.0
        %2124 = vmatpush1.msra.mxu0 0.0
        %2125 = vmatprep.subr.mxu0 0.0
        %2126 = vmatpush1.msra.mxu0 0.0
        %2127 = vmatprep.mubr.f32.mxu0 0.0
        %2128 = vmatmul.mubr.f32.gmra.mrb[0].mxu0 %v2062
        %v2129 = vpop.f32.mrb[0].mxu0
        %v2130 = vadd.f32 0.0, %v2129
        %v2131 = vpop.f32.mrb[0].mxu0
        %v2132 = vadd.f32 0.0, %v2131
        %2133 = vdwg.mxu0
        %2134 = vmatprep.subr.mxu0 %v731
        %2135 = vmatpush1.msra.mxu0 %v730
        %2136 = vmatprep.subr.mxu0 %v735
        %2137 = vmatpush1.msra.mxu0 %v734
        %2138 = vmatprep.subr.mxu0 %v739
        %2139 = vmatpush1.msra.mxu0 %v738
        %2140 = vmatprep.subr.mxu0 %v743
        %2141 = vmatpush1.msra.mxu0 %v742
        %2142 = vmatprep.subr.mxu0 %v747
        %2143 = vmatpush1.msra.mxu0 %v746
        %2144 = vmatprep.subr.mxu0 %v751
        %2145 = vmatpush1.msra.mxu0 %v750
        %2146 = vmatprep.subr.mxu0 %v755
        %2147 = vmatpush1.msra.mxu0 %v754
        %2148 = vmatprep.subr.mxu0 %v759
        %2149 = vmatpush1.msra.mxu0 %v758
        %2150 = vmatprep.subr.mxu0 %v763
        %2151 = vmatpush1.msra.mxu0 %v762
        %2152 = vmatprep.subr.mxu0 %v767
        %2153 = vmatpush1.msra.mxu0 %v766
        %2154 = vmatprep.subr.mxu0 %v771
        %2155 = vmatpush1.msra.mxu0 %v770
        %2156 = vmatprep.subr.mxu0 %v775
        %2157 = vmatpush1.msra.mxu0 %v774
        %2158 = vmatprep.subr.mxu0 %v779
        %2159 = vmatpush1.msra.mxu0 %v778
        %2160 = vmatprep.subr.mxu0 %v783
        %2161 = vmatpush1.msra.mxu0 %v782
        %2162 = vmatprep.subr.mxu0 %v787
        %2163 = vmatpush1.msra.mxu0 %v786
        %2164 = vmatprep.subr.mxu0 %v791
        %2165 = vmatpush1.msra.mxu0 %v790
        %2166 = vmatprep.subr.mxu0 0.0
        %2167 = vmatpush1.msra.mxu0 0.0
        %2168 = vmatprep.subr.mxu0 0.0
        %2169 = vmatpush1.msra.mxu0 0.0
        %2170 = vmatprep.subr.mxu0 0.0
        %2171 = vmatpush1.msra.mxu0 0.0
        %2172 = vmatprep.subr.mxu0 0.0
        %2173 = vmatpush1.msra.mxu0 0.0
        %2174 = vmatprep.subr.mxu0 0.0
        %2175 = vmatpush1.msra.mxu0 0.0
        %2176 = vmatprep.subr.mxu0 0.0
        %2177 = vmatpush1.msra.mxu0 0.0
        %2178 = vmatprep.subr.mxu0 0.0
        %2179 = vmatpush1.msra.mxu0 0.0
        %2180 = vmatprep.subr.mxu0 0.0
        %2181 = vmatpush1.msra.mxu0 0.0
        %2182 = vmatprep.subr.mxu0 0.0
        %2183 = vmatpush1.msra.mxu0 0.0
        %2184 = vmatprep.subr.mxu0 0.0
        %2185 = vmatpush1.msra.mxu0 0.0
        %2186 = vmatprep.subr.mxu0 0.0
        %2187 = vmatpush1.msra.mxu0 0.0
        %2188 = vmatprep.subr.mxu0 0.0
        %2189 = vmatpush1.msra.mxu0 0.0
        %2190 = vmatprep.subr.mxu0 0.0
        %2191 = vmatpush1.msra.mxu0 0.0
        %2192 = vmatprep.subr.mxu0 0.0
        %2193 = vmatpush1.msra.mxu0 0.0
        %2194 = vmatprep.subr.mxu0 0.0
        %2195 = vmatpush1.msra.mxu0 0.0
        %2196 = vmatprep.subr.mxu0 0.0
        %2197 = vmatpush1.msra.mxu0 0.0
        %2198 = vmatprep.mubr.f32.mxu0 0.0
        %2199 = vmatmul.mubr.f32.gmra.mrb[0].mxu0 %v2062
        %v2200 = vpop.f32.mrb[0].mxu0
        %v2201 = vadd.f32 0.0, %v2200
        %v2202 = vpop.f32.mrb[0].mxu0
        %v2203 = vadd.f32 0.0, %v2202
        %2204 = vdwg.mxu0
        %v2205 = vadd.f32 %v2058, %v2130
        %v2206 = vadd.f32 %v2059, %v2132
        %v2207 = vadd.f32 %v2060, %v2201
        %v2208 = vadd.f32 %v2061, %v2203
        %v2209 = vxor.u32 %v2205, 2147483648
        %v2210 = vmul.f32 %v2209, 1.442695
        %v2211 = vpow.pop %v2210
        %v2212 = vadd.f32 %v2211, 1.0
        %v2213 = vrcp.pop %v2212
        %v2214 = vmul.f32 1.0, %v2213
        %v2215 = vxor.u32 %v2206, 2147483648
        %v2216 = vmul.f32 %v2215, 1.442695
        %v2217 = vpow.pop %v2216
        %v2218 = vadd.f32 %v2217, 1.0
        %v2219 = vrcp.pop %v2218
        %v2220 = vmul.f32 1.0, %v2219
        %v2221 = vtanh.pop %v2207
        %v2222 = vxor.u32 %v2208, 2147483648
        %v2223 = vmul.f32 %v2222, 1.442695
        %v2224 = vpow.pop %v2223
        %v2225 = vadd.f32 %v2224, 1.0
        %v2226 = vrcp.pop %v2225
        %v2227 = vmul.f32 1.0, %v2226
        %v2228 = vld [vmem:[#allocation5] sm:$0xff]
        %v2229 = vmul.f32 %v2220, %v2228
        %v2230 = vmul.f32 %v2214, %v2221
        %v2231 = vadd.f32 %v2229, %v2230
        %v2232 = vtanh.pop %v2231
        %v2233 = vmul.f32 %v2227, %v2232
        %2234 = vst [vmem:[#allocation5] sm:$0xff] %v2231
        %2235 = vst [vmem:[#allocation4] sm:$0xff] %v2233
        %s2236 = scalar_lea.vmem [#allocation2], 56
        %2237 = vst [vmem:[%s2236] sm:$0xff] %v2233
        %v2238 = vld [vmem:[#allocation4] sm:$0xff]
        %v2239 = vld [vmem:[#allocation12] sm:$0xff]
        %v2240 = vld [vmem:[#allocation12 + $0x8] sm:$0xff]
        %v2241 = vld [vmem:[#allocation12 + $0x10] sm:$0xff]
        %v2242 = vld [vmem:[#allocation12 + $0x18] sm:$0xff]
        %v2243 = vld [vmem:[#allocation12 + $0x20] sm:$0xff]
        %v2244 = vld [vmem:[#allocation12 + $0x28] sm:$0xff]
        %v2245 = vld [vmem:[#allocation12 + $0x30] sm:$0xff]
        %v2246 = vld [vmem:[#allocation12 + $0x38] sm:$0xff]
        %v2247 = vld [vmem:[#allocation12 + $0x40] sm:$0xff]
        %v2248 = vld [vmem:[#allocation12 + $0x48] sm:$0xff]
        %v2249 = vld [vmem:[#allocation12 + $0x50] sm:$0xff]
        %v2250 = vld [vmem:[#allocation12 + $0x58] sm:$0xff]
        %v2251 = vld [vmem:[#allocation12 + $0x60] sm:$0xff]
        %v2252 = vld [vmem:[#allocation12 + $0x68] sm:$0xff]
        %v2253 = vld [vmem:[#allocation12 + $0x70] sm:$0xff]
        %v2254 = vld [vmem:[#allocation12 + $0x78] sm:$0xff]
        %v2255 = vld [vmem:[%s5] sm:$0x1]
        %v2257 = vlaneseq
        %v2258 = vshrl.u32 %v2257, 7
        %v2259 = vsub.s32 0, %v2258
        %v2260 = vrot.slane %v2255, %v2259
        %2262 = vmatprep.subr.mxu0 0.0
        %2263 = vmatpush1.msra.mxu0 %v2239
        %2264 = vmatprep.subr.mxu0 0.0
        %2265 = vmatpush1.msra.mxu0 %v2240
        %2266 = vmatprep.subr.mxu0 0.0
        %2267 = vmatpush1.msra.mxu0 %v2241
        %2268 = vmatprep.subr.mxu0 0.0
        %2269 = vmatpush1.msra.mxu0 %v2242
        %2270 = vmatprep.subr.mxu0 0.0
        %2271 = vmatpush1.msra.mxu0 %v2243
        %2272 = vmatprep.subr.mxu0 0.0
        %2273 = vmatpush1.msra.mxu0 %v2244
        %2274 = vmatprep.subr.mxu0 0.0
        %2275 = vmatpush1.msra.mxu0 %v2245
        %2276 = vmatprep.subr.mxu0 0.0
        %2277 = vmatpush1.msra.mxu0 %v2246
        %2278 = vmatprep.subr.mxu0 0.0
        %2279 = vmatpush1.msra.mxu0 %v2247
        %2280 = vmatprep.subr.mxu0 0.0
        %2281 = vmatpush1.msra.mxu0 %v2248
        %2282 = vmatprep.subr.mxu0 0.0
        %2283 = vmatpush1.msra.mxu0 %v2249
        %2284 = vmatprep.subr.mxu0 0.0
        %2285 = vmatpush1.msra.mxu0 %v2250
        %2286 = vmatprep.subr.mxu0 0.0
        %2287 = vmatpush1.msra.mxu0 %v2251
        %2288 = vmatprep.subr.mxu0 0.0
        %2289 = vmatpush1.msra.mxu0 %v2252
        %2290 = vmatprep.subr.mxu0 0.0
        %2291 = vmatpush1.msra.mxu0 %v2253
        %2292 = vmatprep.subr.mxu0 0.0
        %2293 = vmatpush1.msra.mxu0 %v2254
        %2294 = vmatprep.subr.mxu0 0.0
        %2295 = vmatpush1.msra.mxu0 0.0
        %2296 = vmatprep.subr.mxu0 0.0
        %2297 = vmatpush1.msra.mxu0 0.0
        %2298 = vmatprep.subr.mxu0 0.0
        %2299 = vmatpush1.msra.mxu0 0.0
        %2300 = vmatprep.subr.mxu0 0.0
        %2301 = vmatpush1.msra.mxu0 0.0
        %2302 = vmatprep.subr.mxu0 0.0
        %2303 = vmatpush1.msra.mxu0 0.0
        %2304 = vmatprep.subr.mxu0 0.0
        %2305 = vmatpush1.msra.mxu0 0.0
        %2306 = vmatprep.subr.mxu0 0.0
        %2307 = vmatpush1.msra.mxu0 0.0
        %2308 = vmatprep.subr.mxu0 0.0
        %2309 = vmatpush1.msra.mxu0 0.0
        %2310 = vmatprep.subr.mxu0 0.0
        %2311 = vmatpush1.msra.mxu0 0.0
        %2312 = vmatprep.subr.mxu0 0.0
        %2313 = vmatpush1.msra.mxu0 0.0
        %2314 = vmatprep.subr.mxu0 0.0
        %2315 = vmatpush1.msra.mxu0 0.0
        %2316 = vmatprep.subr.mxu0 0.0
        %2317 = vmatpush1.msra.mxu0 0.0
        %2318 = vmatprep.subr.mxu0 0.0
        %2319 = vmatpush1.msra.mxu0 0.0
        %2320 = vmatprep.subr.mxu0 0.0
        %2321 = vmatpush1.msra.mxu0 0.0
        %2322 = vmatprep.subr.mxu0 0.0
        %2323 = vmatpush1.msra.mxu0 0.0
        %2324 = vmatprep.subr.mxu0 0.0
        %2325 = vmatpush1.msra.mxu0 0.0
        %2326 = vmatprep.mubr.f32.mxu0 0.0
        %2327 = vmatmul.mubr.f32.gmra.mrb[0].mxu0 %v2238
        %v2328 = vpop.f32.mrb[0].mxu0
        %v2329 = vadd.f32 %v2260, %v2328
        %v2330 = vpop.f32.mrb[0].mxu0
        %2331 = vdwg.mxu0
        %2332 = vst [vmem:[%s349] sm:$0xff] %v2329
        %s2333 = sand.u32 %s174, 1
        %s2334 = scalar_lea.sflag [#allocation8], %s2333
        %s2335 = sand.u32 %s174, 1
        %s2336 = smul.addr %s2335, 8
        %s2337 = scalar_lea.vmem [#allocation14], %s2336
        // Predicated region
        $region65: #{tpu_custom_call.1} parent=43 // pred_check
          %p2338 = pneg %p184
        $region66: #{tpu_custom_call.1} parent=43 // pred_check_branch
          %2340 = sbr.rel (%p2338) target = $region68
        $region67: #{tpu_custom_call.1} parent=43 // pred_region
          %s2342 = ssub.s32 128, 128
          %2343 = vsyncadd %s2334, %s2342
          %s2344 = smul.addr %s25, 128
          %s2345 = scalar_lea.hbm %s6, %s2344
          %s2347 = sshll.u32 %s2337, 4
          %s2348 = int_to_ptr.vmem [resolvable:$true] %s2347
          %2350 = dma.vmem_to_hbm [thread:$0]  %s2348, 128, %s2345, %s2334
        $region68: #{tpu_custom_call.1} parent=43 // pred_fallthru
          _
      $region44: #{tpu_custom_call.1} parent=5 // pred_fallthru
        _
      %p2351 = scmp.le.s32.totalorder 2, %s20
      // Predicated region
      $region69: #{tpu_custom_call.1} parent=5 // pred_check
        %p2352 = pneg %p2351
      $region70: #{tpu_custom_call.1} parent=5 // pred_check_branch
        %2354 = sbr.rel (%p2352) target = $region72
      $region71: #{tpu_custom_call.1} parent=5 // pred_region
        %s2355 = ssub.s32 %s20, 2
        // Predicated region
        $region73: #{tpu_custom_call.1} parent=71 // pred_check
          %p2356 = pneg %p190
        $region74: #{tpu_custom_call.1} parent=71 // pred_check_branch
          %2358 = sbr.rel (%p2356) target = $region76
        $region75: #{tpu_custom_call.1} parent=71 // pred_region
          %s2359 = sand.u32 %s175, 1
          %s2360 = scalar_lea.sflag [#allocation8], %s2359
          %s2361 = sand.u32 %s175, 1
          %s2362 = smul.addr %s2361, 8
          %s2363 = scalar_lea.vmem [#allocation14], %s2362
          %2364 = dma.done %s2360, 128
        $region76: #{tpu_custom_call.1} parent=71 // pred_fallthru
          _
      $region72: #{tpu_custom_call.1} parent=5 // pred_fallthru
        _
    $region6: #{tpu_custom_call.1} parent=1 // loop_footer
      %s24 = sadd.s32 1, %s20
    $region7: #{tpu_custom_call.1} parent=1 // loop_footer_branch
      %19 = sbr.rel target = $region3
    $region8: #{tpu_custom_call.1} parent=1 // loop_exit
      _
    %2365 = vsyncpa [#allocation7], 1
    %s2366 = scalar_lea.sflag [#allocation7], 1
    %2367 = vsyncpa %s2366, 1
    %2368 = vsyncpa [#allocation10], 1
    %s2369 = scalar_lea.sflag [#allocation10], 1
    %2370 = vsyncpa %s2369, 1
    %2371 = vsyncpa [#allocation13], 1
    %2372 = vsyncpa [#allocation8], 1
    %s2373 = scalar_lea.sflag [#allocation8], 1
    %2374 = vsyncpa %s2373, 1

</llo_original>
